<compile_context>
chip_gen: v6e
topology: v6e:2x2x1
jax: 0.10.0
libtpu: 0.0.40
codegen_flags: <defaults>
</compile_context>

<pallas_src>
import jax
import jax.numpy as jnp
from jax import lax
from jax.experimental import pallas as pl
from jax.experimental.pallas import tpu as pltpu


# ----------------------------- fused bottleneck kernel ----------------------
def _make_kernel(h, w, planes, cout, use_slab_concat):
    inv_hw = 1.0 / float(h * w)

    def kernel(x_ref, w1_ref, w2_ref, w3_ref, b1_ref, b2_ref, b3_ref,
               weca_ref, o_ref, pad_ref, *slab_scratch):
        x = x_ref[0]                                     # (H, W, Cin)
        x_res = x.astype(jnp.float32)                    # residual (f32)

        # ---- conv1 (1x1, BN1 scale folded into w1) + bias + relu ------------
        a1 = lax.dot_general(
            x.astype(jnp.bfloat16), w1_ref[...],
            dimension_numbers=(((2,), (0,)), ((), ())),
            preferred_element_type=jnp.float32)          # (H, W, P)
        out1 = jnp.maximum(a1 + b1_ref[...], 0.0)

        # ---- bf16 halo scratch for the 3x3 conv ------------------------------
        # Zero only the 1-pixel border each step (cheap perimeter stores; this
        # stays correct when the "parallel" grid axis is split across cores),
        # then store the interior once, already cast to bf16.
        pad_ref[0:1, :, :] = jnp.zeros((1, w + 2, planes), jnp.bfloat16)
        pad_ref[h + 1:h + 2, :, :] = jnp.zeros((1, w + 2, planes), jnp.bfloat16)
        pad_ref[1:h + 1, 0:1, :] = jnp.zeros((h, 1, planes), jnp.bfloat16)
        pad_ref[1:h + 1, w + 1:w + 2, :] = jnp.zeros((h, 1, planes), jnp.bfloat16)
        pad_ref[1:h + 1, 1:w + 1, :] = out1.astype(jnp.bfloat16)

        # ---- conv2 (3x3, pad 1, BN2 scale folded) + bias + relu --------------
        if use_slab_concat:
            # planes is a multiple of 128: lane-aligned im2col slab in an
            # explicit bf16 VMEM scratch, single K = 9*planes MXU matmul.
            slab_ref = slab_scratch[0]
            for t in range(9):
                kh, kw = divmod(t, 3)
                slab_ref[:, :, t * planes:(t + 1) * planes] = \
                    pad_ref[kh:kh + h, kw:kw + w, :]
            a2 = lax.dot_general(
                slab_ref[...], w2_ref[...],
                dimension_numbers=(((2,), (0,)), ((), ())),
                preferred_element_type=jnp.float32)      # (H, W, P)
        else:
            # Lane-misaligned planes: 9 accumulated dot_generals (no lane
            # concatenate, no retile copies).
            a2 = None
            for t in range(9):
                kh, kw = divmod(t, 3)
                contrib = lax.dot_general(
                    pad_ref[kh:kh + h, kw:kw + w, :],
                    w2_ref[t * planes:(t + 1) * planes, :],
                    dimension_numbers=(((2,), (0,)), ((), ())),
                    preferred_element_type=jnp.float32)
                a2 = contrib if a2 is None else a2 + contrib
        out2 = jnp.maximum(a2 + b2_ref[...], 0.0)

        # ---- conv3 (1x1, BN3 scale folded) + bias (no relu) ------------------
        a3 = lax.dot_general(
            out2.astype(jnp.bfloat16), w3_ref[...],
            dimension_numbers=(((2,), (0,)), ((), ())),
            preferred_element_type=jnp.float32)          # (H, W, Cout)
        out3 = a3 + b3_ref[...]

        # ---- ECA: global avg pool + 3-tap zero-padded channel conv + sigmoid -
        y = jnp.sum(out3, axis=(0, 1), keepdims=True).reshape(1, cout) * inv_hw
        zc = jnp.zeros((1, 1), jnp.float32)
        y_left = jnp.concatenate([zc, y[:, :cout - 1]], axis=1)
        y_right = jnp.concatenate([y[:, 1:], zc], axis=1)
        z = weca_ref[0] * y_left + weca_ref[1] * y + weca_ref[2] * y_right
        gate = 1.0 / (1.0 + jnp.exp(-z))                 # exp on the EUP slot

        # ---- gate * out3 + residual, relu ------------------------------------
        out = jnp.maximum(out3 * gate + x_res, 0.0)
        o_ref[...] = out.reshape(o_ref.shape).astype(o_ref.dtype)

    return kernel


# ----------------------------- NHWC-native wrapper (primary API) ------------
def eca_bottleneck_forward_nhwc(x, params, out_dtype=None):
    """x: (N, H, W, Cin) NHWC.  Returns (N, H, W, 4*planes) NHWC."""
    n, h, w, cin = x.shape
    planes = params["w1"].shape[1]
    cout = 4 * planes
    assert cin == cout, "identity residual path requires inplanes == 4*planes"
    out_dtype = x.dtype if out_dtype is None else out_dtype

    # Fold BN scales into conv weights in f32, then cast to bf16 for the MXU.
    w1 = (params["w1"] * params["bn1_scale"][None, :]).astype(jnp.bfloat16)   # (Cin, P)
    w2 = (params["w2"] * params["bn2_scale"][None, None, None, :]
          ).reshape(9 * planes, planes).astype(jnp.bfloat16)                  # (9P, P)
    w3 = (params["w3"] * params["bn3_scale"][None, :]).astype(jnp.bfloat16)   # (P, Cout)

    use_slab_concat = (planes % 128 == 0)
    scratch = [pltpu.VMEM((h + 2, w + 2, planes), jnp.bfloat16)]
    if use_slab_concat:
        scratch.append(pltpu.VMEM((h, w, 9 * planes), jnp.bfloat16))

    kernel = _make_kernel(h, w, planes, cout, use_slab_concat)

    flops = 2 * n * h * w * (cin * planes + 9 * planes * planes + planes * cout)
    bytes_accessed = (x.size * jnp.dtype(x.dtype).itemsize
                      + n * h * w * cout * jnp.dtype(out_dtype).itemsize
                      + 2 * (w1.size + w2.size + w3.size)
                      + 4 * (planes + planes + cout + 3))
    cost = pl.CostEstimate(flops=int(flops), transcendentals=int(n * cout),
                           bytes_accessed=int(bytes_accessed))

    wfull = lambda i: (0, 0)
    out = pl.pallas_call(
        kernel,
        out_shape=jax.ShapeDtypeStruct((n, h, w, cout), out_dtype),
        grid=(n,),
        in_specs=[
            pl.BlockSpec((1, h, w, cin), lambda i: (i, 0, 0, 0)),   # x (also residual)
            pl.BlockSpec((cin, planes), wfull),                     # w1 (scale-folded)
            pl.BlockSpec((9 * planes, planes), wfull),              # w2 (im2col layout)
            pl.BlockSpec((planes, cout), wfull),                    # w3
            pl.BlockSpec((1, planes), wfull),                       # bn1 bias
            pl.BlockSpec((1, planes), wfull),                       # bn2 bias
            pl.BlockSpec((1, cout), wfull),                         # bn3 bias
            pl.BlockSpec(memory_space=pltpu.MemorySpace.SMEM),      # eca 3-tap weights
        ],
        out_specs=pl.BlockSpec((1, h, w, cout), lambda i: (i, 0, 0, 0)),
        scratch_shapes=scratch,
        compiler_params=pltpu.CompilerParams(
            dimension_semantics=("parallel",),
            vmem_limit_bytes=40 * 1024 * 1024),
        cost_estimate=cost,
    )(x, w1, w2, w3,
      params["bn1_bias"].reshape(1, planes),
      params["bn2_bias"].reshape(1, planes),
      params["bn3_bias"].reshape(1, cout),
      params["w_eca"])
    return out


# ----------------------------- NCHW boundary wrapper (PyTorch layout) -------
def eca_bottleneck_forward_nchw(x_nchw, params, out_dtype=None):
    # Only for the first/last block at the framework boundary; chained blocks
    # should call the NHWC entry point directly (no per-block relayout).
    x = jnp.transpose(x_nchw, (0, 2, 3, 1))
    out = eca_bottleneck_forward_nhwc(x, params, out_dtype=out_dtype)
    return jnp.transpose(out, (0, 3, 1, 2))


# ----------------------------- deterministic parameters ---------------------
def make_params(key, inplanes, planes, eps=1e-5):
    ks = jax.random.split(key, 16)

    def bn(kg, kb, km, kv, ch):
        gamma = jax.random.uniform(kg, (ch,), jnp.float32, 0.5, 1.5)
        beta = 0.1 * jax.random.normal(kb, (ch,), jnp.float32)
        mean = 0.1 * jax.random.normal(km, (ch,), jnp.float32)
        var = jax.random.uniform(kv, (ch,), jnp.float32, 0.5, 1.5)
        scale = gamma / jnp.sqrt(var + eps)
        bias = beta - mean * scale
        return scale, bias

    cout = 4 * planes
    p = {}
    p["w1"] = 0.2 * jax.random.normal(ks[0], (inplanes, planes), jnp.float32)      # 1x1: (Cin, Cout)
    p["w2"] = 0.2 * jax.random.normal(ks[1], (3, 3, planes, planes), jnp.float32)  # HWIO
    p["w3"] = 0.2 * jax.random.normal(ks[2], (planes, cout), jnp.float32)
    p["bn1_scale"], p["bn1_bias"] = bn(ks[3], ks[4], ks[5], ks[6], planes)
    p["bn2_scale"], p["bn2_bias"] = bn(ks[7], ks[8], ks[9], ks[10], planes)
    p["bn3_scale"], p["bn3_bias"] = bn(ks[11], ks[12], ks[13], ks[14], cout)
    p["w_eca"] = 0.5 * jax.random.normal(ks[15], (3,), jnp.float32)                # Conv1d(1,1,3) weight
    return p


# ----------------------------- pure-JAX NHWC reference (sanity check) -------
def ref_forward_nhwc(x, p):
    # Mirrors the kernel's numerics: BN scale folded in f32, bf16 conv
    # operands, f32 accumulation, f32 bias/ReLU/sigmoid/residual.
    bf = jnp.bfloat16
    dn = ("NHWC", "HWIO", "NHWC")
    w1 = (p["w1"] * p["bn1_scale"][None, :])[None, None].astype(bf)          # (1,1,Cin,P)
    w2 = (p["w2"] * p["bn2_scale"][None, None, None, :]).astype(bf)          # (3,3,P,P)
    w3 = (p["w3"] * p["bn3_scale"][None, :])[None, None].astype(bf)          # (1,1,P,Cout)

    out = lax.conv_general_dilated(x.astype(bf), w1, (1, 1), "VALID",
                                   dimension_numbers=dn,
                                   preferred_element_type=jnp.float32)
    out = jnp.maximum(out + p["bn1_bias"], 0.0)
    out = lax.conv_general_dilated(out.astype(bf), w2, (1, 1), ((1, 1), (1, 1)),
                                   dimension_numbers=dn,
                                   preferred_element_type=jnp.float32)
    out = jnp.maximum(out + p["bn2_bias"], 0.0)
    out = lax.conv_general_dilated(out.astype(bf), w3, (1, 1), "VALID",
                                   dimension_numbers=dn,
                                   preferred_element_type=jnp.float32)
    out = out + p["bn3_bias"]

    y = jnp.mean(out, axis=(1, 2))                                           # (N, C)
    yp = jnp.pad(y, ((0, 0), (1, 1)))
    z = p["w_eca"][0] * yp[:, :-2] + p["w_eca"][1] * yp[:, 1:-1] + p["w_eca"][2] * yp[:, 2:]
    s = jax.nn.sigmoid(z)
    out = out * s[:, None, None, :] + x.astype(jnp.float32)
    return jnp.maximum(out, 0.0)


if __name__ == "__main__":
    # inplanes == planes * expansion(4), stride=1, downsample=None -> identity residual
    inplanes, planes = 16, 4
    N, H, W = 2, 16, 16

    key = jax.random.PRNGKey(0)
    kx, kp = jax.random.split(key)
    x_nhwc = jax.random.normal(kx, (N, H, W, inplanes), jnp.float32)
    params = make_params(kp, inplanes, planes)

    # NHWC-native path (the one chained blocks should use).
    fwd = jax.jit(eca_bottleneck_forward_nhwc)
    out = jax.block_until_ready(fwd(x_nhwc, params))
    assert out.shape == (N, H, W, planes * 4), out.shape

    ref = ref_forward_nhwc(x_nhwc, params)
    err = float(jnp.max(jnp.abs(out - ref)))
    assert jnp.allclose(out, ref, rtol=2e-3, atol=2e-3), err

    # NCHW boundary wrapper (PyTorch layout) must agree with the NHWC path.
    x_nchw = jnp.transpose(x_nhwc, (0, 3, 1, 2))
    out_nchw = jax.block_until_ready(
        jax.jit(eca_bottleneck_forward_nchw)(x_nchw, params))
    assert out_nchw.shape == (N, planes * 4, H, W), out_nchw.shape
    assert jnp.allclose(out_nchw, jnp.transpose(out, (0, 3, 1, 2)),
                        rtol=1e-5, atol=1e-5)

    print("KERNEL_OK")
</pallas_src>

<mosaic_0001>
module attributes {stable_mosaic.version = 11 : i64} {
  func.func @kernel(%arg0: i32, %arg1: memref<1x16x16x16xf32, #tpu.memory_space<vmem>>, %arg2: memref<16x4xbf16, #tpu.memory_space<vmem>>, %arg3: memref<36x4xbf16, #tpu.memory_space<vmem>>, %arg4: memref<4x16xbf16, #tpu.memory_space<vmem>>, %arg5: memref<1x4xf32, #tpu.memory_space<vmem>>, %arg6: memref<1x4xf32, #tpu.memory_space<vmem>>, %arg7: memref<1x16xf32, #tpu.memory_space<vmem>>, %arg8: memref<3xf32, #tpu.memory_space<smem>>, %arg9: memref<1x16x16x16xf32, #tpu.memory_space<vmem>>, %arg10: memref<18x18x4xbf16, #tpu.memory_space<vmem>>) attributes {dimension_semantics = [#tpu.dimension_semantics<parallel>], iteration_bounds = array<i64: 2>, scalar_prefetch = 0 : i64, scratch_operands = 1 : i64, tpu.core_type = #tpu.core_type<tc>, window_params = [{transform_indices = @transform_0, window_bounds = array<i64: 1, 16, 16, 16>}, {pipeline_mode = #tpu.pipeline_mode<synchronous>, transform_indices = @transform_1, window_bounds = array<i64: 16, 4>}, {pipeline_mode = #tpu.pipeline_mode<synchronous>, transform_indices = @transform_2, window_bounds = array<i64: 36, 4>}, {pipeline_mode = #tpu.pipeline_mode<synchronous>, transform_indices = @transform_3, window_bounds = array<i64: 4, 16>}, {pipeline_mode = #tpu.pipeline_mode<synchronous>, transform_indices = @transform_4, window_bounds = array<i64: 1, 4>}, {pipeline_mode = #tpu.pipeline_mode<synchronous>, transform_indices = @transform_5, window_bounds = array<i64: 1, 4>}, {pipeline_mode = #tpu.pipeline_mode<synchronous>, transform_indices = @transform_6, window_bounds = array<i64: 1, 16>}, {transform_indices = @transform_7, window_bounds = array<i64: 3>}, {transform_indices = @transform_8, window_bounds = array<i64: 1, 16, 16, 16>}]} {
    %c0 = arith.constant 0 : index
    %c0_0 = arith.constant 0 : index
    %c0_1 = arith.constant 0 : index
    %c0_2 = arith.constant 0 : index
    %0 = vector.load %arg1[%c0, %c0_0, %c0_1, %c0_2] : memref<1x16x16x16xf32, #tpu.memory_space<vmem>>, vector<1x16x16x16xf32>
    %1 = vector.shape_cast %0 : vector<1x16x16x16xf32> to vector<16x16x16xf32>
    %2 = arith.truncf %1 : vector<16x16x16xf32> to vector<16x16x16xbf16>
    %c0_3 = arith.constant 0 : index
    %c0_4 = arith.constant 0 : index
    %3 = vector.load %arg2[%c0_3, %c0_4] : memref<16x4xbf16, #tpu.memory_space<vmem>>, vector<16x4xbf16>
    %cst = arith.constant dense<0.000000e+00> : vector<16x16x4xf32>
    %4 = tpu.matmul %2, %3, %cst {dimension_numbers = #tpu.dot_dimension_numbers<[2], [0], [0, 1], [1], [0, 0, 0, 1, 1, 1], [], []>} : vector<16x16x16xbf16>, vector<16x4xbf16>, vector<16x16x4xf32> -> vector<16x16x4xf32>
    %c0_5 = arith.constant 0 : index
    %c0_6 = arith.constant 0 : index
    %5 = vector.load %arg5[%c0_5, %c0_6] : memref<1x4xf32, #tpu.memory_space<vmem>>, vector<1x4xf32>
    %6 = vector.shape_cast %5 : vector<1x4xf32> to vector<1x1x4xf32>
    %7 = vector.broadcast %6 : vector<1x1x4xf32> to vector<16x16x4xf32>
    %8 = arith.addf %4, %7 : vector<16x16x4xf32>
    %cst_7 = arith.constant 0.000000e+00 : f32
    %9 = vector.broadcast %cst_7 : f32 to vector<16x16x4xf32>
    %10 = arith.maximumf %8, %9 : vector<16x16x4xf32>
    %cst_8 = arith.constant 0.000000e+00 : bf16
    %11 = vector.broadcast %cst_8 : bf16 to vector<1x18x4xbf16>
    %c0_9 = arith.constant 0 : index
    %c0_10 = arith.constant 0 : index
    %c0_11 = arith.constant 0 : index
    %12 = vector.load %arg10[%c0_9, %c0_10, %c0_11] : memref<18x18x4xbf16, #tpu.memory_space<vmem>>, vector<1x18x4xbf16>
    tpu.vector_store %arg10[%c0_9, %c0_10, %c0_11], %11 {strides = array<i32>} : memref<18x18x4xbf16, #tpu.memory_space<vmem>>, vector<1x18x4xbf16>,
    %cst_12 = arith.constant 0.000000e+00 : bf16
    %13 = vector.broadcast %cst_12 : bf16 to vector<1x18x4xbf16>
    %c17 = arith.constant 17 : index
    %c0_13 = arith.constant 0 : index
    %c0_14 = arith.constant 0 : index
    %14 = vector.load %arg10[%c17, %c0_13, %c0_14] : memref<18x18x4xbf16, #tpu.memory_space<vmem>>, vector<1x18x4xbf16>
    tpu.vector_store %arg10[%c17, %c0_13, %c0_14], %13 {strides = array<i32>} : memref<18x18x4xbf16, #tpu.memory_space<vmem>>, vector<1x18x4xbf16>,
    %cst_15 = arith.constant 0.000000e+00 : bf16
    %15 = vector.broadcast %cst_15 : bf16 to vector<16x1x4xbf16>
    %c1 = arith.constant 1 : index
    %c0_16 = arith.constant 0 : index
    %c0_17 = arith.constant 0 : index
    %16 = vector.load %arg10[%c1, %c0_16, %c0_17] : memref<18x18x4xbf16, #tpu.memory_space<vmem>>, vector<16x1x4xbf16>
    tpu.vector_store %arg10[%c1, %c0_16, %c0_17], %15 {strides = array<i32>} : memref<18x18x4xbf16, #tpu.memory_space<vmem>>, vector<16x1x4xbf16>,
    %cst_18 = arith.constant 0.000000e+00 : bf16
    %17 = vector.broadcast %cst_18 : bf16 to vector<16x1x4xbf16>
    %c1_19 = arith.constant 1 : index
    %c17_20 = arith.constant 17 : index
    %c0_21 = arith.constant 0 : index
    %18 = vector.load %arg10[%c1_19, %c17_20, %c0_21] : memref<18x18x4xbf16, #tpu.memory_space<vmem>>, vector<16x1x4xbf16>
    tpu.vector_store %arg10[%c1_19, %c17_20, %c0_21], %17 {strides = array<i32>} : memref<18x18x4xbf16, #tpu.memory_space<vmem>>, vector<16x1x4xbf16>,
    %19 = arith.truncf %10 : vector<16x16x4xf32> to vector<16x16x4xbf16>
    %c1_22 = arith.constant 1 : index
    %c1_23 = arith.constant 1 : index
    %c0_24 = arith.constant 0 : index
    %20 = vector.load %arg10[%c1_22, %c1_23, %c0_24] : memref<18x18x4xbf16, #tpu.memory_space<vmem>>, vector<16x16x4xbf16>
    tpu.vector_store %arg10[%c1_22, %c1_23, %c0_24], %19 {strides = array<i32>} : memref<18x18x4xbf16, #tpu.memory_space<vmem>>, vector<16x16x4xbf16>,
    %c0_25 = arith.constant 0 : index
    %c0_26 = arith.constant 0 : index
    %c0_27 = arith.constant 0 : index
    %21 = vector.load %arg10[%c0_25, %c0_26, %c0_27] : memref<18x18x4xbf16, #tpu.memory_space<vmem>>, vector<16x16x4xbf16>
    %c0_28 = arith.constant 0 : index
    %c0_29 = arith.constant 0 : index
    %22 = vector.load %arg3[%c0_28, %c0_29] : memref<36x4xbf16, #tpu.memory_space<vmem>>, vector<4x4xbf16>
    %cst_30 = arith.constant dense<0.000000e+00> : vector<16x16x4xf32>
    %23 = tpu.matmul %21, %22, %cst_30 {dimension_numbers = #tpu.dot_dimension_numbers<[2], [0], [0, 1], [1], [0, 0, 0, 1, 1, 1], [], []>} : vector<16x16x4xbf16>, vector<4x4xbf16>, vector<16x16x4xf32> -> vector<16x16x4xf32>
    %c0_31 = arith.constant 0 : index
    %c1_32 = arith.constant 1 : index
    %c0_33 = arith.constant 0 : index
    %24 = vector.load %arg10[%c0_31, %c1_32, %c0_33] : memref<18x18x4xbf16, #tpu.memory_space<vmem>>, vector<16x16x4xbf16>
    %c4 = arith.constant 4 : index
    %c0_34 = arith.constant 0 : index
    %25 = vector.load %arg3[%c4, %c0_34] : memref<36x4xbf16, #tpu.memory_space<vmem>>, vector<4x4xbf16>
    %cst_35 = arith.constant dense<0.000000e+00> : vector<16x16x4xf32>
    %26 = tpu.matmul %24, %25, %cst_35 {dimension_numbers = #tpu.dot_dimension_numbers<[2], [0], [0, 1], [1], [0, 0, 0, 1, 1, 1], [], []>} : vector<16x16x4xbf16>, vector<4x4xbf16>, vector<16x16x4xf32> -> vector<16x16x4xf32>
    %27 = arith.addf %23, %26 : vector<16x16x4xf32>
    %c0_36 = arith.constant 0 : index
    %c2 = arith.constant 2 : index
    %c0_37 = arith.constant 0 : index
    %28 = vector.load %arg10[%c0_36, %c2, %c0_37] : memref<18x18x4xbf16, #tpu.memory_space<vmem>>, vector<16x16x4xbf16>
    %c8 = arith.constant 8 : index
    %c0_38 = arith.constant 0 : index
    %29 = vector.load %arg3[%c8, %c0_38] : memref<36x4xbf16, #tpu.memory_space<vmem>>, vector<4x4xbf16>
    %cst_39 = arith.constant dense<0.000000e+00> : vector<16x16x4xf32>
    %30 = tpu.matmul %28, %29, %cst_39 {dimension_numbers = #tpu.dot_dimension_numbers<[2], [0], [0, 1], [1], [0, 0, 0, 1, 1, 1], [], []>} : vector<16x16x4xbf16>, vector<4x4xbf16>, vector<16x16x4xf32> -> vector<16x16x4xf32>
    %31 = arith.addf %27, %30 : vector<16x16x4xf32>
    %c1_40 = arith.constant 1 : index
    %c0_41 = arith.constant 0 : index
    %c0_42 = arith.constant 0 : index
    %32 = vector.load %arg10[%c1_40, %c0_41, %c0_42] : memref<18x18x4xbf16, #tpu.memory_space<vmem>>, vector<16x16x4xbf16>
    %c12 = arith.constant 12 : index
    %c0_43 = arith.constant 0 : index
    %33 = vector.load %arg3[%c12, %c0_43] : memref<36x4xbf16, #tpu.memory_space<vmem>>, vector<4x4xbf16>
    %cst_44 = arith.constant dense<0.000000e+00> : vector<16x16x4xf32>
    %34 = tpu.matmul %32, %33, %cst_44 {dimension_numbers = #tpu.dot_dimension_numbers<[2], [0], [0, 1], [1], [0, 0, 0, 1, 1, 1], [], []>} : vector<16x16x4xbf16>, vector<4x4xbf16>, vector<16x16x4xf32> -> vector<16x16x4xf32>
    %35 = arith.addf %31, %34 : vector<16x16x4xf32>
    %c1_45 = arith.constant 1 : index
    %c1_46 = arith.constant 1 : index
    %c0_47 = arith.constant 0 : index
    %36 = vector.load %arg10[%c1_45, %c1_46, %c0_47] : memref<18x18x4xbf16, #tpu.memory_space<vmem>>, vector<16x16x4xbf16>
    %c16 = arith.constant 16 : index
    %c0_48 = arith.constant 0 : index
    %37 = vector.load %arg3[%c16, %c0_48] : memref<36x4xbf16, #tpu.memory_space<vmem>>, vector<4x4xbf16>
    %cst_49 = arith.constant dense<0.000000e+00> : vector<16x16x4xf32>
    %38 = tpu.matmul %36, %37, %cst_49 {dimension_numbers = #tpu.dot_dimension_numbers<[2], [0], [0, 1], [1], [0, 0, 0, 1, 1, 1], [], []>} : vector<16x16x4xbf16>, vector<4x4xbf16>, vector<16x16x4xf32> -> vector<16x16x4xf32>
    %39 = arith.addf %35, %38 : vector<16x16x4xf32>
    %c1_50 = arith.constant 1 : index
    %c2_51 = arith.constant 2 : index
    %c0_52 = arith.constant 0 : index
    %40 = vector.load %arg10[%c1_50, %c2_51, %c0_52] : memref<18x18x4xbf16, #tpu.memory_space<vmem>>, vector<16x16x4xbf16>
    %c20 = arith.constant 20 : index
    %c0_53 = arith.constant 0 : index
    %41 = vector.load %arg3[%c20, %c0_53] : memref<36x4xbf16, #tpu.memory_space<vmem>>, vector<4x4xbf16>
    %cst_54 = arith.constant dense<0.000000e+00> : vector<16x16x4xf32>
    %42 = tpu.matmul %40, %41, %cst_54 {dimension_numbers = #tpu.dot_dimension_numbers<[2], [0], [0, 1], [1], [0, 0, 0, 1, 1, 1], [], []>} : vector<16x16x4xbf16>, vector<4x4xbf16>, vector<16x16x4xf32> -> vector<16x16x4xf32>
    %43 = arith.addf %39, %42 : vector<16x16x4xf32>
    %c2_55 = arith.constant 2 : index
    %c0_56 = arith.constant 0 : index
    %c0_57 = arith.constant 0 : index
    %44 = vector.load %arg10[%c2_55, %c0_56, %c0_57] : memref<18x18x4xbf16, #tpu.memory_space<vmem>>, vector<16x16x4xbf16>
    %c24 = arith.constant 24 : index
    %c0_58 = arith.constant 0 : index
    %45 = vector.load %arg3[%c24, %c0_58] : memref<36x4xbf16, #tpu.memory_space<vmem>>, vector<4x4xbf16>
    %cst_59 = arith.constant dense<0.000000e+00> : vector<16x16x4xf32>
    %46 = tpu.matmul %44, %45, %cst_59 {dimension_numbers = #tpu.dot_dimension_numbers<[2], [0], [0, 1], [1], [0, 0, 0, 1, 1, 1], [], []>} : vector<16x16x4xbf16>, vector<4x4xbf16>, vector<16x16x4xf32> -> vector<16x16x4xf32>
    %47 = arith.addf %43, %46 : vector<16x16x4xf32>
    %c2_60 = arith.constant 2 : index
    %c1_61 = arith.constant 1 : index
    %c0_62 = arith.constant 0 : index
    %48 = vector.load %arg10[%c2_60, %c1_61, %c0_62] : memref<18x18x4xbf16, #tpu.memory_space<vmem>>, vector<16x16x4xbf16>
    %c28 = arith.constant 28 : index
    %c0_63 = arith.constant 0 : index
    %49 = vector.load %arg3[%c28, %c0_63] : memref<36x4xbf16, #tpu.memory_space<vmem>>, vector<4x4xbf16>
    %cst_64 = arith.constant dense<0.000000e+00> : vector<16x16x4xf32>
    %50 = tpu.matmul %48, %49, %cst_64 {dimension_numbers = #tpu.dot_dimension_numbers<[2], [0], [0, 1], [1], [0, 0, 0, 1, 1, 1], [], []>} : vector<16x16x4xbf16>, vector<4x4xbf16>, vector<16x16x4xf32> -> vector<16x16x4xf32>
    %51 = arith.addf %47, %50 : vector<16x16x4xf32>
    %c2_65 = arith.constant 2 : index
    %c2_66 = arith.constant 2 : index
    %c0_67 = arith.constant 0 : index
    %52 = vector.load %arg10[%c2_65, %c2_66, %c0_67] : memref<18x18x4xbf16, #tpu.memory_space<vmem>>, vector<16x16x4xbf16>
    %c32 = arith.constant 32 : index
    %c0_68 = arith.constant 0 : index
    %53 = vector.load %arg3[%c32, %c0_68] : memref<36x4xbf16, #tpu.memory_space<vmem>>, vector<4x4xbf16>
    %cst_69 = arith.constant dense<0.000000e+00> : vector<16x16x4xf32>
    %54 = tpu.matmul %52, %53, %cst_69 {dimension_numbers = #tpu.dot_dimension_numbers<[2], [0], [0, 1], [1], [0, 0, 0, 1, 1, 1], [], []>} : vector<16x16x4xbf16>, vector<4x4xbf16>, vector<16x16x4xf32> -> vector<16x16x4xf32>
    %55 = arith.addf %51, %54 : vector<16x16x4xf32>
    %c0_70 = arith.constant 0 : index
    %c0_71 = arith.constant 0 : index
    %56 = vector.load %arg6[%c0_70, %c0_71] : memref<1x4xf32, #tpu.memory_space<vmem>>, vector<1x4xf32>
    %57 = vector.shape_cast %56 : vector<1x4xf32> to vector<1x1x4xf32>
    %58 = vector.broadcast %57 : vector<1x1x4xf32> to vector<16x16x4xf32>
    %59 = arith.addf %55, %58 : vector<16x16x4xf32>
    %cst_72 = arith.constant 0.000000e+00 : f32
    %60 = vector.broadcast %cst_72 : f32 to vector<16x16x4xf32>
    %61 = arith.maximumf %59, %60 : vector<16x16x4xf32>
    %62 = arith.truncf %61 : vector<16x16x4xf32> to vector<16x16x4xbf16>
    %c0_73 = arith.constant 0 : index
    %c0_74 = arith.constant 0 : index
    %63 = vector.load %arg4[%c0_73, %c0_74] : memref<4x16xbf16, #tpu.memory_space<vmem>>, vector<4x16xbf16>
    %cst_75 = arith.constant dense<0.000000e+00> : vector<16x16x16xf32>
    %64 = tpu.matmul %62, %63, %cst_75 {dimension_numbers = #tpu.dot_dimension_numbers<[2], [0], [0, 1], [1], [0, 0, 0, 1, 1, 1], [], []>} : vector<16x16x4xbf16>, vector<4x16xbf16>, vector<16x16x16xf32> -> vector<16x16x16xf32>
    %c0_76 = arith.constant 0 : index
    %c0_77 = arith.constant 0 : index
    %65 = vector.load %arg7[%c0_76, %c0_77] : memref<1x16xf32, #tpu.memory_space<vmem>>, vector<1x16xf32>
    %66 = vector.shape_cast %65 : vector<1x16xf32> to vector<1x1x16xf32>
    %67 = vector.broadcast %66 : vector<1x1x16xf32> to vector<16x16x16xf32>
    %68 = arith.addf %64, %67 : vector<16x16x16xf32>
    %cst_78 = arith.constant dense<0.000000e+00> : vector<16xf32>
    %69 = vector.multi_reduction <add>, %68, %cst_78 [0, 1] : vector<16x16x16xf32> to vector<16xf32>
    %70 = vector.shape_cast %69 : vector<16xf32> to vector<1x1x16xf32>
    %71 = vector.shape_cast %70 : vector<1x1x16xf32> to vector<1x16xf32>
    %cst_79 = arith.constant 3.906250e-03 : f32
    %72 = vector.broadcast %cst_79 : f32 to vector<1x16xf32>
    %73 = arith.mulf %71, %72 : vector<1x16xf32>
    %cst_80 = arith.constant 0.000000e+00 : f32
    %74 = vector.broadcast %cst_80 : f32 to vector<1x1xf32>
    %75 = vector.extract_strided_slice %73 {offsets = [0, 0], sizes = [1, 15], strides = [1, 1]} : vector<1x16xf32> to vector<1x15xf32>
    %76 = tpu.concatenate %74, %75 in 1 : vector<1x1xf32>, vector<1x15xf32> -> vector<1x16xf32>
    %77 = vector.extract_strided_slice %73 {offsets = [0, 1], sizes = [1, 15], strides = [1, 1]} : vector<1x16xf32> to vector<1x15xf32>
    %78 = tpu.concatenate %77, %74 in 1 : vector<1x15xf32>, vector<1x1xf32> -> vector<1x16xf32>
    %c0_81 = arith.constant 0 : index
    %79 = memref.load %arg8[%c0_81] : memref<3xf32, #tpu.memory_space<smem>>
    %80 = vector.broadcast %79 : f32 to vector<1x16xf32>
    %81 = arith.mulf %80, %76 : vector<1x16xf32>
    %c1_82 = arith.constant 1 : index
    %82 = memref.load %arg8[%c1_82] : memref<3xf32, #tpu.memory_space<smem>>
    %83 = vector.broadcast %82 : f32 to vector<1x16xf32>
    %84 = arith.mulf %83, %73 : vector<1x16xf32>
    %85 = arith.addf %81, %84 : vector<1x16xf32>
    %c2_83 = arith.constant 2 : index
    %86 = memref.load %arg8[%c2_83] : memref<3xf32, #tpu.memory_space<smem>>
    %87 = vector.broadcast %86 : f32 to vector<1x16xf32>
    %88 = arith.mulf %87, %78 : vector<1x16xf32>
    %89 = arith.addf %85, %88 : vector<1x16xf32>
    %cst_84 = arith.constant 0.000000e+00 : f32
    %90 = vector.broadcast %cst_84 : f32 to vector<1x16xf32>
    %91 = arith.subf %90, %89 : vector<1x16xf32>
    %92 = math.exp %91 : vector<1x16xf32>
    %cst_85 = arith.constant 1.000000e+00 : f32
    %93 = vector.broadcast %cst_85 : f32 to vector<1x16xf32>
    %94 = arith.addf %93, %92 : vector<1x16xf32>
    %cst_86 = arith.constant 1.000000e+00 : f32
    %95 = vector.broadcast %cst_86 : f32 to vector<1x16xf32>
    %96 = arith.divf %95, %94 : vector<1x16xf32>
    %97 = vector.shape_cast %96 : vector<1x16xf32> to vector<1x1x16xf32>
    %98 = vector.broadcast %97 : vector<1x1x16xf32> to vector<16x16x16xf32>
    %99 = arith.mulf %68, %98 : vector<16x16x16xf32>
    %100 = arith.addf %99, %1 : vector<16x16x16xf32>
    %cst_87 = arith.constant 0.000000e+00 : f32
    %101 = vector.broadcast %cst_87 : f32 to vector<16x16x16xf32>
    %102 = arith.maximumf %100, %101 : vector<16x16x16xf32>
    %103 = vector.shape_cast %102 : vector<16x16x16xf32> to vector<1x16x16x16xf32>
    %c0_88 = arith.constant 0 : index
    %c0_89 = arith.constant 0 : index
    %c0_90 = arith.constant 0 : index
    %c0_91 = arith.constant 0 : index
    %104 = vector.load %arg9[%c0_88, %c0_89, %c0_90, %c0_91] : memref<1x16x16x16xf32, #tpu.memory_space<vmem>>, vector<1x16x16x16xf32>
    tpu.vector_store %arg9[%c0_88, %c0_89, %c0_90, %c0_91], %103 {strides = array<i32>} : memref<1x16x16x16xf32, #tpu.memory_space<vmem>>, vector<1x16x16x16xf32>,
    return
  }
  func.func @transform_0(%arg0: i32) -> (i32, i32, i32, i32) {
    %c0_i32 = arith.constant 0 : i32
    %c0_i32_0 = arith.constant 0 : i32
    %c0_i32_1 = arith.constant 0 : i32
    %c0_i32_2 = arith.constant 0 : i32
    return %arg0, %c0_i32, %c0_i32_0, %c0_i32_1 : i32, i32, i32, i32
  }
  func.func @transform_1(%arg0: i32) -> (i32, i32) {
    %c0_i32 = arith.constant 0 : i32
    %c0_i32_0 = arith.constant 0 : i32
    %c0_i32_1 = arith.constant 0 : i32
    return %c0_i32, %c0_i32_0 : i32, i32
  }
  func.func @transform_2(%arg0: i32) -> (i32, i32) {
    %c0_i32 = arith.constant 0 : i32
    %c0_i32_0 = arith.constant 0 : i32
    %c0_i32_1 = arith.constant 0 : i32
    return %c0_i32, %c0_i32_0 : i32, i32
  }
  func.func @transform_3(%arg0: i32) -> (i32, i32) {
    %c0_i32 = arith.constant 0 : i32
    %c0_i32_0 = arith.constant 0 : i32
    %c0_i32_1 = arith.constant 0 : i32
    return %c0_i32, %c0_i32_0 : i32, i32
  }
  func.func @transform_4(%arg0: i32) -> (i32, i32) {
    %c0_i32 = arith.constant 0 : i32
    %c0_i32_0 = arith.constant 0 : i32
    %c0_i32_1 = arith.constant 0 : i32
    return %c0_i32, %c0_i32_0 : i32, i32
  }
  func.func @transform_5(%arg0: i32) -> (i32, i32) {
    %c0_i32 = arith.constant 0 : i32
    %c0_i32_0 = arith.constant 0 : i32
    %c0_i32_1 = arith.constant 0 : i32
    return %c0_i32, %c0_i32_0 : i32, i32
  }
  func.func @transform_6(%arg0: i32) -> (i32, i32) {
    %c0_i32 = arith.constant 0 : i32
    %c0_i32_0 = arith.constant 0 : i32
    %c0_i32_1 = arith.constant 0 : i32
    return %c0_i32, %c0_i32_0 : i32, i32
  }
  func.func @transform_7(%arg0: i32) -> i32 {
    %c0_i32 = arith.constant 0 : i32
    %c0_i32_0 = arith.constant 0 : i32
    return %c0_i32 : i32
  }
  func.func @transform_8(%arg0: i32) -> (i32, i32, i32, i32) {
    %c0_i32 = arith.constant 0 : i32
    %c0_i32_0 = arith.constant 0 : i32
    %c0_i32_1 = arith.constant 0 : i32
    %c0_i32_2 = arith.constant 0 : i32
    return %arg0, %c0_i32, %c0_i32_0, %c0_i32_1 : i32, i32, i32, i32
  }
}

</mosaic_0001>

<llo_original>
// kernel: eca_bottleneck_forward_nhwc.1
$region0: #{eca_bottleneck_forward_nhwc.1}
  #allocation0 [shape = 'u32[]', space=smem, size = 0x4, offset = 0x4, fixed_abs, tag = 'smem constant byte address 0x4 - core index']
  #allocation1 [shape = 'u32[144,128]{1,0:T(1,128)}', space=vmem, size = 0x12000, scoped, tag = 'internal scratch']
  #allocation2 [shape = 'bf16[18,18,4]{2,1,0:T(8,128)(2,1)}', space=vmem, size = 0x1b000, scoped, tag = 'scratch operand']
  %s0 = inlined_call_operand.hbm [shape: f32[2,16,16,16], index: 0, kind: input, shape index: {}]
  %s1 = inlined_call_operand.vmem [shape: bf16[16,4], index: 1, kind: input, shape index: {}]
  %s2 = inlined_call_operand.vmem [shape: bf16[36,4], index: 2, kind: input, shape index: {}]
  %s3 = inlined_call_operand.vmem [shape: bf16[4,16], index: 3, kind: input, shape index: {}]
  %s4 = inlined_call_operand.vmem [shape: f32[1,4], index: 4, kind: input, shape index: {}]
  %s5 = inlined_call_operand.vmem [shape: f32[1,4], index: 5, kind: input, shape index: {}]
  %s6 = inlined_call_operand.vmem [shape: f32[1,16], index: 6, kind: input, shape index: {}]
  %s7 = inlined_call_operand.vmem [shape: f32[3], index: 7, kind: input, shape index: {}]
  %s8 = inlined_call_operand.hbm [shape: f32[2,16,16,16], index: 8, kind: output, shape index: {}]
  %s9 = sld [smem:[#allocation0]]
  $region73: #{eca_bottleneck_forward_nhwc.1} parent=0
    _
  %s11 = ssub.s32 1, %s9
  %s12 = scalar_select 0, %s11, %s9
  $region1: #{eca_bottleneck_forward_nhwc.1} parent=0
    #allocation3 [shape = 'u8[262144]{0}', space=vmem, size = 0x40000, scoped, tag = 'input window, operand 0']
    #allocation4 [shape = 's32[2]{0}', space=sflag, size = 0x8, scoped, tag = 'scoped memory for eca_bottleneck_forward_nhwc.1']
    #allocation5 [shape = 's32[2]{0}', space=sflag, size = 0x8, scoped, tag = 'scoped memory for eca_bottleneck_forward_nhwc.1']
    #allocation6 [shape = 's32[2]{0}', space=sflag, size = 0x8, scoped, tag = 'scoped memory for eca_bottleneck_forward_nhwc.1']
    #allocation7 [shape = 'u8[512]{0}', space=smem, size = 0x200, scoped, tag = 'input window, operand 7, single buffered']
    #allocation8 [shape = 'u8[262144]{0}', space=vmem, size = 0x40000, scoped, tag = 'output window, operand 0']
    %13 = vsyncpa [#allocation4], 0
    %s14 = scalar_lea.sflag [#allocation4], 1
    %15 = vsyncpa %s14, 0
    %16 = vsyncpa [#allocation6], 0
    %17 = vsyncpa [#allocation5], 0
    %s18 = scalar_lea.sflag [#allocation5], 1
    %19 = vsyncpa %s18, 0
    loop: start=0, step=1, limit=4
    $region2: #{eca_bottleneck_forward_nhwc.1} parent=1 // loop_pre_header
      _
    $region3: #{eca_bottleneck_forward_nhwc.1} parent=1 // loop_header
      %s21 = sphi 0, %s25
      %p22 = scmp.ge.s32.totalorder %s21, 4
      %s31 = sphi 0, %s33
      %s34 = sphi 0, %s31
      %s35 = sphi 0, %s34
      %s51 = sphi 0, %s35
      %s55 = sphi 0, %s55
      %s57 = sphi 0, %s55
      %s58 = sphi 0, %s57
      %s72 = sphi 0, %s58
      %s76 = sphi 0, %s76
      %s78 = sphi 0, %s76
      %s79 = sphi 0, %s78
      %s93 = sphi 0, %s79
      %s97 = sphi 0, %s97
      %s99 = sphi 0, %s97
      %s100 = sphi 0, %s99
      %s114 = sphi 0, %s100
      %s118 = sphi 0, %s118
      %s120 = sphi 0, %s118
      %s121 = sphi 0, %s120
      %s135 = sphi 0, %s121
      %s139 = sphi 0, %s139
      %s141 = sphi 0, %s139
      %s142 = sphi 0, %s141
      %s156 = sphi 0, %s142
      %s160 = sphi 0, %s160
      %s162 = sphi 0, %s160
      %s163 = sphi 0, %s162
      %s177 = sphi 0, %s163
      %s181 = sphi 0, %s181
      %s183 = sphi 0, %s181
      %s184 = sphi 0, %s183
      %s198 = sphi 0, %s184
      %s204 = sphi 0, %s206
      %s207 = sphi 0, %s204
      %s208 = sphi 0, %s207
      %s224 = sphi 0, %s208
    $region4: #{eca_bottleneck_forward_nhwc.1} parent=1 // loop_header_branch
      %24 = sbr.rel (%p22) target = $region8
    $region5: #{eca_bottleneck_forward_nhwc.1} parent=1 // loop_body
      %s26 = ssub.s32 %s21, 1
      %s27 = ssub.s32 %s21, 2
      %s28 = sadd.s32 %s21, 1
      %s29 = ssub.s32 %s21, %s28
      %p30 = scmp.eq.s32.totalorder %s29, 0
      %s32 = sadd.s32 %s31, 1
      %s33 = scalar_select %p30, %s31, %s32
      %p36 = pneg %p30
      %p37 = scmp.eq.s32.totalorder %s21, 1
      %p38 = por %p36, %p37
      %p39 = scmp.ne.s32.totalorder %s31, %s34
      %p40 = scmp.eq.s32.totalorder %s21, 0
      %p41 = por %p39, %p40
      %p42 = scmp.ne.s32.totalorder %s31, %s34
      %p43 = scmp.eq.s32.totalorder %s26, 1
      %p44 = por %p42, %p43
      %p45 = scmp.ne.s32.totalorder %s34, %s35
      %p46 = scmp.eq.s32.totalorder %s26, 0
      %p47 = por %p45, %p46
      %p48 = scmp.ne.s32.totalorder %s34, %s35
      %p49 = scmp.eq.s32.totalorder %s27, 1
      %p50 = por %p48, %p49
      %p52 = scmp.ne.s32.totalorder %s35, %s51
      %p53 = scmp.eq.s32.totalorder %s27, 0
      %p54 = por %p52, %p53
      %s56 = sadd.s32 %s55, 1
      %p59 = scmp.eq.s32.totalorder %s21, 1
      %p60 = scmp.ne.s32.totalorder %s55, %s57
      %p61 = scmp.eq.s32.totalorder %s21, 0
      %p62 = por %p60, %p61
      %p63 = scmp.ne.s32.totalorder %s55, %s57
      %p64 = scmp.eq.s32.totalorder %s26, 1
      %p65 = por %p63, %p64
      %p66 = scmp.ne.s32.totalorder %s57, %s58
      %p67 = scmp.eq.s32.totalorder %s26, 0
      %p68 = por %p66, %p67
      %p69 = scmp.ne.s32.totalorder %s57, %s58
      %p70 = scmp.eq.s32.totalorder %s27, 1
      %p71 = por %p69, %p70
      %p73 = scmp.ne.s32.totalorder %s58, %s72
      %p74 = scmp.eq.s32.totalorder %s27, 0
      %p75 = por %p73, %p74
      %s77 = sadd.s32 %s76, 1
      %p80 = scmp.eq.s32.totalorder %s21, 1
      %p81 = scmp.ne.s32.totalorder %s76, %s78
      %p82 = scmp.eq.s32.totalorder %s21, 0
      %p83 = por %p81, %p82
      %p84 = scmp.ne.s32.totalorder %s76, %s78
      %p85 = scmp.eq.s32.totalorder %s26, 1
      %p86 = por %p84, %p85
      %p87 = scmp.ne.s32.totalorder %s78, %s79
      %p88 = scmp.eq.s32.totalorder %s26, 0
      %p89 = por %p87, %p88
      %p90 = scmp.ne.s32.totalorder %s78, %s79
      %p91 = scmp.eq.s32.totalorder %s27, 1
      %p92 = por %p90, %p91
      %p94 = scmp.ne.s32.totalorder %s79, %s93
      %p95 = scmp.eq.s32.totalorder %s27, 0
      %p96 = por %p94, %p95
      %s98 = sadd.s32 %s97, 1
      %p101 = scmp.eq.s32.totalorder %s21, 1
      %p102 = scmp.ne.s32.totalorder %s97, %s99
      %p103 = scmp.eq.s32.totalorder %s21, 0
      %p104 = por %p102, %p103
      %p105 = scmp.ne.s32.totalorder %s97, %s99
      %p106 = scmp.eq.s32.totalorder %s26, 1
      %p107 = por %p105, %p106
      %p108 = scmp.ne.s32.totalorder %s99, %s100
      %p109 = scmp.eq.s32.totalorder %s26, 0
      %p110 = por %p108, %p109
      %p111 = scmp.ne.s32.totalorder %s99, %s100
      %p112 = scmp.eq.s32.totalorder %s27, 1
      %p113 = por %p111, %p112
      %p115 = scmp.ne.s32.totalorder %s100, %s114
      %p116 = scmp.eq.s32.totalorder %s27, 0
      %p117 = por %p115, %p116
      %s119 = sadd.s32 %s118, 1
      %p122 = scmp.eq.s32.totalorder %s21, 1
      %p123 = scmp.ne.s32.totalorder %s118, %s120
      %p124 = scmp.eq.s32.totalorder %s21, 0
      %p125 = por %p123, %p124
      %p126 = scmp.ne.s32.totalorder %s118, %s120
      %p127 = scmp.eq.s32.totalorder %s26, 1
      %p128 = por %p126, %p127
      %p129 = scmp.ne.s32.totalorder %s120, %s121
      %p130 = scmp.eq.s32.totalorder %s26, 0
      %p131 = por %p129, %p130
      %p132 = scmp.ne.s32.totalorder %s120, %s121
      %p133 = scmp.eq.s32.totalorder %s27, 1
      %p134 = por %p132, %p133
      %p136 = scmp.ne.s32.totalorder %s121, %s135
      %p137 = scmp.eq.s32.totalorder %s27, 0
      %p138 = por %p136, %p137
      %s140 = sadd.s32 %s139, 1
      %p143 = scmp.eq.s32.totalorder %s21, 1
      %p144 = scmp.ne.s32.totalorder %s139, %s141
      %p145 = scmp.eq.s32.totalorder %s21, 0
      %p146 = por %p144, %p145
      %p147 = scmp.ne.s32.totalorder %s139, %s141
      %p148 = scmp.eq.s32.totalorder %s26, 1
      %p149 = por %p147, %p148
      %p150 = scmp.ne.s32.totalorder %s141, %s142
      %p151 = scmp.eq.s32.totalorder %s26, 0
      %p152 = por %p150, %p151
      %p153 = scmp.ne.s32.totalorder %s141, %s142
      %p154 = scmp.eq.s32.totalorder %s27, 1
      %p155 = por %p153, %p154
      %p157 = scmp.ne.s32.totalorder %s142, %s156
      %p158 = scmp.eq.s32.totalorder %s27, 0
      %p159 = por %p157, %p158
      %s161 = sadd.s32 %s160, 1
      %p164 = scmp.eq.s32.totalorder %s21, 1
      %p165 = scmp.ne.s32.totalorder %s160, %s162
      %p166 = scmp.eq.s32.totalorder %s21, 0
      %p167 = por %p165, %p166
      %p168 = scmp.ne.s32.totalorder %s160, %s162
      %p169 = scmp.eq.s32.totalorder %s26, 1
      %p170 = por %p168, %p169
      %p171 = scmp.ne.s32.totalorder %s162, %s163
      %p172 = scmp.eq.s32.totalorder %s26, 0
      %p173 = por %p171, %p172
      %p174 = scmp.ne.s32.totalorder %s162, %s163
      %p175 = scmp.eq.s32.totalorder %s27, 1
      %p176 = por %p174, %p175
      %p178 = scmp.ne.s32.totalorder %s163, %s177
      %p179 = scmp.eq.s32.totalorder %s27, 0
      %p180 = por %p178, %p179
      %s182 = sadd.s32 %s181, 1
      %p185 = scmp.eq.s32.totalorder %s21, 1
      %p186 = scmp.ne.s32.totalorder %s181, %s183
      %p187 = scmp.eq.s32.totalorder %s21, 0
      %p188 = por %p186, %p187
      %p189 = scmp.ne.s32.totalorder %s181, %s183
      %p190 = scmp.eq.s32.totalorder %s26, 1
      %p191 = por %p189, %p190
      %p192 = scmp.ne.s32.totalorder %s183, %s184
      %p193 = scmp.eq.s32.totalorder %s26, 0
      %p194 = por %p192, %p193
      %p195 = scmp.ne.s32.totalorder %s183, %s184
      %p196 = scmp.eq.s32.totalorder %s27, 1
      %p197 = por %p195, %p196
      %p199 = scmp.ne.s32.totalorder %s184, %s198
      %p200 = scmp.eq.s32.totalorder %s27, 0
      %p201 = por %p199, %p200
      %s202 = ssub.s32 %s21, %s28
      %p203 = scmp.eq.s32.totalorder %s202, 0
      %s205 = sadd.s32 %s204, 1
      %s206 = scalar_select %p203, %s204, %s205
      %p209 = pneg %p203
      %p210 = scmp.eq.s32.totalorder %s21, 1
      %p211 = por %p209, %p210
      %p212 = scmp.ne.s32.totalorder %s204, %s207
      %p213 = scmp.eq.s32.totalorder %s21, 0
      %p214 = por %p212, %p213
      %p215 = scmp.ne.s32.totalorder %s204, %s207
      %p216 = scmp.eq.s32.totalorder %s26, 1
      %p217 = por %p215, %p216
      %p218 = scmp.ne.s32.totalorder %s207, %s208
      %p219 = scmp.eq.s32.totalorder %s26, 0
      %p220 = por %p218, %p219
      %p221 = scmp.ne.s32.totalorder %s207, %s208
      %p222 = scmp.eq.s32.totalorder %s27, 1
      %p223 = por %p221, %p222
      %p225 = scmp.ne.s32.totalorder %s208, %s224
      %p226 = scmp.eq.s32.totalorder %s27, 0
      %p227 = por %p225, %p226
      %p228 = scmp.le.s32.totalorder 1, %s21
      %p229 = scmp.lt.s32.totalorder %s21, 3
      %p230 = pnand %p228, %p229
      %p231 = pneg %p230
      // Predicated region
      $region9: #{eca_bottleneck_forward_nhwc.1} parent=5 // pred_check
        _
      $region10: #{eca_bottleneck_forward_nhwc.1} parent=5 // pred_check_branch
        %233 = sbr.rel (%p230) target = $region12
      $region11: #{eca_bottleneck_forward_nhwc.1} parent=5 // pred_region
        %s234 = ssub.s32 %s21, 1
        // Predicated region
        $region13: #{eca_bottleneck_forward_nhwc.1} parent=11 // pred_check
          %p235 = pneg %p68
        $region14: #{eca_bottleneck_forward_nhwc.1} parent=11 // pred_check_branch
          %237 = sbr.rel (%p235) target = $region16
        $region15: #{eca_bottleneck_forward_nhwc.1} parent=11 // pred_region
          _
        $region16: #{eca_bottleneck_forward_nhwc.1} parent=11 // pred_fallthru
          _
        // Predicated region
        $region17: #{eca_bottleneck_forward_nhwc.1} parent=11 // pred_check
          %p238 = pneg %p89
        $region18: #{eca_bottleneck_forward_nhwc.1} parent=11 // pred_check_branch
          %240 = sbr.rel (%p238) target = $region20
        $region19: #{eca_bottleneck_forward_nhwc.1} parent=11 // pred_region
          _
        $region20: #{eca_bottleneck_forward_nhwc.1} parent=11 // pred_fallthru
          _
        // Predicated region
        $region21: #{eca_bottleneck_forward_nhwc.1} parent=11 // pred_check
          %p241 = pneg %p110
        $region22: #{eca_bottleneck_forward_nhwc.1} parent=11 // pred_check_branch
          %243 = sbr.rel (%p241) target = $region24
        $region23: #{eca_bottleneck_forward_nhwc.1} parent=11 // pred_region
          _
        $region24: #{eca_bottleneck_forward_nhwc.1} parent=11 // pred_fallthru
          _
        // Predicated region
        $region25: #{eca_bottleneck_forward_nhwc.1} parent=11 // pred_check
          %p244 = pneg %p131
        $region26: #{eca_bottleneck_forward_nhwc.1} parent=11 // pred_check_branch
          %246 = sbr.rel (%p244) target = $region28
        $region27: #{eca_bottleneck_forward_nhwc.1} parent=11 // pred_region
          _
        $region28: #{eca_bottleneck_forward_nhwc.1} parent=11 // pred_fallthru
          _
        // Predicated region
        $region29: #{eca_bottleneck_forward_nhwc.1} parent=11 // pred_check
          %p247 = pneg %p152
        $region30: #{eca_bottleneck_forward_nhwc.1} parent=11 // pred_check_branch
          %249 = sbr.rel (%p247) target = $region32
        $region31: #{eca_bottleneck_forward_nhwc.1} parent=11 // pred_region
          _
        $region32: #{eca_bottleneck_forward_nhwc.1} parent=11 // pred_fallthru
          _
        // Predicated region
        $region33: #{eca_bottleneck_forward_nhwc.1} parent=11 // pred_check
          %p250 = pneg %p173
        $region34: #{eca_bottleneck_forward_nhwc.1} parent=11 // pred_check_branch
          %252 = sbr.rel (%p250) target = $region36
        $region35: #{eca_bottleneck_forward_nhwc.1} parent=11 // pred_region
          _
        $region36: #{eca_bottleneck_forward_nhwc.1} parent=11 // pred_fallthru
          _
        // Predicated region
        $region37: #{eca_bottleneck_forward_nhwc.1} parent=11 // pred_check
          %p253 = pneg %p194
        $region38: #{eca_bottleneck_forward_nhwc.1} parent=11 // pred_check_branch
          %255 = sbr.rel (%p253) target = $region40
        $region39: #{eca_bottleneck_forward_nhwc.1} parent=11 // pred_region
          %s257 = ssub.s32 16, 16
          %258 = vsyncadd [#allocation6], %s257
          %s260 = sshll.u32 %s7, 4
          %s261 = int_to_ptr.vmem [resolvable:$true] %s260
          %263 = dma.vmem_to_smem %s261, 16, [#allocation7], [#allocation6]
        $region40: #{eca_bottleneck_forward_nhwc.1} parent=11 // pred_fallthru
          _
      $region12: #{eca_bottleneck_forward_nhwc.1} parent=5 // pred_fallthru
        _
      %p264 = scmp.lt.s32.totalorder %s21, 2
      // Predicated region
      $region41: #{eca_bottleneck_forward_nhwc.1} parent=5 // pred_check
        %p265 = pneg %p264
      $region42: #{eca_bottleneck_forward_nhwc.1} parent=5 // pred_check_branch
        %267 = sbr.rel (%p265) target = $region44
      $region43: #{eca_bottleneck_forward_nhwc.1} parent=5 // pred_region
        // Predicated region
        $region45: #{eca_bottleneck_forward_nhwc.1} parent=43 // pred_check
          %p268 = pneg %p41
        $region46: #{eca_bottleneck_forward_nhwc.1} parent=43 // pred_check_branch
          %270 = sbr.rel (%p268) target = $region48
        $region47: #{eca_bottleneck_forward_nhwc.1} parent=43 // pred_region
          %s271 = sand.u32 %s31, 1
          %s272 = scalar_lea.sflag [#allocation4], %s271
          %s273 = sand.u32 %s31, 1
          %s274 = smul.addr %s273, 256
          %s275 = scalar_lea.vmem [#allocation3], %s274
          %s277 = ssub.s32 4096, 4096
          %278 = vsyncadd %s272, %s277
          %s279 = smul.addr %s21, 32
          %s280 = smul.addr %s279, 128
          %s281 = scalar_lea.hbm %s0, %s280
          %s282 = sshll.u32 %s275, 4
          %s283 = int_to_ptr.vmem [resolvable:$true] %s282
          %288 = dma.hbm_to_vmem [thread:$0]  %s281, 4096, %s283, %s272, 128, 128, 8
        $region48: #{eca_bottleneck_forward_nhwc.1} parent=43 // pred_fallthru
          _
      $region44: #{eca_bottleneck_forward_nhwc.1} parent=5 // pred_fallthru
        _
      %p289 = scmp.le.s32.totalorder 1, %s21
      %p290 = scmp.lt.s32.totalorder %s21, 3
      %p291 = pnand %p289, %p290
      %p292 = pneg %p291
      // Predicated region
      $region49: #{eca_bottleneck_forward_nhwc.1} parent=5 // pred_check
        _
      $region50: #{eca_bottleneck_forward_nhwc.1} parent=5 // pred_check_branch
        %294 = sbr.rel (%p291) target = $region52
      $region51: #{eca_bottleneck_forward_nhwc.1} parent=5 // pred_region
        %s295 = ssub.s32 %s21, 1
        %s296 = sand.u32 %s34, 1
        %s297 = scalar_lea.sflag [#allocation4], %s296
        %s298 = sand.u32 %s34, 1
        %s299 = smul.addr %s298, 256
        %s300 = scalar_lea.vmem [#allocation3], %s299
        // Predicated region
        $region53: #{eca_bottleneck_forward_nhwc.1} parent=51 // pred_check
          %p301 = pneg %p47
        $region54: #{eca_bottleneck_forward_nhwc.1} parent=51 // pred_check_branch
          %303 = sbr.rel (%p301) target = $region56
        $region55: #{eca_bottleneck_forward_nhwc.1} parent=51 // pred_region
          %304 = dma.done %s297, 4096
        $region56: #{eca_bottleneck_forward_nhwc.1} parent=51 // pred_fallthru
          _
        // Predicated region
        $region57: #{eca_bottleneck_forward_nhwc.1} parent=51 // pred_check
          %p305 = pneg %p194
        $region58: #{eca_bottleneck_forward_nhwc.1} parent=51 // pred_check_branch
          %307 = sbr.rel (%p305) target = $region60
        $region59: #{eca_bottleneck_forward_nhwc.1} parent=51 // pred_region
          %308 = dma.done [#allocation6], 16
        $region60: #{eca_bottleneck_forward_nhwc.1} parent=51 // pred_fallthru
          _
        %309 = sfence
        %s310 = sand.u32 %s34, 1
        %s311 = scalar_lea.sflag [#allocation4], %s310
        %s312 = sand.u32 %s34, 1
        %s313 = smul.addr %s312, 256
        %s314 = scalar_lea.vmem [#allocation3], %s313
        %p315 = pneg %p47
        %p316 = pneg %p44
        %p317 = pneg %p68
        %p318 = pneg %p65
        %p319 = pneg %p89
        %p320 = pneg %p86
        %p321 = pneg %p110
        %p322 = pneg %p107
        %p323 = pneg %p131
        %p324 = pneg %p128
        %p325 = pneg %p152
        %p326 = pneg %p149
        %p327 = pneg %p173
        %p328 = pneg %p170
        %p329 = pneg %p194
        %p330 = pneg %p191
        %p331 = pneg %p220
        %p332 = pneg %p217
        %s333 = sand.u32 %s207, 1
        %s334 = scalar_lea.sflag [#allocation5], %s333
        %s335 = sand.u32 %s207, 1
        %s336 = smul.addr %s335, 256
        %s337 = scalar_lea.vmem [#allocation8], %s336
        %v339 = vld [vmem:[%s300] sm:$0xff]
        %v340 = vld [vmem:[%s300 + $0x8] sm:$0xff]
        %v341 = vld [vmem:[%s300 + $0x10] sm:$0xff]
        %v342 = vld [vmem:[%s300 + $0x18] sm:$0xff]
        %v343 = vld [vmem:[%s300 + $0x20] sm:$0xff]
        %v344 = vld [vmem:[%s300 + $0x28] sm:$0xff]
        %v345 = vld [vmem:[%s300 + $0x30] sm:$0xff]
        %v346 = vld [vmem:[%s300 + $0x38] sm:$0xff]
        %v347 = vld [vmem:[%s300 + $0x40] sm:$0xff]
        %v348 = vld [vmem:[%s300 + $0x48] sm:$0xff]
        %v349 = vld [vmem:[%s300 + $0x50] sm:$0xff]
        %v350 = vld [vmem:[%s300 + $0x58] sm:$0xff]
        %v351 = vld [vmem:[%s300 + $0x60] sm:$0xff]
        %v352 = vld [vmem:[%s300 + $0x68] sm:$0xff]
        %v353 = vld [vmem:[%s300 + $0x70] sm:$0xff]
        %v354 = vld [vmem:[%s300 + $0x78] sm:$0xff]
        %v355 = vld [vmem:[%s300 + $0x80] sm:$0xff]
        %v356 = vld [vmem:[%s300 + $0x88] sm:$0xff]
        %v357 = vld [vmem:[%s300 + $0x90] sm:$0xff]
        %v358 = vld [vmem:[%s300 + $0x98] sm:$0xff]
        %v359 = vld [vmem:[%s300 + $0xa0] sm:$0xff]
        %v360 = vld [vmem:[%s300 + $0xa8] sm:$0xff]
        %v361 = vld [vmem:[%s300 + $0xb0] sm:$0xff]
        %v362 = vld [vmem:[%s300 + $0xb8] sm:$0xff]
        %v363 = vld [vmem:[%s300 + $0xc0] sm:$0xff]
        %v364 = vld [vmem:[%s300 + $0xc8] sm:$0xff]
        %v365 = vld [vmem:[%s300 + $0xd0] sm:$0xff]
        %v366 = vld [vmem:[%s300 + $0xd8] sm:$0xff]
        %v367 = vld [vmem:[%s300 + $0xe0] sm:$0xff]
        %v368 = vld [vmem:[%s300 + $0xe8] sm:$0xff]
        %v369 = vld [vmem:[%s300 + $0xf0] sm:$0xff]
        %v370 = vld [vmem:[%s300 + $0xf8] sm:$0xff]
        %v371 = vpack.c.bf16 %v340, %v339
        %v372 = vpack.c.bf16 %v342, %v341
        %v373 = vpack.c.bf16 %v344, %v343
        %v374 = vpack.c.bf16 %v346, %v345
        %v375 = vpack.c.bf16 %v348, %v347
        %v376 = vpack.c.bf16 %v350, %v349
        %v377 = vpack.c.bf16 %v352, %v351
        %v378 = vpack.c.bf16 %v354, %v353
        %v379 = vpack.c.bf16 %v356, %v355
        %v380 = vpack.c.bf16 %v358, %v357
        %v381 = vpack.c.bf16 %v360, %v359
        %v382 = vpack.c.bf16 %v362, %v361
        %v383 = vpack.c.bf16 %v364, %v363
        %v384 = vpack.c.bf16 %v366, %v365
        %v385 = vpack.c.bf16 %v368, %v367
        %v386 = vpack.c.bf16 %v370, %v369
        %v387 = vld [vmem:[%s1] sm:$0xf]
        %v388 = vld [vmem:[%s1 + $0x4] sm:$0xf]
        %v389 = vld [vmem:[%s4] sm:$0x1]
        %v391 = vlaneseq
        %v392 = vshrl.u32 %v391, 7
        %v393 = vsub.s32 0, %v392
        %v394 = vrot.slane %v389, %v393
        %v398 = vunpack.c.l.b16 %v387
        %v399 = vunpack.c.l.b16 %v388
        %v400 = vpack.c.b16 %v399, %v398
        %vm402 = vcmask 130048
        %v404 = vsel %vm402, %v371, 0
        %v407 = vsel %vm402, %v372, 0
        %v410 = vsel %vm402, %v373, 0
        %v413 = vsel %vm402, %v374, 0
        %v416 = vsel %vm402, %v375, 0
        %v419 = vsel %vm402, %v376, 0
        %v422 = vsel %vm402, %v377, 0
        %v425 = vsel %vm402, %v378, 0
        %v428 = vsel %vm402, %v379, 0
        %v431 = vsel %vm402, %v380, 0
        %v434 = vsel %vm402, %v381, 0
        %v437 = vsel %vm402, %v382, 0
        %v440 = vsel %vm402, %v383, 0
        %v443 = vsel %vm402, %v384, 0
        %v446 = vsel %vm402, %v385, 0
        %v449 = vsel %vm402, %v386, 0
        %451 = vmatprep.subr.bf16.mxu0 0
        %452 = vmatpush1.bf16.msra.mxu0 0
        %453 = vmatprep.subr.bf16.mxu0 0
        %454 = vmatpush1.bf16.msra.mxu0 0
        %455 = vmatprep.subr.bf16.mxu0 0
        %456 = vmatpush1.bf16.msra.mxu0 0
        %457 = vmatprep.subr.bf16.mxu0 0
        %458 = vmatpush1.bf16.msra.mxu0 0
        %459 = vmatprep.subr.bf16.mxu0 0
        %460 = vmatpush1.bf16.msra.mxu0 0
        %461 = vmatprep.subr.bf16.mxu0 0
        %462 = vmatpush1.bf16.msra.mxu0 0
        %463 = vmatprep.subr.bf16.mxu0 0
        %464 = vmatpush1.bf16.msra.mxu0 0
        %465 = vmatprep.subr.bf16.mxu0 0
        %466 = vmatpush1.bf16.msra.mxu0 %v400
        %467 = vmatprep.subr.bf16.mxu0 0
        %468 = vmatpush2.bf16.msra.mxu0 0
        %469 = vmatprep.subr.bf16.mxu0 0
        %470 = vmatpush2.bf16.msra.mxu0 0
        %471 = vmatprep.subr.bf16.mxu0 0
        %472 = vmatpush2.bf16.msra.mxu0 0
        %473 = vmatprep.subr.bf16.mxu0 0
        %474 = vmatpush2.bf16.msra.mxu0 0
        %475 = vmatprep.subr.bf16.mxu0 0
        %476 = vmatpush2.bf16.msra.mxu0 0
        %477 = vmatprep.subr.bf16.mxu0 0
        %478 = vmatpush2.bf16.msra.mxu0 0
        %479 = vmatprep.subr.bf16.mxu0 0
        %480 = vmatpush2.bf16.msra.mxu0 0
        %481 = vmatprep.subr.bf16.mxu0 0
        %482 = vmatpush2.bf16.msra.mxu0 0
        %483 = vmatprep.mubr.bf16.mxu0 0
        %484 = vmatmul.mubr.bf16.gmra.mxu0 %v404
        %v485 = vpop.f32.mrf.mxu0
        %v486 = vadd.f32 %v394, %v485
        %v487 = vpop.f32.mrf.mxu0
        %v488 = vpop.f32.mrf.mxu0
        %v489 = vadd.f32 %v394, %v488
        %v490 = vpop.f32.mrf.mxu0
        %491 = vmatprep.mubr.bf16.mxu0 0
        %492 = vmatmul.mubr.bf16.gmra.mxu0 %v407
        %v493 = vpop.f32.mrf.mxu0
        %v494 = vadd.f32 %v394, %v493
        %v495 = vpop.f32.mrf.mxu0
        %v496 = vpop.f32.mrf.mxu0
        %v497 = vadd.f32 %v394, %v496
        %v498 = vpop.f32.mrf.mxu0
        %499 = vmatprep.mubr.bf16.mxu0 0
        %500 = vmatmul.mubr.bf16.gmra.mxu0 %v410
        %v501 = vpop.f32.mrf.mxu0
        %v502 = vadd.f32 %v394, %v501
        %v503 = vpop.f32.mrf.mxu0
        %v504 = vpop.f32.mrf.mxu0
        %v505 = vadd.f32 %v394, %v504
        %v506 = vpop.f32.mrf.mxu0
        %507 = vmatprep.mubr.bf16.mxu0 0
        %508 = vmatmul.mubr.bf16.gmra.mxu0 %v413
        %v509 = vpop.f32.mrf.mxu0
        %v510 = vadd.f32 %v394, %v509
        %v511 = vpop.f32.mrf.mxu0
        %v512 = vpop.f32.mrf.mxu0
        %v513 = vadd.f32 %v394, %v512
        %v514 = vpop.f32.mrf.mxu0
        %515 = vmatprep.mubr.bf16.mxu0 0
        %516 = vmatmul.mubr.bf16.gmra.mxu0 %v416
        %v517 = vpop.f32.mrf.mxu0
        %v518 = vadd.f32 %v394, %v517
        %v519 = vpop.f32.mrf.mxu0
        %v520 = vpop.f32.mrf.mxu0
        %v521 = vadd.f32 %v394, %v520
        %v522 = vpop.f32.mrf.mxu0
        %523 = vmatprep.mubr.bf16.mxu0 0
        %524 = vmatmul.mubr.bf16.gmra.mxu0 %v419
        %v525 = vpop.f32.mrf.mxu0
        %v526 = vadd.f32 %v394, %v525
        %v527 = vpop.f32.mrf.mxu0
        %v528 = vpop.f32.mrf.mxu0
        %v529 = vadd.f32 %v394, %v528
        %v530 = vpop.f32.mrf.mxu0
        %531 = vmatprep.mubr.bf16.mxu0 0
        %532 = vmatmul.mubr.bf16.gmra.mxu0 %v422
        %v533 = vpop.f32.mrf.mxu0
        %v534 = vadd.f32 %v394, %v533
        %v535 = vpop.f32.mrf.mxu0
        %v536 = vpop.f32.mrf.mxu0
        %v537 = vadd.f32 %v394, %v536
        %v538 = vpop.f32.mrf.mxu0
        %539 = vmatprep.mubr.bf16.mxu0 0
        %540 = vmatmul.mubr.bf16.gmra.mxu0 %v425
        %v541 = vpop.f32.mrf.mxu0
        %v542 = vadd.f32 %v394, %v541
        %v543 = vpop.f32.mrf.mxu0
        %v544 = vpop.f32.mrf.mxu0
        %v545 = vadd.f32 %v394, %v544
        %v546 = vpop.f32.mrf.mxu0
        %547 = vmatprep.mubr.bf16.mxu0 0
        %548 = vmatmul.mubr.bf16.gmra.mxu0 %v428
        %v549 = vpop.f32.mrf.mxu0
        %v550 = vadd.f32 %v394, %v549
        %v551 = vpop.f32.mrf.mxu0
        %v552 = vpop.f32.mrf.mxu0
        %v553 = vadd.f32 %v394, %v552
        %v554 = vpop.f32.mrf.mxu0
        %555 = vmatprep.mubr.bf16.mxu0 0
        %556 = vmatmul.mubr.bf16.gmra.mxu0 %v431
        %v557 = vpop.f32.mrf.mxu0
        %v558 = vadd.f32 %v394, %v557
        %v559 = vpop.f32.mrf.mxu0
        %v560 = vpop.f32.mrf.mxu0
        %v561 = vadd.f32 %v394, %v560
        %v562 = vpop.f32.mrf.mxu0
        %563 = vmatprep.mubr.bf16.mxu0 0
        %564 = vmatmul.mubr.bf16.gmra.mxu0 %v434
        %v565 = vpop.f32.mrf.mxu0
        %v566 = vadd.f32 %v394, %v565
        %v567 = vpop.f32.mrf.mxu0
        %v568 = vpop.f32.mrf.mxu0
        %v569 = vadd.f32 %v394, %v568
        %v570 = vpop.f32.mrf.mxu0
        %571 = vmatprep.mubr.bf16.mxu0 0
        %572 = vmatmul.mubr.bf16.gmra.mxu0 %v437
        %v573 = vpop.f32.mrf.mxu0
        %v574 = vadd.f32 %v394, %v573
        %v575 = vpop.f32.mrf.mxu0
        %v576 = vpop.f32.mrf.mxu0
        %v577 = vadd.f32 %v394, %v576
        %v578 = vpop.f32.mrf.mxu0
        %579 = vmatprep.mubr.bf16.mxu0 0
        %580 = vmatmul.mubr.bf16.gmra.mxu0 %v440
        %v581 = vpop.f32.mrf.mxu0
        %v582 = vadd.f32 %v394, %v581
        %v583 = vpop.f32.mrf.mxu0
        %v584 = vpop.f32.mrf.mxu0
        %v585 = vadd.f32 %v394, %v584
        %v586 = vpop.f32.mrf.mxu0
        %587 = vmatprep.mubr.bf16.mxu0 0
        %588 = vmatmul.mubr.bf16.gmra.mxu0 %v443
        %v589 = vpop.f32.mrf.mxu0
        %v590 = vadd.f32 %v394, %v589
        %v591 = vpop.f32.mrf.mxu0
        %v592 = vpop.f32.mrf.mxu0
        %v593 = vadd.f32 %v394, %v592
        %v594 = vpop.f32.mrf.mxu0
        %595 = vmatprep.mubr.bf16.mxu0 0
        %596 = vmatmul.mubr.bf16.gmra.mxu0 %v446
        %v597 = vpop.f32.mrf.mxu0
        %v598 = vadd.f32 %v394, %v597
        %v599 = vpop.f32.mrf.mxu0
        %v600 = vpop.f32.mrf.mxu0
        %v601 = vadd.f32 %v394, %v600
        %v602 = vpop.f32.mrf.mxu0
        %603 = vmatprep.mubr.bf16.mxu0 0
        %604 = vmatmul.mubr.bf16.gmra.mxu0 %v449
        %v605 = vpop.f32.mrf.mxu0
        %v606 = vadd.f32 %v394, %v605
        %v607 = vpop.f32.mrf.mxu0
        %v608 = vpop.f32.mrf.mxu0
        %v609 = vadd.f32 %v394, %v608
        %v610 = vpop.f32.mrf.mxu0
        %611 = vdwg.mxu0
        %v612 = vmax.f32 %v486, 0.0
        %v613 = vmax.f32 %v489, 0.0
        %v614 = vmax.f32 %v494, 0.0
        %v615 = vmax.f32 %v497, 0.0
        %v616 = vmax.f32 %v502, 0.0
        %v617 = vmax.f32 %v505, 0.0
        %v618 = vmax.f32 %v510, 0.0
        %v619 = vmax.f32 %v513, 0.0
        %v620 = vmax.f32 %v518, 0.0
        %v621 = vmax.f32 %v521, 0.0
        %v622 = vmax.f32 %v526, 0.0
        %v623 = vmax.f32 %v529, 0.0
        %v624 = vmax.f32 %v534, 0.0
        %v625 = vmax.f32 %v537, 0.0
        %v626 = vmax.f32 %v542, 0.0
        %v627 = vmax.f32 %v545, 0.0
        %v628 = vmax.f32 %v550, 0.0
        %v629 = vmax.f32 %v553, 0.0
        %v630 = vmax.f32 %v558, 0.0
        %v631 = vmax.f32 %v561, 0.0
        %v632 = vmax.f32 %v566, 0.0
        %v633 = vmax.f32 %v569, 0.0
        %v634 = vmax.f32 %v574, 0.0
        %v635 = vmax.f32 %v577, 0.0
        %v636 = vmax.f32 %v582, 0.0
        %v637 = vmax.f32 %v585, 0.0
        %v638 = vmax.f32 %v590, 0.0
        %v639 = vmax.f32 %v593, 0.0
        %v640 = vmax.f32 %v598, 0.0
        %v641 = vmax.f32 %v601, 0.0
        %v642 = vmax.f32 %v606, 0.0
        %v643 = vmax.f32 %v609, 0.0
        %vm644 = vcmask 27648
        %645 = vst.msk [vmem:[#allocation2] sm:$0xf] %vm644, 0
        %646 = vst.msk [vmem:[#allocation2 + $0x4] sm:$0xf] %vm644, 0
        %vm647 = vcmask 24576
        %648 = vst.msk [vmem:[#allocation2 + $0x8] sm:$0x1] %vm647, 0
        %s649 = scalar_lea.vmem [#allocation2], 204
        %650 = vst.msk [vmem:[%s649] sm:$0xf] %vm644, 0
        %651 = vst.msk [vmem:[%s649 + $0x4] sm:$0xf] %vm644, 0
        %652 = vst.msk [vmem:[%s649 + $0x8] sm:$0x1] %vm647, 0
        %s653 = scalar_lea.vmem [#allocation2], 12
        %vm654 = vcmask 24576
        %vm655 = vsmask.f32 256
        %vm656 = vmand %vm654, %vm655
        %v657 = vld [vmem:[%s653] sm:$0x1]
        %v658 = vsel %vm656, 0, %v657
        %659 = vst [vmem:[%s653] sm:$0x1] %v658
        %v660 = vld [vmem:[%s653 + $0xc] sm:$0x1]
        %v661 = vsel %vm656, 0, %v660
        %662 = vst [vmem:[%s653 + $0xc] sm:$0x1] %v661
        %v663 = vld [vmem:[%s653 + $0x18] sm:$0x1]
        %v664 = vsel %vm656, 0, %v663
        %665 = vst [vmem:[%s653 + $0x18] sm:$0x1] %v664
        %v666 = vld [vmem:[%s653 + $0x24] sm:$0x1]
        %v667 = vsel %vm656, 0, %v666
        %668 = vst [vmem:[%s653 + $0x24] sm:$0x1] %v667
        %v669 = vld [vmem:[%s653 + $0x30] sm:$0x1]
        %v670 = vsel %vm656, 0, %v669
        %671 = vst [vmem:[%s653 + $0x30] sm:$0x1] %v670
        %v672 = vld [vmem:[%s653 + $0x3c] sm:$0x1]
        %v673 = vsel %vm656, 0, %v672
        %674 = vst [vmem:[%s653 + $0x3c] sm:$0x1] %v673
        %v675 = vld [vmem:[%s653 + $0x48] sm:$0x1]
        %v676 = vsel %vm656, 0, %v675
        %677 = vst [vmem:[%s653 + $0x48] sm:$0x1] %v676
        %v678 = vld [vmem:[%s653 + $0x54] sm:$0x1]
        %v679 = vsel %vm656, 0, %v678
        %680 = vst [vmem:[%s653 + $0x54] sm:$0x1] %v679
        %v681 = vld [vmem:[%s653 + $0x60] sm:$0x1]
        %v682 = vsel %vm656, 0, %v681
        %683 = vst [vmem:[%s653 + $0x60] sm:$0x1] %v682
        %v684 = vld [vmem:[%s653 + $0x6c] sm:$0x1]
        %v685 = vsel %vm656, 0, %v684
        %686 = vst [vmem:[%s653 + $0x6c] sm:$0x1] %v685
        %v687 = vld [vmem:[%s653 + $0x78] sm:$0x1]
        %v688 = vsel %vm656, 0, %v687
        %689 = vst [vmem:[%s653 + $0x78] sm:$0x1] %v688
        %v690 = vld [vmem:[%s653 + $0x84] sm:$0x1]
        %v691 = vsel %vm656, 0, %v690
        %692 = vst [vmem:[%s653 + $0x84] sm:$0x1] %v691
        %v693 = vld [vmem:[%s653 + $0x90] sm:$0x1]
        %v694 = vsel %vm656, 0, %v693
        %695 = vst [vmem:[%s653 + $0x90] sm:$0x1] %v694
        %v696 = vld [vmem:[%s653 + $0x9c] sm:$0x1]
        %v697 = vsel %vm656, 0, %v696
        %698 = vst [vmem:[%s653 + $0x9c] sm:$0x1] %v697
        %v699 = vld [vmem:[%s653 + $0xa8] sm:$0x1]
        %v700 = vsel %vm656, 0, %v699
        %701 = vst [vmem:[%s653 + $0xa8] sm:$0x1] %v700
        %v702 = vld [vmem:[%s653 + $0xb4] sm:$0x1]
        %v703 = vsel %vm656, 0, %v702
        %704 = vst [vmem:[%s653 + $0xb4] sm:$0x1] %v703
        %vm705 = vsmask.f32 7938
        %vm706 = vmand %vm654, %vm705
        %v707 = vld [vmem:[%s653 + $0x8] sm:$0x1]
        %v708 = vsel %vm706, 0, %v707
        %709 = vst [vmem:[%s653 + $0x8] sm:$0x1] %v708
        %v710 = vld [vmem:[%s653 + $0x14] sm:$0x1]
        %v711 = vsel %vm706, 0, %v710
        %712 = vst [vmem:[%s653 + $0x14] sm:$0x1] %v711
        %v713 = vld [vmem:[%s653 + $0x20] sm:$0x1]
        %v714 = vsel %vm706, 0, %v713
        %715 = vst [vmem:[%s653 + $0x20] sm:$0x1] %v714
        %v716 = vld [vmem:[%s653 + $0x2c] sm:$0x1]
        %v717 = vsel %vm706, 0, %v716
        %718 = vst [vmem:[%s653 + $0x2c] sm:$0x1] %v717
        %v719 = vld [vmem:[%s653 + $0x38] sm:$0x1]
        %v720 = vsel %vm706, 0, %v719
        %721 = vst [vmem:[%s653 + $0x38] sm:$0x1] %v720
        %v722 = vld [vmem:[%s653 + $0x44] sm:$0x1]
        %v723 = vsel %vm706, 0, %v722
        %724 = vst [vmem:[%s653 + $0x44] sm:$0x1] %v723
        %v725 = vld [vmem:[%s653 + $0x50] sm:$0x1]
        %v726 = vsel %vm706, 0, %v725
        %727 = vst [vmem:[%s653 + $0x50] sm:$0x1] %v726
        %v728 = vld [vmem:[%s653 + $0x5c] sm:$0x1]
        %v729 = vsel %vm706, 0, %v728
        %730 = vst [vmem:[%s653 + $0x5c] sm:$0x1] %v729
        %v731 = vld [vmem:[%s653 + $0x68] sm:$0x1]
        %v732 = vsel %vm706, 0, %v731
        %733 = vst [vmem:[%s653 + $0x68] sm:$0x1] %v732
        %v734 = vld [vmem:[%s653 + $0x74] sm:$0x1]
        %v735 = vsel %vm706, 0, %v734
        %736 = vst [vmem:[%s653 + $0x74] sm:$0x1] %v735
        %v737 = vld [vmem:[%s653 + $0x80] sm:$0x1]
        %v738 = vsel %vm706, 0, %v737
        %739 = vst [vmem:[%s653 + $0x80] sm:$0x1] %v738
        %v740 = vld [vmem:[%s653 + $0x8c] sm:$0x1]
        %v741 = vsel %vm706, 0, %v740
        %742 = vst [vmem:[%s653 + $0x8c] sm:$0x1] %v741
        %v743 = vld [vmem:[%s653 + $0x98] sm:$0x1]
        %v744 = vsel %vm706, 0, %v743
        %745 = vst [vmem:[%s653 + $0x98] sm:$0x1] %v744
        %v746 = vld [vmem:[%s653 + $0xa4] sm:$0x1]
        %v747 = vsel %vm706, 0, %v746
        %748 = vst [vmem:[%s653 + $0xa4] sm:$0x1] %v747
        %v749 = vld [vmem:[%s653 + $0xb0] sm:$0x1]
        %v750 = vsel %vm706, 0, %v749
        %751 = vst [vmem:[%s653 + $0xb0] sm:$0x1] %v750
        %v752 = vld [vmem:[%s653 + $0xbc] sm:$0x1]
        %v753 = vsel %vm706, 0, %v752
        %754 = vst [vmem:[%s653 + $0xbc] sm:$0x1] %v753
        %v755 = vpack.c.bf16 %v613, %v612
        %v756 = vpack.c.bf16 %v615, %v614
        %v757 = vpack.c.bf16 %v617, %v616
        %v758 = vpack.c.bf16 %v619, %v618
        %v759 = vpack.c.bf16 %v621, %v620
        %v760 = vpack.c.bf16 %v623, %v622
        %v761 = vpack.c.bf16 %v625, %v624
        %v762 = vpack.c.bf16 %v627, %v626
        %v763 = vpack.c.bf16 %v629, %v628
        %v764 = vpack.c.bf16 %v631, %v630
        %v765 = vpack.c.bf16 %v633, %v632
        %v766 = vpack.c.bf16 %v635, %v634
        %v767 = vpack.c.bf16 %v637, %v636
        %v768 = vpack.c.bf16 %v639, %v638
        %v769 = vpack.c.bf16 %v641, %v640
        %v770 = vpack.c.bf16 %v643, %v642
        %v787 = vunpack.c.l.b16 %v755
        %v788 = vunpack.c.h.b16 %v755
        %v789 = vunpack.c.l.b16 %v756
        %v790 = vunpack.c.h.b16 %v756
        %v791 = vunpack.c.l.b16 %v757
        %v792 = vunpack.c.h.b16 %v757
        %v793 = vunpack.c.l.b16 %v758
        %v794 = vunpack.c.h.b16 %v758
        %v795 = vunpack.c.l.b16 %v759
        %v796 = vunpack.c.h.b16 %v759
        %v797 = vunpack.c.l.b16 %v760
        %v798 = vunpack.c.h.b16 %v760
        %v799 = vunpack.c.l.b16 %v761
        %v800 = vunpack.c.h.b16 %v761
        %v801 = vunpack.c.l.b16 %v762
        %v802 = vunpack.c.h.b16 %v762
        %v803 = vunpack.c.l.b16 %v763
        %v804 = vunpack.c.h.b16 %v763
        %v805 = vunpack.c.l.b16 %v764
        %v806 = vunpack.c.h.b16 %v764
        %v807 = vunpack.c.l.b16 %v765
        %v808 = vunpack.c.h.b16 %v765
        %v809 = vunpack.c.l.b16 %v766
        %v810 = vunpack.c.h.b16 %v766
        %v811 = vunpack.c.l.b16 %v767
        %v812 = vunpack.c.h.b16 %v767
        %v813 = vunpack.c.l.b16 %v768
        %v814 = vunpack.c.h.b16 %v768
        %v815 = vunpack.c.l.b16 %v769
        %v816 = vunpack.c.h.b16 %v769
        %v817 = vunpack.c.l.b16 %v770
        %v818 = vunpack.c.h.b16 %v770
        %v819 = vpack.c.b16 %v787, %v787
        %v820 = vpack.c.b16 %v788, %v788
        %v821 = vpack.c.b16 %v789, %v789
        %v822 = vpack.c.b16 %v790, %v790
        %v823 = vpack.c.b16 %v791, %v791
        %v824 = vpack.c.b16 %v792, %v792
        %v825 = vpack.c.b16 %v793, %v793
        %v826 = vpack.c.b16 %v794, %v794
        %v827 = vpack.c.b16 %v795, %v795
        %v828 = vpack.c.b16 %v796, %v796
        %v829 = vpack.c.b16 %v797, %v797
        %v830 = vpack.c.b16 %v798, %v798
        %v831 = vpack.c.b16 %v799, %v799
        %v832 = vpack.c.b16 %v800, %v800
        %v833 = vpack.c.b16 %v801, %v801
        %v834 = vpack.c.b16 %v802, %v802
        %v835 = vpack.c.b16 %v803, %v803
        %v836 = vpack.c.b16 %v804, %v804
        %v837 = vpack.c.b16 %v805, %v805
        %v838 = vpack.c.b16 %v806, %v806
        %v839 = vpack.c.b16 %v807, %v807
        %v840 = vpack.c.b16 %v808, %v808
        %v841 = vpack.c.b16 %v809, %v809
        %v842 = vpack.c.b16 %v810, %v810
        %v843 = vpack.c.b16 %v811, %v811
        %v844 = vpack.c.b16 %v812, %v812
        %v845 = vpack.c.b16 %v813, %v813
        %v846 = vpack.c.b16 %v814, %v814
        %v847 = vpack.c.b16 %v815, %v815
        %v848 = vpack.c.b16 %v816, %v816
        %v849 = vpack.c.b16 %v817, %v817
        %v850 = vpack.c.b16 %v818, %v818
        %vm851 = vsmask.f32 4368
        %vm852 = vmor %vm655, %vm851
        %v854 = vshrl.u32 %v819, 16
        %v856 = vrot.slane %v854, 7
        %v857 = vshll.u32 %v819, 16
        %v859 = vor.u32 %v856, %v857
        %v860 = vrot.slane %v856, 4
        %v862 = vshrl.u32 %v820, 16
        %v864 = vrot.slane %v862, 7
        %v865 = vshll.u32 %v820, 16
        %v867 = vor.u32 %v864, %v865
        %v868 = vsel %vm852, %v860, %v867
        %v869 = vrot.slane %v864, 4
        %v871 = vshrl.u32 %v821, 16
        %v873 = vrot.slane %v871, 7
        %v874 = vshll.u32 %v821, 16
        %v876 = vor.u32 %v873, %v874
        %v877 = vrot.slane %v873, 4
        %v879 = vshrl.u32 %v822, 16
        %v881 = vrot.slane %v879, 7
        %v882 = vshll.u32 %v822, 16
        %v884 = vor.u32 %v881, %v882
        %v885 = vsel %vm852, %v877, %v884
        %v886 = vrot.slane %v881, 4
        %v888 = vshrl.u32 %v823, 16
        %v890 = vrot.slane %v888, 7
        %v891 = vshll.u32 %v823, 16
        %v893 = vor.u32 %v890, %v891
        %v894 = vrot.slane %v890, 4
        %v896 = vshrl.u32 %v824, 16
        %v898 = vrot.slane %v896, 7
        %v899 = vshll.u32 %v824, 16
        %v901 = vor.u32 %v898, %v899
        %v902 = vsel %vm852, %v894, %v901
        %v903 = vrot.slane %v898, 4
        %v905 = vshrl.u32 %v825, 16
        %v907 = vrot.slane %v905, 7
        %v908 = vshll.u32 %v825, 16
        %v910 = vor.u32 %v907, %v908
        %v911 = vrot.slane %v907, 4
        %v913 = vshrl.u32 %v826, 16
        %v915 = vrot.slane %v913, 7
        %v916 = vshll.u32 %v826, 16
        %v918 = vor.u32 %v915, %v916
        %v919 = vsel %vm852, %v911, %v918
        %v920 = vrot.slane %v915, 4
        %v922 = vshrl.u32 %v827, 16
        %v924 = vrot.slane %v922, 7
        %v925 = vshll.u32 %v827, 16
        %v927 = vor.u32 %v924, %v925
        %v928 = vrot.slane %v924, 4
        %v930 = vshrl.u32 %v828, 16
        %v932 = vrot.slane %v930, 7
        %v933 = vshll.u32 %v828, 16
        %v935 = vor.u32 %v932, %v933
        %v936 = vsel %vm852, %v928, %v935
        %v937 = vrot.slane %v932, 4
        %v939 = vshrl.u32 %v829, 16
        %v941 = vrot.slane %v939, 7
        %v942 = vshll.u32 %v829, 16
        %v944 = vor.u32 %v941, %v942
        %v945 = vrot.slane %v941, 4
        %v947 = vshrl.u32 %v830, 16
        %v949 = vrot.slane %v947, 7
        %v950 = vshll.u32 %v830, 16
        %v952 = vor.u32 %v949, %v950
        %v953 = vsel %vm852, %v945, %v952
        %v954 = vrot.slane %v949, 4
        %v956 = vshrl.u32 %v831, 16
        %v958 = vrot.slane %v956, 7
        %v959 = vshll.u32 %v831, 16
        %v961 = vor.u32 %v958, %v959
        %v962 = vrot.slane %v958, 4
        %v964 = vshrl.u32 %v832, 16
        %v966 = vrot.slane %v964, 7
        %v967 = vshll.u32 %v832, 16
        %v969 = vor.u32 %v966, %v967
        %v970 = vsel %vm852, %v962, %v969
        %v971 = vrot.slane %v966, 4
        %v973 = vshrl.u32 %v833, 16
        %v975 = vrot.slane %v973, 7
        %v976 = vshll.u32 %v833, 16
        %v978 = vor.u32 %v975, %v976
        %v979 = vrot.slane %v975, 4
        %v981 = vshrl.u32 %v834, 16
        %v983 = vrot.slane %v981, 7
        %v984 = vshll.u32 %v834, 16
        %v986 = vor.u32 %v983, %v984
        %v987 = vsel %vm852, %v979, %v986
        %v988 = vrot.slane %v983, 4
        %v990 = vshrl.u32 %v835, 16
        %v992 = vrot.slane %v990, 7
        %v993 = vshll.u32 %v835, 16
        %v995 = vor.u32 %v992, %v993
        %v996 = vrot.slane %v992, 4
        %v998 = vshrl.u32 %v836, 16
        %v1000 = vrot.slane %v998, 7
        %v1001 = vshll.u32 %v836, 16
        %v1003 = vor.u32 %v1000, %v1001
        %v1004 = vsel %vm852, %v996, %v1003
        %v1005 = vrot.slane %v1000, 4
        %v1007 = vshrl.u32 %v837, 16
        %v1009 = vrot.slane %v1007, 7
        %v1010 = vshll.u32 %v837, 16
        %v1012 = vor.u32 %v1009, %v1010
        %v1013 = vrot.slane %v1009, 4
        %v1015 = vshrl.u32 %v838, 16
        %v1017 = vrot.slane %v1015, 7
        %v1018 = vshll.u32 %v838, 16
        %v1020 = vor.u32 %v1017, %v1018
        %v1021 = vsel %vm852, %v1013, %v1020
        %v1022 = vrot.slane %v1017, 4
        %v1024 = vshrl.u32 %v839, 16
        %v1026 = vrot.slane %v1024, 7
        %v1027 = vshll.u32 %v839, 16
        %v1029 = vor.u32 %v1026, %v1027
        %v1030 = vrot.slane %v1026, 4
        %v1032 = vshrl.u32 %v840, 16
        %v1034 = vrot.slane %v1032, 7
        %v1035 = vshll.u32 %v840, 16
        %v1037 = vor.u32 %v1034, %v1035
        %v1038 = vsel %vm852, %v1030, %v1037
        %v1039 = vrot.slane %v1034, 4
        %v1041 = vshrl.u32 %v841, 16
        %v1043 = vrot.slane %v1041, 7
        %v1044 = vshll.u32 %v841, 16
        %v1046 = vor.u32 %v1043, %v1044
        %v1047 = vrot.slane %v1043, 4
        %v1049 = vshrl.u32 %v842, 16
        %v1051 = vrot.slane %v1049, 7
        %v1052 = vshll.u32 %v842, 16
        %v1054 = vor.u32 %v1051, %v1052
        %v1055 = vsel %vm852, %v1047, %v1054
        %v1056 = vrot.slane %v1051, 4
        %v1058 = vshrl.u32 %v843, 16
        %v1060 = vrot.slane %v1058, 7
        %v1061 = vshll.u32 %v843, 16
        %v1063 = vor.u32 %v1060, %v1061
        %v1064 = vrot.slane %v1060, 4
        %v1066 = vshrl.u32 %v844, 16
        %v1068 = vrot.slane %v1066, 7
        %v1069 = vshll.u32 %v844, 16
        %v1071 = vor.u32 %v1068, %v1069
        %v1072 = vsel %vm852, %v1064, %v1071
        %v1073 = vrot.slane %v1068, 4
        %v1075 = vshrl.u32 %v845, 16
        %v1077 = vrot.slane %v1075, 7
        %v1078 = vshll.u32 %v845, 16
        %v1080 = vor.u32 %v1077, %v1078
        %v1081 = vrot.slane %v1077, 4
        %v1083 = vshrl.u32 %v846, 16
        %v1085 = vrot.slane %v1083, 7
        %v1086 = vshll.u32 %v846, 16
        %v1088 = vor.u32 %v1085, %v1086
        %v1089 = vsel %vm852, %v1081, %v1088
        %v1090 = vrot.slane %v1085, 4
        %v1092 = vshrl.u32 %v847, 16
        %v1094 = vrot.slane %v1092, 7
        %v1095 = vshll.u32 %v847, 16
        %v1097 = vor.u32 %v1094, %v1095
        %v1098 = vrot.slane %v1094, 4
        %v1100 = vshrl.u32 %v848, 16
        %v1102 = vrot.slane %v1100, 7
        %v1103 = vshll.u32 %v848, 16
        %v1105 = vor.u32 %v1102, %v1103
        %v1106 = vsel %vm852, %v1098, %v1105
        %v1107 = vrot.slane %v1102, 4
        %v1109 = vshrl.u32 %v849, 16
        %v1111 = vrot.slane %v1109, 7
        %v1112 = vshll.u32 %v849, 16
        %v1114 = vor.u32 %v1111, %v1112
        %v1115 = vrot.slane %v1111, 4
        %v1117 = vshrl.u32 %v850, 16
        %v1119 = vrot.slane %v1117, 7
        %v1120 = vshll.u32 %v850, 16
        %v1122 = vor.u32 %v1119, %v1120
        %v1123 = vsel %vm852, %v1115, %v1122
        %v1124 = vrot.slane %v1119, 4
        %vm1173 = vcmask 27648
        %vm1174 = vmand %vm1173, %vm705
        %v1175 = vld [vmem:[%s653] sm:$0xf]
        %v1176 = vsel %vm1174, %v859, %v1175
        %1177 = vst [vmem:[%s653] sm:$0xf] %v1176
        %1178 = vst.msk [vmem:[%s653 + $0x4] sm:$0xf] %vm644, %v868
        %v1179 = vld [vmem:[%s653 + $0x8] sm:$0x1]
        %v1180 = vsel %vm656, %v869, %v1179
        %1181 = vst [vmem:[%s653 + $0x8] sm:$0x1] %v1180
        %v1182 = vld [vmem:[%s653 + $0xc] sm:$0xf]
        %v1183 = vsel %vm1174, %v876, %v1182
        %1184 = vst [vmem:[%s653 + $0xc] sm:$0xf] %v1183
        %1185 = vst.msk [vmem:[%s653 + $0x10] sm:$0xf] %vm644, %v885
        %v1186 = vld [vmem:[%s653 + $0x14] sm:$0x1]
        %v1187 = vsel %vm656, %v886, %v1186
        %1188 = vst [vmem:[%s653 + $0x14] sm:$0x1] %v1187
        %v1189 = vld [vmem:[%s653 + $0x18] sm:$0xf]
        %v1190 = vsel %vm1174, %v893, %v1189
        %1191 = vst [vmem:[%s653 + $0x18] sm:$0xf] %v1190
        %1192 = vst.msk [vmem:[%s653 + $0x1c] sm:$0xf] %vm644, %v902
        %v1193 = vld [vmem:[%s653 + $0x20] sm:$0x1]
        %v1194 = vsel %vm656, %v903, %v1193
        %1195 = vst [vmem:[%s653 + $0x20] sm:$0x1] %v1194
        %v1196 = vld [vmem:[%s653 + $0x24] sm:$0xf]
        %v1197 = vsel %vm1174, %v910, %v1196
        %1198 = vst [vmem:[%s653 + $0x24] sm:$0xf] %v1197
        %1199 = vst.msk [vmem:[%s653 + $0x28] sm:$0xf] %vm644, %v919
        %v1200 = vld [vmem:[%s653 + $0x2c] sm:$0x1]
        %v1201 = vsel %vm656, %v920, %v1200
        %1202 = vst [vmem:[%s653 + $0x2c] sm:$0x1] %v1201
        %v1203 = vld [vmem:[%s653 + $0x30] sm:$0xf]
        %v1204 = vsel %vm1174, %v927, %v1203
        %1205 = vst [vmem:[%s653 + $0x30] sm:$0xf] %v1204
        %1206 = vst.msk [vmem:[%s653 + $0x34] sm:$0xf] %vm644, %v936
        %v1207 = vld [vmem:[%s653 + $0x38] sm:$0x1]
        %v1208 = vsel %vm656, %v937, %v1207
        %1209 = vst [vmem:[%s653 + $0x38] sm:$0x1] %v1208
        %v1210 = vld [vmem:[%s653 + $0x3c] sm:$0xf]
        %v1211 = vsel %vm1174, %v944, %v1210
        %1212 = vst [vmem:[%s653 + $0x3c] sm:$0xf] %v1211
        %1213 = vst.msk [vmem:[%s653 + $0x40] sm:$0xf] %vm644, %v953
        %v1214 = vld [vmem:[%s653 + $0x44] sm:$0x1]
        %v1215 = vsel %vm656, %v954, %v1214
        %1216 = vst [vmem:[%s653 + $0x44] sm:$0x1] %v1215
        %v1217 = vld [vmem:[%s653 + $0x48] sm:$0xf]
        %v1218 = vsel %vm1174, %v961, %v1217
        %1219 = vst [vmem:[%s653 + $0x48] sm:$0xf] %v1218
        %1220 = vst.msk [vmem:[%s653 + $0x4c] sm:$0xf] %vm644, %v970
        %v1221 = vld [vmem:[%s653 + $0x50] sm:$0x1]
        %v1222 = vsel %vm656, %v971, %v1221
        %1223 = vst [vmem:[%s653 + $0x50] sm:$0x1] %v1222
        %v1224 = vld [vmem:[%s653 + $0x54] sm:$0xf]
        %v1225 = vsel %vm1174, %v978, %v1224
        %1226 = vst [vmem:[%s653 + $0x54] sm:$0xf] %v1225
        %1227 = vst.msk [vmem:[%s653 + $0x58] sm:$0xf] %vm644, %v987
        %v1228 = vld [vmem:[%s653 + $0x5c] sm:$0x1]
        %v1229 = vsel %vm656, %v988, %v1228
        %1230 = vst [vmem:[%s653 + $0x5c] sm:$0x1] %v1229
        %v1231 = vld [vmem:[%s653 + $0x60] sm:$0xf]
        %v1232 = vsel %vm1174, %v995, %v1231
        %1233 = vst [vmem:[%s653 + $0x60] sm:$0xf] %v1232
        %1234 = vst.msk [vmem:[%s653 + $0x64] sm:$0xf] %vm644, %v1004
        %v1235 = vld [vmem:[%s653 + $0x68] sm:$0x1]
        %v1236 = vsel %vm656, %v1005, %v1235
        %1237 = vst [vmem:[%s653 + $0x68] sm:$0x1] %v1236
        %v1238 = vld [vmem:[%s653 + $0x6c] sm:$0xf]
        %v1239 = vsel %vm1174, %v1012, %v1238
        %1240 = vst [vmem:[%s653 + $0x6c] sm:$0xf] %v1239
        %1241 = vst.msk [vmem:[%s653 + $0x70] sm:$0xf] %vm644, %v1021
        %v1242 = vld [vmem:[%s653 + $0x74] sm:$0x1]
        %v1243 = vsel %vm656, %v1022, %v1242
        %1244 = vst [vmem:[%s653 + $0x74] sm:$0x1] %v1243
        %v1245 = vld [vmem:[%s653 + $0x78] sm:$0xf]
        %v1246 = vsel %vm1174, %v1029, %v1245
        %1247 = vst [vmem:[%s653 + $0x78] sm:$0xf] %v1246
        %1248 = vst.msk [vmem:[%s653 + $0x7c] sm:$0xf] %vm644, %v1038
        %v1249 = vld [vmem:[%s653 + $0x80] sm:$0x1]
        %v1250 = vsel %vm656, %v1039, %v1249
        %1251 = vst [vmem:[%s653 + $0x80] sm:$0x1] %v1250
        %v1252 = vld [vmem:[%s653 + $0x84] sm:$0xf]
        %v1253 = vsel %vm1174, %v1046, %v1252
        %1254 = vst [vmem:[%s653 + $0x84] sm:$0xf] %v1253
        %1255 = vst.msk [vmem:[%s653 + $0x88] sm:$0xf] %vm644, %v1055
        %v1256 = vld [vmem:[%s653 + $0x8c] sm:$0x1]
        %v1257 = vsel %vm656, %v1056, %v1256
        %1258 = vst [vmem:[%s653 + $0x8c] sm:$0x1] %v1257
        %v1259 = vld [vmem:[%s653 + $0x90] sm:$0xf]
        %v1260 = vsel %vm1174, %v1063, %v1259
        %1261 = vst [vmem:[%s653 + $0x90] sm:$0xf] %v1260
        %1262 = vst.msk [vmem:[%s653 + $0x94] sm:$0xf] %vm644, %v1072
        %v1263 = vld [vmem:[%s653 + $0x98] sm:$0x1]
        %v1264 = vsel %vm656, %v1073, %v1263
        %1265 = vst [vmem:[%s653 + $0x98] sm:$0x1] %v1264
        %v1266 = vld [vmem:[%s653 + $0x9c] sm:$0xf]
        %v1267 = vsel %vm1174, %v1080, %v1266
        %1268 = vst [vmem:[%s653 + $0x9c] sm:$0xf] %v1267
        %1269 = vst.msk [vmem:[%s653 + $0xa0] sm:$0xf] %vm644, %v1089
        %v1270 = vld [vmem:[%s653 + $0xa4] sm:$0x1]
        %v1271 = vsel %vm656, %v1090, %v1270
        %1272 = vst [vmem:[%s653 + $0xa4] sm:$0x1] %v1271
        %v1273 = vld [vmem:[%s653 + $0xa8] sm:$0xf]
        %v1274 = vsel %vm1174, %v1097, %v1273
        %1275 = vst [vmem:[%s653 + $0xa8] sm:$0xf] %v1274
        %1276 = vst.msk [vmem:[%s653 + $0xac] sm:$0xf] %vm644, %v1106
        %v1277 = vld [vmem:[%s653 + $0xb0] sm:$0x1]
        %v1278 = vsel %vm656, %v1107, %v1277
        %1279 = vst [vmem:[%s653 + $0xb0] sm:$0x1] %v1278
        %v1280 = vld [vmem:[%s653 + $0xb4] sm:$0xf]
        %v1281 = vsel %vm1174, %v1114, %v1280
        %1282 = vst [vmem:[%s653 + $0xb4] sm:$0xf] %v1281
        %1283 = vst.msk [vmem:[%s653 + $0xb8] sm:$0xf] %vm644, %v1123
        %v1284 = vld [vmem:[%s653 + $0xbc] sm:$0x1]
        %v1285 = vsel %vm656, %v1124, %v1284
        %1286 = vst [vmem:[%s653 + $0xbc] sm:$0x1] %v1285
        %v1287 = vld [vmem:[#allocation2] sm:$0xf]
        %v1288 = vld [vmem:[#allocation2 + $0x4] sm:$0xf]
        %v1289 = vld [vmem:[#allocation2 + $0xc] sm:$0xf]
        %v1290 = vld [vmem:[#allocation2 + $0x10] sm:$0xf]
        %v1291 = vld [vmem:[#allocation2 + $0x18] sm:$0xf]
        %v1292 = vld [vmem:[#allocation2 + $0x1c] sm:$0xf]
        %v1293 = vld [vmem:[#allocation2 + $0x24] sm:$0xf]
        %v1294 = vld [vmem:[#allocation2 + $0x28] sm:$0xf]
        %v1295 = vld [vmem:[#allocation2 + $0x30] sm:$0xf]
        %v1296 = vld [vmem:[#allocation2 + $0x34] sm:$0xf]
        %v1297 = vld [vmem:[#allocation2 + $0x3c] sm:$0xf]
        %v1298 = vld [vmem:[#allocation2 + $0x40] sm:$0xf]
        %v1299 = vld [vmem:[#allocation2 + $0x48] sm:$0xf]
        %v1300 = vld [vmem:[#allocation2 + $0x4c] sm:$0xf]
        %v1301 = vld [vmem:[#allocation2 + $0x54] sm:$0xf]
        %v1302 = vld [vmem:[#allocation2 + $0x58] sm:$0xf]
        %v1303 = vld [vmem:[#allocation2 + $0x60] sm:$0xf]
        %v1304 = vld [vmem:[#allocation2 + $0x64] sm:$0xf]
        %v1305 = vld [vmem:[#allocation2 + $0x6c] sm:$0xf]
        %v1306 = vld [vmem:[#allocation2 + $0x70] sm:$0xf]
        %v1307 = vld [vmem:[#allocation2 + $0x78] sm:$0xf]
        %v1308 = vld [vmem:[#allocation2 + $0x7c] sm:$0xf]
        %v1309 = vld [vmem:[#allocation2 + $0x84] sm:$0xf]
        %v1310 = vld [vmem:[#allocation2 + $0x88] sm:$0xf]
        %v1311 = vld [vmem:[#allocation2 + $0x90] sm:$0xf]
        %v1312 = vld [vmem:[#allocation2 + $0x94] sm:$0xf]
        %v1313 = vld [vmem:[#allocation2 + $0x9c] sm:$0xf]
        %v1314 = vld [vmem:[#allocation2 + $0xa0] sm:$0xf]
        %v1315 = vld [vmem:[#allocation2 + $0xa8] sm:$0xf]
        %v1316 = vld [vmem:[#allocation2 + $0xac] sm:$0xf]
        %v1317 = vld [vmem:[#allocation2 + $0xb4] sm:$0xf]
        %v1318 = vld [vmem:[#allocation2 + $0xb8] sm:$0xf]
        %v1319 = vld [vmem:[%s2] sm:$0x3]
        %v1320 = vld [vmem:[#allocation2 + $0x8] sm:$0x1]
        %v1321 = vld [vmem:[#allocation2 + $0x14] sm:$0x1]
        %v1322 = vld [vmem:[#allocation2 + $0x20] sm:$0x1]
        %v1323 = vld [vmem:[#allocation2 + $0x2c] sm:$0x1]
        %v1324 = vld [vmem:[#allocation2 + $0x38] sm:$0x1]
        %v1325 = vld [vmem:[#allocation2 + $0x44] sm:$0x1]
        %v1326 = vld [vmem:[#allocation2 + $0x50] sm:$0x1]
        %v1327 = vld [vmem:[#allocation2 + $0x5c] sm:$0x1]
        %v1328 = vld [vmem:[#allocation2 + $0x68] sm:$0x1]
        %v1329 = vld [vmem:[#allocation2 + $0x74] sm:$0x1]
        %v1330 = vld [vmem:[#allocation2 + $0x80] sm:$0x1]
        %v1331 = vld [vmem:[#allocation2 + $0x8c] sm:$0x1]
        %v1332 = vld [vmem:[#allocation2 + $0x98] sm:$0x1]
        %v1333 = vld [vmem:[#allocation2 + $0xa4] sm:$0x1]
        %v1334 = vld [vmem:[#allocation2 + $0xb0] sm:$0x1]
        %v1335 = vld [vmem:[#allocation2 + $0xbc] sm:$0x1]
        %v1336 = vld [vmem:[%s2] sm:$0xc]
        %vm1337 = vsmask.f32 3328
        %vm1338 = vsmask.f32 7440
        %vm1339 = vmor %vm1337, %vm1338
        %v1341 = vshrl.u32 %v1287, 16
        %v1343 = vrot.slane %v1341, 4
        %v1344 = vshll.u32 %v1287, 16
        %v1346 = vrot.slane %v1344, 5
        %v1347 = vor.u32 %v1343, %v1346
        %v1348 = vrot.slane %v1347, 4
        %v1350 = vshll.u32 %v1288, 16
        %v1352 = vrot.slane %v1350, 5
        %v1353 = vsel %vm1339, %v1348, %v1352
        %v1354 = vshrl.u32 %v1288, 16
        %v1356 = vrot.slane %v1354, 4
        %v1357 = vor.u32 %v1356, %v1352
        %v1358 = vrot.slane %v1357, 4
        %v1360 = vshll.u32 %v1320, 16
        %v1362 = vrot.slane %v1360, 5
        %v1363 = vsel %vm1339, %v1358, %v1362
        %v1365 = vshrl.u32 %v1289, 16
        %v1367 = vrot.slane %v1365, 4
        %v1368 = vshll.u32 %v1289, 16
        %v1370 = vrot.slane %v1368, 5
        %v1371 = vor.u32 %v1367, %v1370
        %v1372 = vrot.slane %v1371, 4
        %v1374 = vshll.u32 %v1290, 16
        %v1376 = vrot.slane %v1374, 5
        %v1377 = vsel %vm1339, %v1372, %v1376
        %v1378 = vshrl.u32 %v1290, 16
        %v1380 = vrot.slane %v1378, 4
        %v1381 = vor.u32 %v1380, %v1376
        %v1382 = vrot.slane %v1381, 4
        %v1384 = vshll.u32 %v1321, 16
        %v1386 = vrot.slane %v1384, 5
        %v1387 = vsel %vm1339, %v1382, %v1386
        %v1389 = vshrl.u32 %v1291, 16
        %v1391 = vrot.slane %v1389, 4
        %v1392 = vshll.u32 %v1291, 16
        %v1394 = vrot.slane %v1392, 5
        %v1395 = vor.u32 %v1391, %v1394
        %v1396 = vrot.slane %v1395, 4
        %v1398 = vshll.u32 %v1292, 16
        %v1400 = vrot.slane %v1398, 5
        %v1401 = vsel %vm1339, %v1396, %v1400
        %v1402 = vshrl.u32 %v1292, 16
        %v1404 = vrot.slane %v1402, 4
        %v1405 = vor.u32 %v1404, %v1400
        %v1406 = vrot.slane %v1405, 4
        %v1408 = vshll.u32 %v1322, 16
        %v1410 = vrot.slane %v1408, 5
        %v1411 = vsel %vm1339, %v1406, %v1410
        %v1413 = vshrl.u32 %v1293, 16
        %v1415 = vrot.slane %v1413, 4
        %v1416 = vshll.u32 %v1293, 16
        %v1418 = vrot.slane %v1416, 5
        %v1419 = vor.u32 %v1415, %v1418
        %v1420 = vrot.slane %v1419, 4
        %v1422 = vshll.u32 %v1294, 16
        %v1424 = vrot.slane %v1422, 5
        %v1425 = vsel %vm1339, %v1420, %v1424
        %v1426 = vshrl.u32 %v1294, 16
        %v1428 = vrot.slane %v1426, 4
        %v1429 = vor.u32 %v1428, %v1424
        %v1430 = vrot.slane %v1429, 4
        %v1432 = vshll.u32 %v1323, 16
        %v1434 = vrot.slane %v1432, 5
        %v1435 = vsel %vm1339, %v1430, %v1434
        %v1437 = vshrl.u32 %v1295, 16
        %v1439 = vrot.slane %v1437, 4
        %v1440 = vshll.u32 %v1295, 16
        %v1442 = vrot.slane %v1440, 5
        %v1443 = vor.u32 %v1439, %v1442
        %v1444 = vrot.slane %v1443, 4
        %v1446 = vshll.u32 %v1296, 16
        %v1448 = vrot.slane %v1446, 5
        %v1449 = vsel %vm1339, %v1444, %v1448
        %v1450 = vshrl.u32 %v1296, 16
        %v1452 = vrot.slane %v1450, 4
        %v1453 = vor.u32 %v1452, %v1448
        %v1454 = vrot.slane %v1453, 4
        %v1456 = vshll.u32 %v1324, 16
        %v1458 = vrot.slane %v1456, 5
        %v1459 = vsel %vm1339, %v1454, %v1458
        %v1461 = vshrl.u32 %v1297, 16
        %v1463 = vrot.slane %v1461, 4
        %v1464 = vshll.u32 %v1297, 16
        %v1466 = vrot.slane %v1464, 5
        %v1467 = vor.u32 %v1463, %v1466
        %v1468 = vrot.slane %v1467, 4
        %v1470 = vshll.u32 %v1298, 16
        %v1472 = vrot.slane %v1470, 5
        %v1473 = vsel %vm1339, %v1468, %v1472
        %v1474 = vshrl.u32 %v1298, 16
        %v1476 = vrot.slane %v1474, 4
        %v1477 = vor.u32 %v1476, %v1472
        %v1478 = vrot.slane %v1477, 4
        %v1480 = vshll.u32 %v1325, 16
        %v1482 = vrot.slane %v1480, 5
        %v1483 = vsel %vm1339, %v1478, %v1482
        %v1485 = vshrl.u32 %v1299, 16
        %v1487 = vrot.slane %v1485, 4
        %v1488 = vshll.u32 %v1299, 16
        %v1490 = vrot.slane %v1488, 5
        %v1491 = vor.u32 %v1487, %v1490
        %v1492 = vrot.slane %v1491, 4
        %v1494 = vshll.u32 %v1300, 16
        %v1496 = vrot.slane %v1494, 5
        %v1497 = vsel %vm1339, %v1492, %v1496
        %v1498 = vshrl.u32 %v1300, 16
        %v1500 = vrot.slane %v1498, 4
        %v1501 = vor.u32 %v1500, %v1496
        %v1502 = vrot.slane %v1501, 4
        %v1504 = vshll.u32 %v1326, 16
        %v1506 = vrot.slane %v1504, 5
        %v1507 = vsel %vm1339, %v1502, %v1506
        %v1509 = vshrl.u32 %v1301, 16
        %v1511 = vrot.slane %v1509, 4
        %v1512 = vshll.u32 %v1301, 16
        %v1514 = vrot.slane %v1512, 5
        %v1515 = vor.u32 %v1511, %v1514
        %v1516 = vrot.slane %v1515, 4
        %v1518 = vshll.u32 %v1302, 16
        %v1520 = vrot.slane %v1518, 5
        %v1521 = vsel %vm1339, %v1516, %v1520
        %v1522 = vshrl.u32 %v1302, 16
        %v1524 = vrot.slane %v1522, 4
        %v1525 = vor.u32 %v1524, %v1520
        %v1526 = vrot.slane %v1525, 4
        %v1528 = vshll.u32 %v1327, 16
        %v1530 = vrot.slane %v1528, 5
        %v1531 = vsel %vm1339, %v1526, %v1530
        %v1533 = vshrl.u32 %v1303, 16
        %v1535 = vrot.slane %v1533, 4
        %v1536 = vshll.u32 %v1303, 16
        %v1538 = vrot.slane %v1536, 5
        %v1539 = vor.u32 %v1535, %v1538
        %v1540 = vrot.slane %v1539, 4
        %v1542 = vshll.u32 %v1304, 16
        %v1544 = vrot.slane %v1542, 5
        %v1545 = vsel %vm1339, %v1540, %v1544
        %v1546 = vshrl.u32 %v1304, 16
        %v1548 = vrot.slane %v1546, 4
        %v1549 = vor.u32 %v1548, %v1544
        %v1550 = vrot.slane %v1549, 4
        %v1552 = vshll.u32 %v1328, 16
        %v1554 = vrot.slane %v1552, 5
        %v1555 = vsel %vm1339, %v1550, %v1554
        %v1557 = vshrl.u32 %v1305, 16
        %v1559 = vrot.slane %v1557, 4
        %v1560 = vshll.u32 %v1305, 16
        %v1562 = vrot.slane %v1560, 5
        %v1563 = vor.u32 %v1559, %v1562
        %v1564 = vrot.slane %v1563, 4
        %v1566 = vshll.u32 %v1306, 16
        %v1568 = vrot.slane %v1566, 5
        %v1569 = vsel %vm1339, %v1564, %v1568
        %v1570 = vshrl.u32 %v1306, 16
        %v1572 = vrot.slane %v1570, 4
        %v1573 = vor.u32 %v1572, %v1568
        %v1574 = vrot.slane %v1573, 4
        %v1576 = vshll.u32 %v1329, 16
        %v1578 = vrot.slane %v1576, 5
        %v1579 = vsel %vm1339, %v1574, %v1578
        %v1581 = vshrl.u32 %v1307, 16
        %v1583 = vrot.slane %v1581, 4
        %v1584 = vshll.u32 %v1307, 16
        %v1586 = vrot.slane %v1584, 5
        %v1587 = vor.u32 %v1583, %v1586
        %v1588 = vrot.slane %v1587, 4
        %v1590 = vshll.u32 %v1308, 16
        %v1592 = vrot.slane %v1590, 5
        %v1593 = vsel %vm1339, %v1588, %v1592
        %v1594 = vshrl.u32 %v1308, 16
        %v1596 = vrot.slane %v1594, 4
        %v1597 = vor.u32 %v1596, %v1592
        %v1598 = vrot.slane %v1597, 4
        %v1600 = vshll.u32 %v1330, 16
        %v1602 = vrot.slane %v1600, 5
        %v1603 = vsel %vm1339, %v1598, %v1602
        %v1605 = vshrl.u32 %v1309, 16
        %v1607 = vrot.slane %v1605, 4
        %v1608 = vshll.u32 %v1309, 16
        %v1610 = vrot.slane %v1608, 5
        %v1611 = vor.u32 %v1607, %v1610
        %v1612 = vrot.slane %v1611, 4
        %v1614 = vshll.u32 %v1310, 16
        %v1616 = vrot.slane %v1614, 5
        %v1617 = vsel %vm1339, %v1612, %v1616
        %v1618 = vshrl.u32 %v1310, 16
        %v1620 = vrot.slane %v1618, 4
        %v1621 = vor.u32 %v1620, %v1616
        %v1622 = vrot.slane %v1621, 4
        %v1624 = vshll.u32 %v1331, 16
        %v1626 = vrot.slane %v1624, 5
        %v1627 = vsel %vm1339, %v1622, %v1626
        %v1629 = vshrl.u32 %v1311, 16
        %v1631 = vrot.slane %v1629, 4
        %v1632 = vshll.u32 %v1311, 16
        %v1634 = vrot.slane %v1632, 5
        %v1635 = vor.u32 %v1631, %v1634
        %v1636 = vrot.slane %v1635, 4
        %v1638 = vshll.u32 %v1312, 16
        %v1640 = vrot.slane %v1638, 5
        %v1641 = vsel %vm1339, %v1636, %v1640
        %v1642 = vshrl.u32 %v1312, 16
        %v1644 = vrot.slane %v1642, 4
        %v1645 = vor.u32 %v1644, %v1640
        %v1646 = vrot.slane %v1645, 4
        %v1648 = vshll.u32 %v1332, 16
        %v1650 = vrot.slane %v1648, 5
        %v1651 = vsel %vm1339, %v1646, %v1650
        %v1653 = vshrl.u32 %v1313, 16
        %v1655 = vrot.slane %v1653, 4
        %v1656 = vshll.u32 %v1313, 16
        %v1658 = vrot.slane %v1656, 5
        %v1659 = vor.u32 %v1655, %v1658
        %v1660 = vrot.slane %v1659, 4
        %v1662 = vshll.u32 %v1314, 16
        %v1664 = vrot.slane %v1662, 5
        %v1665 = vsel %vm1339, %v1660, %v1664
        %v1666 = vshrl.u32 %v1314, 16
        %v1668 = vrot.slane %v1666, 4
        %v1669 = vor.u32 %v1668, %v1664
        %v1670 = vrot.slane %v1669, 4
        %v1672 = vshll.u32 %v1333, 16
        %v1674 = vrot.slane %v1672, 5
        %v1675 = vsel %vm1339, %v1670, %v1674
        %v1677 = vshrl.u32 %v1315, 16
        %v1679 = vrot.slane %v1677, 4
        %v1680 = vshll.u32 %v1315, 16
        %v1682 = vrot.slane %v1680, 5
        %v1683 = vor.u32 %v1679, %v1682
        %v1684 = vrot.slane %v1683, 4
        %v1686 = vshll.u32 %v1316, 16
        %v1688 = vrot.slane %v1686, 5
        %v1689 = vsel %vm1339, %v1684, %v1688
        %v1690 = vshrl.u32 %v1316, 16
        %v1692 = vrot.slane %v1690, 4
        %v1693 = vor.u32 %v1692, %v1688
        %v1694 = vrot.slane %v1693, 4
        %v1696 = vshll.u32 %v1334, 16
        %v1698 = vrot.slane %v1696, 5
        %v1699 = vsel %vm1339, %v1694, %v1698
        %v1701 = vshrl.u32 %v1317, 16
        %v1703 = vrot.slane %v1701, 4
        %v1704 = vshll.u32 %v1317, 16
        %v1706 = vrot.slane %v1704, 5
        %v1707 = vor.u32 %v1703, %v1706
        %v1708 = vrot.slane %v1707, 4
        %v1710 = vshll.u32 %v1318, 16
        %v1712 = vrot.slane %v1710, 5
        %v1713 = vsel %vm1339, %v1708, %v1712
        %v1714 = vshrl.u32 %v1318, 16
        %v1716 = vrot.slane %v1714, 4
        %v1717 = vor.u32 %v1716, %v1712
        %v1718 = vrot.slane %v1717, 4
        %v1720 = vshll.u32 %v1335, 16
        %v1722 = vrot.slane %v1720, 5
        %v1723 = vsel %vm1339, %v1718, %v1722
        %v1724 = vunpack.c.l.b16 %v1353
        %v1725 = vunpack.c.l.b16 %v1363
        %v1726 = vunpack.c.l.b16 %v1377
        %v1727 = vunpack.c.l.b16 %v1387
        %v1728 = vunpack.c.l.b16 %v1401
        %v1729 = vunpack.c.l.b16 %v1411
        %v1730 = vunpack.c.l.b16 %v1425
        %v1731 = vunpack.c.l.b16 %v1435
        %v1732 = vunpack.c.l.b16 %v1449
        %v1733 = vunpack.c.l.b16 %v1459
        %v1734 = vunpack.c.l.b16 %v1473
        %v1735 = vunpack.c.l.b16 %v1483
        %v1736 = vunpack.c.l.b16 %v1497
        %v1737 = vunpack.c.l.b16 %v1507
        %v1738 = vunpack.c.l.b16 %v1521
        %v1739 = vunpack.c.l.b16 %v1531
        %v1740 = vunpack.c.l.b16 %v1545
        %v1741 = vunpack.c.l.b16 %v1555
        %v1742 = vunpack.c.l.b16 %v1569
        %v1743 = vunpack.c.l.b16 %v1579
        %v1744 = vunpack.c.l.b16 %v1593
        %v1745 = vunpack.c.l.b16 %v1603
        %v1746 = vunpack.c.l.b16 %v1617
        %v1747 = vunpack.c.l.b16 %v1627
        %v1748 = vunpack.c.l.b16 %v1641
        %v1749 = vunpack.c.l.b16 %v1651
        %v1750 = vunpack.c.l.b16 %v1665
        %v1751 = vunpack.c.l.b16 %v1675
        %v1752 = vunpack.c.l.b16 %v1689
        %v1753 = vunpack.c.l.b16 %v1699
        %v1754 = vunpack.c.l.b16 %v1713
        %v1755 = vunpack.c.l.b16 %v1723
        %v1756 = vpack.c.b16 %v1725, %v1724
        %v1757 = vpack.c.b16 %v1727, %v1726
        %v1758 = vpack.c.b16 %v1729, %v1728
        %v1759 = vpack.c.b16 %v1731, %v1730
        %v1760 = vpack.c.b16 %v1733, %v1732
        %v1761 = vpack.c.b16 %v1735, %v1734
        %v1762 = vpack.c.b16 %v1737, %v1736
        %v1763 = vpack.c.b16 %v1739, %v1738
        %v1764 = vpack.c.b16 %v1741, %v1740
        %v1765 = vpack.c.b16 %v1743, %v1742
        %v1766 = vpack.c.b16 %v1745, %v1744
        %v1767 = vpack.c.b16 %v1747, %v1746
        %v1768 = vpack.c.b16 %v1749, %v1748
        %v1769 = vpack.c.b16 %v1751, %v1750
        %v1770 = vpack.c.b16 %v1753, %v1752
        %v1771 = vpack.c.b16 %v1755, %v1754
        %v1773 = vunpack.c.l.b16 %v1336
        %v1774 = vpack.c.b16 %v1773, %v1773
        %v1775 = vrot.slane %v1774, 2
        %vm1776 = vcmask 31744
        %v1778 = vsel %vm1776, %v1756, 0
        %v1781 = vsel %vm1776, %v1757, 0
        %v1784 = vsel %vm1776, %v1758, 0
        %v1787 = vsel %vm1776, %v1759, 0
        %v1790 = vsel %vm1776, %v1760, 0
        %v1793 = vsel %vm1776, %v1761, 0
        %v1796 = vsel %vm1776, %v1762, 0
        %v1799 = vsel %vm1776, %v1763, 0
        %v1802 = vsel %vm1776, %v1764, 0
        %v1805 = vsel %vm1776, %v1765, 0
        %v1808 = vsel %vm1776, %v1766, 0
        %v1811 = vsel %vm1776, %v1767, 0
        %v1814 = vsel %vm1776, %v1768, 0
        %v1817 = vsel %vm1776, %v1769, 0
        %v1820 = vsel %vm1776, %v1770, 0
        %v1823 = vsel %vm1776, %v1771, 0
        %vm1825 = vcmask 1041408
        %v1827 = vsel %vm1825, %v1775, 0
        %1829 = vmatprep.subr.bf16.mxu0 0
        %1830 = vmatpush1.bf16.msra.mxu0 0
        %1831 = vmatprep.subr.bf16.mxu0 0
        %1832 = vmatpush1.bf16.msra.mxu0 0
        %1833 = vmatprep.subr.bf16.mxu0 0
        %1834 = vmatpush1.bf16.msra.mxu0 0
        %1835 = vmatprep.subr.bf16.mxu0 0
        %1836 = vmatpush1.bf16.msra.mxu0 0
        %1837 = vmatprep.subr.bf16.mxu0 0
        %1838 = vmatpush1.bf16.msra.mxu0 0
        %1839 = vmatprep.subr.bf16.mxu0 0
        %1840 = vmatpush1.bf16.msra.mxu0 0
        %1841 = vmatprep.subr.bf16.mxu0 0
        %1842 = vmatpush1.bf16.msra.mxu0 0
        %1843 = vmatprep.subr.bf16.mxu0 0
        %1844 = vmatpush1.bf16.msra.mxu0 %v1827
        %1845 = vmatprep.subr.bf16.mxu0 0
        %1846 = vmatpush2.bf16.msra.mxu0 0
        %1847 = vmatprep.subr.bf16.mxu0 0
        %1848 = vmatpush2.bf16.msra.mxu0 0
        %1849 = vmatprep.subr.bf16.mxu0 0
        %1850 = vmatpush2.bf16.msra.mxu0 0
        %1851 = vmatprep.subr.bf16.mxu0 0
        %1852 = vmatpush2.bf16.msra.mxu0 0
        %1853 = vmatprep.subr.bf16.mxu0 0
        %1854 = vmatpush2.bf16.msra.mxu0 0
        %1855 = vmatprep.subr.bf16.mxu0 0
        %1856 = vmatpush2.bf16.msra.mxu0 0
        %1857 = vmatprep.subr.bf16.mxu0 0
        %1858 = vmatpush2.bf16.msra.mxu0 0
        %1859 = vmatprep.subr.bf16.mxu0 0
        %1860 = vmatpush2.bf16.msra.mxu0 0
        %1861 = vmatprep.mubr.bf16.mxu0 0
        %1862 = vmatmul.mubr.bf16.gmra.mxu0 %v1778
        %v1863 = vpop.f32.mrf.mxu0
        %v1864 = vadd.f32 0.0, %v1863
        %v1865 = vpop.f32.mrf.mxu0
        %v1866 = vpop.f32.mrf.mxu0
        %v1867 = vadd.f32 0.0, %v1866
        %v1868 = vpop.f32.mrf.mxu0
        %1869 = vmatprep.mubr.bf16.mxu0 0
        %1870 = vmatmul.mubr.bf16.gmra.mxu0 %v1781
        %v1871 = vpop.f32.mrf.mxu0
        %v1872 = vadd.f32 0.0, %v1871
        %v1873 = vpop.f32.mrf.mxu0
        %v1874 = vpop.f32.mrf.mxu0
        %v1875 = vadd.f32 0.0, %v1874
        %v1876 = vpop.f32.mrf.mxu0
        %1877 = vmatprep.mubr.bf16.mxu0 0
        %1878 = vmatmul.mubr.bf16.gmra.mxu0 %v1784
        %v1879 = vpop.f32.mrf.mxu0
        %v1880 = vadd.f32 0.0, %v1879
        %v1881 = vpop.f32.mrf.mxu0
        %v1882 = vpop.f32.mrf.mxu0
        %v1883 = vadd.f32 0.0, %v1882
        %v1884 = vpop.f32.mrf.mxu0
        %1885 = vmatprep.mubr.bf16.mxu0 0
        %1886 = vmatmul.mubr.bf16.gmra.mxu0 %v1787
        %v1887 = vpop.f32.mrf.mxu0
        %v1888 = vadd.f32 0.0, %v1887
        %v1889 = vpop.f32.mrf.mxu0
        %v1890 = vpop.f32.mrf.mxu0
        %v1891 = vadd.f32 0.0, %v1890
        %v1892 = vpop.f32.mrf.mxu0
        %1893 = vmatprep.mubr.bf16.mxu0 0
        %1894 = vmatmul.mubr.bf16.gmra.mxu0 %v1790
        %v1895 = vpop.f32.mrf.mxu0
        %v1896 = vadd.f32 0.0, %v1895
        %v1897 = vpop.f32.mrf.mxu0
        %v1898 = vpop.f32.mrf.mxu0
        %v1899 = vadd.f32 0.0, %v1898
        %v1900 = vpop.f32.mrf.mxu0
        %1901 = vmatprep.mubr.bf16.mxu0 0
        %1902 = vmatmul.mubr.bf16.gmra.mxu0 %v1793
        %v1903 = vpop.f32.mrf.mxu0
        %v1904 = vadd.f32 0.0, %v1903
        %v1905 = vpop.f32.mrf.mxu0
        %v1906 = vpop.f32.mrf.mxu0
        %v1907 = vadd.f32 0.0, %v1906
        %v1908 = vpop.f32.mrf.mxu0
        %1909 = vmatprep.mubr.bf16.mxu0 0
        %1910 = vmatmul.mubr.bf16.gmra.mxu0 %v1796
        %v1911 = vpop.f32.mrf.mxu0
        %v1912 = vadd.f32 0.0, %v1911
        %v1913 = vpop.f32.mrf.mxu0
        %v1914 = vpop.f32.mrf.mxu0
        %v1915 = vadd.f32 0.0, %v1914
        %v1916 = vpop.f32.mrf.mxu0
        %1917 = vmatprep.mubr.bf16.mxu0 0
        %1918 = vmatmul.mubr.bf16.gmra.mxu0 %v1799
        %v1919 = vpop.f32.mrf.mxu0
        %v1920 = vadd.f32 0.0, %v1919
        %v1921 = vpop.f32.mrf.mxu0
        %v1922 = vpop.f32.mrf.mxu0
        %v1923 = vadd.f32 0.0, %v1922
        %v1924 = vpop.f32.mrf.mxu0
        %1925 = vmatprep.mubr.bf16.mxu0 0
        %1926 = vmatmul.mubr.bf16.gmra.mxu0 %v1802
        %v1927 = vpop.f32.mrf.mxu0
        %v1928 = vadd.f32 0.0, %v1927
        %v1929 = vpop.f32.mrf.mxu0
        %v1930 = vpop.f32.mrf.mxu0
        %v1931 = vadd.f32 0.0, %v1930
        %v1932 = vpop.f32.mrf.mxu0
        %1933 = vmatprep.mubr.bf16.mxu0 0
        %1934 = vmatmul.mubr.bf16.gmra.mxu0 %v1805
        %v1935 = vpop.f32.mrf.mxu0
        %v1936 = vadd.f32 0.0, %v1935
        %v1937 = vpop.f32.mrf.mxu0
        %v1938 = vpop.f32.mrf.mxu0
        %v1939 = vadd.f32 0.0, %v1938
        %v1940 = vpop.f32.mrf.mxu0
        %1941 = vmatprep.mubr.bf16.mxu0 0
        %1942 = vmatmul.mubr.bf16.gmra.mxu0 %v1808
        %v1943 = vpop.f32.mrf.mxu0
        %v1944 = vadd.f32 0.0, %v1943
        %v1945 = vpop.f32.mrf.mxu0
        %v1946 = vpop.f32.mrf.mxu0
        %v1947 = vadd.f32 0.0, %v1946
        %v1948 = vpop.f32.mrf.mxu0
        %1949 = vmatprep.mubr.bf16.mxu0 0
        %1950 = vmatmul.mubr.bf16.gmra.mxu0 %v1811
        %v1951 = vpop.f32.mrf.mxu0
        %v1952 = vadd.f32 0.0, %v1951
        %v1953 = vpop.f32.mrf.mxu0
        %v1954 = vpop.f32.mrf.mxu0
        %v1955 = vadd.f32 0.0, %v1954
        %v1956 = vpop.f32.mrf.mxu0
        %1957 = vmatprep.mubr.bf16.mxu0 0
        %1958 = vmatmul.mubr.bf16.gmra.mxu0 %v1814
        %v1959 = vpop.f32.mrf.mxu0
        %v1960 = vadd.f32 0.0, %v1959
        %v1961 = vpop.f32.mrf.mxu0
        %v1962 = vpop.f32.mrf.mxu0
        %v1963 = vadd.f32 0.0, %v1962
        %v1964 = vpop.f32.mrf.mxu0
        %1965 = vmatprep.mubr.bf16.mxu0 0
        %1966 = vmatmul.mubr.bf16.gmra.mxu0 %v1817
        %v1967 = vpop.f32.mrf.mxu0
        %v1968 = vadd.f32 0.0, %v1967
        %v1969 = vpop.f32.mrf.mxu0
        %v1970 = vpop.f32.mrf.mxu0
        %v1971 = vadd.f32 0.0, %v1970
        %v1972 = vpop.f32.mrf.mxu0
        %1973 = vmatprep.mubr.bf16.mxu0 0
        %1974 = vmatmul.mubr.bf16.gmra.mxu0 %v1820
        %v1975 = vpop.f32.mrf.mxu0
        %v1976 = vadd.f32 0.0, %v1975
        %v1977 = vpop.f32.mrf.mxu0
        %v1978 = vpop.f32.mrf.mxu0
        %v1979 = vadd.f32 0.0, %v1978
        %v1980 = vpop.f32.mrf.mxu0
        %1981 = vmatprep.mubr.bf16.mxu0 0
        %1982 = vmatmul.mubr.bf16.gmra.mxu0 %v1823
        %v1983 = vpop.f32.mrf.mxu0
        %v1984 = vadd.f32 0.0, %v1983
        %v1985 = vpop.f32.mrf.mxu0
        %v1986 = vpop.f32.mrf.mxu0
        %v1987 = vadd.f32 0.0, %v1986
        %v1988 = vpop.f32.mrf.mxu0
        %1989 = vdwg.mxu0
        %v2022 = vunpack.c.l.b16 %v1287
        %v2023 = vunpack.c.l.b16 %v1288
        %v2024 = vunpack.c.l.b16 %v1289
        %v2025 = vunpack.c.l.b16 %v1290
        %v2026 = vunpack.c.l.b16 %v1291
        %v2027 = vunpack.c.l.b16 %v1292
        %v2028 = vunpack.c.l.b16 %v1293
        %v2029 = vunpack.c.l.b16 %v1294
        %v2030 = vunpack.c.l.b16 %v1295
        %v2031 = vunpack.c.l.b16 %v1296
        %v2032 = vunpack.c.l.b16 %v1297
        %v2033 = vunpack.c.l.b16 %v1298
        %v2034 = vunpack.c.l.b16 %v1299
        %v2035 = vunpack.c.l.b16 %v1300
        %v2036 = vunpack.c.l.b16 %v1301
        %v2037 = vunpack.c.l.b16 %v1302
        %v2038 = vunpack.c.l.b16 %v1303
        %v2039 = vunpack.c.l.b16 %v1304
        %v2040 = vunpack.c.l.b16 %v1305
        %v2041 = vunpack.c.l.b16 %v1306
        %v2042 = vunpack.c.l.b16 %v1307
        %v2043 = vunpack.c.l.b16 %v1308
        %v2044 = vunpack.c.l.b16 %v1309
        %v2045 = vunpack.c.l.b16 %v1310
        %v2046 = vunpack.c.l.b16 %v1311
        %v2047 = vunpack.c.l.b16 %v1312
        %v2048 = vunpack.c.l.b16 %v1313
        %v2049 = vunpack.c.l.b16 %v1314
        %v2050 = vunpack.c.l.b16 %v1315
        %v2051 = vunpack.c.l.b16 %v1316
        %v2052 = vunpack.c.l.b16 %v1317
        %v2053 = vunpack.c.l.b16 %v1318
        %v2054 = vpack.c.b16 %v2023, %v2022
        %v2055 = vpack.c.b16 %v2025, %v2024
        %v2056 = vpack.c.b16 %v2027, %v2026
        %v2057 = vpack.c.b16 %v2029, %v2028
        %v2058 = vpack.c.b16 %v2031, %v2030
        %v2059 = vpack.c.b16 %v2033, %v2032
        %v2060 = vpack.c.b16 %v2035, %v2034
        %v2061 = vpack.c.b16 %v2037, %v2036
        %v2062 = vpack.c.b16 %v2039, %v2038
        %v2063 = vpack.c.b16 %v2041, %v2040
        %v2064 = vpack.c.b16 %v2043, %v2042
        %v2065 = vpack.c.b16 %v2045, %v2044
        %v2066 = vpack.c.b16 %v2047, %v2046
        %v2067 = vpack.c.b16 %v2049, %v2048
        %v2068 = vpack.c.b16 %v2051, %v2050
        %v2069 = vpack.c.b16 %v2053, %v2052
        %v2071 = vsel %vm1776, %v2054, 0
        %v2074 = vsel %vm1776, %v2055, 0
        %v2077 = vsel %vm1776, %v2056, 0
        %v2080 = vsel %vm1776, %v2057, 0
        %v2083 = vsel %vm1776, %v2058, 0
        %v2086 = vsel %vm1776, %v2059, 0
        %v2089 = vsel %vm1776, %v2060, 0
        %v2092 = vsel %vm1776, %v2061, 0
        %v2095 = vsel %vm1776, %v2062, 0
        %v2098 = vsel %vm1776, %v2063, 0
        %v2101 = vsel %vm1776, %v2064, 0
        %v2104 = vsel %vm1776, %v2065, 0
        %v2107 = vsel %vm1776, %v2066, 0
        %v2110 = vsel %vm1776, %v2067, 0
        %v2113 = vsel %vm1776, %v2068, 0
        %v2116 = vsel %vm1776, %v2069, 0
        %v2119 = vsel %vm1825, %v1319, 0
        %2121 = vmatprep.subr.bf16.mxu0 0
        %2122 = vmatpush1.bf16.msra.mxu0 0
        %2123 = vmatprep.subr.bf16.mxu0 0
        %2124 = vmatpush1.bf16.msra.mxu0 0
        %2125 = vmatprep.subr.bf16.mxu0 0
        %2126 = vmatpush1.bf16.msra.mxu0 0
        %2127 = vmatprep.subr.bf16.mxu0 0
        %2128 = vmatpush1.bf16.msra.mxu0 0
        %2129 = vmatprep.subr.bf16.mxu0 0
        %2130 = vmatpush1.bf16.msra.mxu0 0
        %2131 = vmatprep.subr.bf16.mxu0 0
        %2132 = vmatpush1.bf16.msra.mxu0 0
        %2133 = vmatprep.subr.bf16.mxu0 0
        %2134 = vmatpush1.bf16.msra.mxu0 0
        %2135 = vmatprep.subr.bf16.mxu0 0
        %2136 = vmatpush1.bf16.msra.mxu0 %v2119
        %2137 = vmatprep.subr.bf16.mxu0 0
        %2138 = vmatpush2.bf16.msra.mxu0 0
        %2139 = vmatprep.subr.bf16.mxu0 0
        %2140 = vmatpush2.bf16.msra.mxu0 0
        %2141 = vmatprep.subr.bf16.mxu0 0
        %2142 = vmatpush2.bf16.msra.mxu0 0
        %2143 = vmatprep.subr.bf16.mxu0 0
        %2144 = vmatpush2.bf16.msra.mxu0 0
        %2145 = vmatprep.subr.bf16.mxu0 0
        %2146 = vmatpush2.bf16.msra.mxu0 0
        %2147 = vmatprep.subr.bf16.mxu0 0
        %2148 = vmatpush2.bf16.msra.mxu0 0
        %2149 = vmatprep.subr.bf16.mxu0 0
        %2150 = vmatpush2.bf16.msra.mxu0 0
        %2151 = vmatprep.subr.bf16.mxu0 0
        %2152 = vmatpush2.bf16.msra.mxu0 0
        %2153 = vmatprep.mubr.bf16.mxu0 0
        %2154 = vmatmul.mubr.bf16.gmra.mxu0 %v2071
        %v2155 = vpop.f32.mrf.mxu0
        %v2156 = vadd.f32 %v1864, %v2155
        %v2157 = vpop.f32.mrf.mxu0
        %v2158 = vpop.f32.mrf.mxu0
        %v2159 = vadd.f32 %v1867, %v2158
        %v2160 = vpop.f32.mrf.mxu0
        %2161 = vmatprep.mubr.bf16.mxu0 0
        %2162 = vmatmul.mubr.bf16.gmra.mxu0 %v2074
        %v2163 = vpop.f32.mrf.mxu0
        %v2164 = vadd.f32 %v1872, %v2163
        %v2165 = vpop.f32.mrf.mxu0
        %v2166 = vpop.f32.mrf.mxu0
        %v2167 = vadd.f32 %v1875, %v2166
        %v2168 = vpop.f32.mrf.mxu0
        %2169 = vmatprep.mubr.bf16.mxu0 0
        %2170 = vmatmul.mubr.bf16.gmra.mxu0 %v2077
        %v2171 = vpop.f32.mrf.mxu0
        %v2172 = vadd.f32 %v1880, %v2171
        %v2173 = vpop.f32.mrf.mxu0
        %v2174 = vpop.f32.mrf.mxu0
        %v2175 = vadd.f32 %v1883, %v2174
        %v2176 = vpop.f32.mrf.mxu0
        %2177 = vmatprep.mubr.bf16.mxu0 0
        %2178 = vmatmul.mubr.bf16.gmra.mxu0 %v2080
        %v2179 = vpop.f32.mrf.mxu0
        %v2180 = vadd.f32 %v1888, %v2179
        %v2181 = vpop.f32.mrf.mxu0
        %v2182 = vpop.f32.mrf.mxu0
        %v2183 = vadd.f32 %v1891, %v2182
        %v2184 = vpop.f32.mrf.mxu0
        %2185 = vmatprep.mubr.bf16.mxu0 0
        %2186 = vmatmul.mubr.bf16.gmra.mxu0 %v2083
        %v2187 = vpop.f32.mrf.mxu0
        %v2188 = vadd.f32 %v1896, %v2187
        %v2189 = vpop.f32.mrf.mxu0
        %v2190 = vpop.f32.mrf.mxu0
        %v2191 = vadd.f32 %v1899, %v2190
        %v2192 = vpop.f32.mrf.mxu0
        %2193 = vmatprep.mubr.bf16.mxu0 0
        %2194 = vmatmul.mubr.bf16.gmra.mxu0 %v2086
        %v2195 = vpop.f32.mrf.mxu0
        %v2196 = vadd.f32 %v1904, %v2195
        %v2197 = vpop.f32.mrf.mxu0
        %v2198 = vpop.f32.mrf.mxu0
        %v2199 = vadd.f32 %v1907, %v2198
        %v2200 = vpop.f32.mrf.mxu0
        %2201 = vmatprep.mubr.bf16.mxu0 0
        %2202 = vmatmul.mubr.bf16.gmra.mxu0 %v2089
        %v2203 = vpop.f32.mrf.mxu0
        %v2204 = vadd.f32 %v1912, %v2203
        %v2205 = vpop.f32.mrf.mxu0
        %v2206 = vpop.f32.mrf.mxu0
        %v2207 = vadd.f32 %v1915, %v2206
        %v2208 = vpop.f32.mrf.mxu0
        %2209 = vmatprep.mubr.bf16.mxu0 0
        %2210 = vmatmul.mubr.bf16.gmra.mxu0 %v2092
        %v2211 = vpop.f32.mrf.mxu0
        %v2212 = vadd.f32 %v1920, %v2211
        %v2213 = vpop.f32.mrf.mxu0
        %v2214 = vpop.f32.mrf.mxu0
        %v2215 = vadd.f32 %v1923, %v2214
        %v2216 = vpop.f32.mrf.mxu0
        %2217 = vmatprep.mubr.bf16.mxu0 0
        %2218 = vmatmul.mubr.bf16.gmra.mxu0 %v2095
        %v2219 = vpop.f32.mrf.mxu0
        %v2220 = vadd.f32 %v1928, %v2219
        %v2221 = vpop.f32.mrf.mxu0
        %v2222 = vpop.f32.mrf.mxu0
        %v2223 = vadd.f32 %v1931, %v2222
        %v2224 = vpop.f32.mrf.mxu0
        %2225 = vmatprep.mubr.bf16.mxu0 0
        %2226 = vmatmul.mubr.bf16.gmra.mxu0 %v2098
        %v2227 = vpop.f32.mrf.mxu0
        %v2228 = vadd.f32 %v1936, %v2227
        %v2229 = vpop.f32.mrf.mxu0
        %v2230 = vpop.f32.mrf.mxu0
        %v2231 = vadd.f32 %v1939, %v2230
        %v2232 = vpop.f32.mrf.mxu0
        %2233 = vmatprep.mubr.bf16.mxu0 0
        %2234 = vmatmul.mubr.bf16.gmra.mxu0 %v2101
        %v2235 = vpop.f32.mrf.mxu0
        %v2236 = vadd.f32 %v1944, %v2235
        %v2237 = vpop.f32.mrf.mxu0
        %v2238 = vpop.f32.mrf.mxu0
        %v2239 = vadd.f32 %v1947, %v2238
        %v2240 = vpop.f32.mrf.mxu0
        %2241 = vmatprep.mubr.bf16.mxu0 0
        %2242 = vmatmul.mubr.bf16.gmra.mxu0 %v2104
        %v2243 = vpop.f32.mrf.mxu0
        %v2244 = vadd.f32 %v1952, %v2243
        %v2245 = vpop.f32.mrf.mxu0
        %v2246 = vpop.f32.mrf.mxu0
        %v2247 = vadd.f32 %v1955, %v2246
        %v2248 = vpop.f32.mrf.mxu0
        %2249 = vmatprep.mubr.bf16.mxu0 0
        %2250 = vmatmul.mubr.bf16.gmra.mxu0 %v2107
        %v2251 = vpop.f32.mrf.mxu0
        %v2252 = vadd.f32 %v1960, %v2251
        %v2253 = vpop.f32.mrf.mxu0
        %v2254 = vpop.f32.mrf.mxu0
        %v2255 = vadd.f32 %v1963, %v2254
        %v2256 = vpop.f32.mrf.mxu0
        %2257 = vmatprep.mubr.bf16.mxu0 0
        %2258 = vmatmul.mubr.bf16.gmra.mxu0 %v2110
        %v2259 = vpop.f32.mrf.mxu0
        %v2260 = vadd.f32 %v1968, %v2259
        %v2261 = vpop.f32.mrf.mxu0
        %v2262 = vpop.f32.mrf.mxu0
        %v2263 = vadd.f32 %v1971, %v2262
        %v2264 = vpop.f32.mrf.mxu0
        %2265 = vmatprep.mubr.bf16.mxu0 0
        %2266 = vmatmul.mubr.bf16.gmra.mxu0 %v2113
        %v2267 = vpop.f32.mrf.mxu0
        %v2268 = vadd.f32 %v1976, %v2267
        %v2269 = vpop.f32.mrf.mxu0
        %v2270 = vpop.f32.mrf.mxu0
        %v2271 = vadd.f32 %v1979, %v2270
        %v2272 = vpop.f32.mrf.mxu0
        %2273 = vmatprep.mubr.bf16.mxu0 0
        %2274 = vmatmul.mubr.bf16.gmra.mxu0 %v2116
        %v2275 = vpop.f32.mrf.mxu0
        %v2276 = vadd.f32 %v1984, %v2275
        %v2277 = vpop.f32.mrf.mxu0
        %v2278 = vpop.f32.mrf.mxu0
        %v2279 = vadd.f32 %v1987, %v2278
        %v2280 = vpop.f32.mrf.mxu0
        %2281 = vdwg.mxu0
        %v2282 = vld [vmem:[#allocation2] sm:$0xe]
        %v2283 = vld [vmem:[#allocation2 + $0xc] sm:$0xe]
        %v2284 = vld [vmem:[#allocation2 + $0x18] sm:$0xe]
        %v2285 = vld [vmem:[#allocation2 + $0x24] sm:$0xe]
        %v2286 = vld [vmem:[#allocation2 + $0x30] sm:$0xe]
        %v2287 = vld [vmem:[#allocation2 + $0x3c] sm:$0xe]
        %v2288 = vld [vmem:[#allocation2 + $0x48] sm:$0xe]
        %v2289 = vld [vmem:[#allocation2 + $0x54] sm:$0xe]
        %v2290 = vld [vmem:[#allocation2 + $0x60] sm:$0xe]
        %v2291 = vld [vmem:[#allocation2 + $0x6c] sm:$0xe]
        %v2292 = vld [vmem:[#allocation2 + $0x78] sm:$0xe]
        %v2293 = vld [vmem:[#allocation2 + $0x84] sm:$0xe]
        %v2294 = vld [vmem:[#allocation2 + $0x90] sm:$0xe]
        %v2295 = vld [vmem:[#allocation2 + $0x9c] sm:$0xe]
        %v2296 = vld [vmem:[#allocation2 + $0xa8] sm:$0xe]
        %v2297 = vld [vmem:[#allocation2 + $0xb4] sm:$0xe]
        %v2298 = vld [vmem:[%s2 + $0x4] sm:$0x3]
        %vm2331 = vcmask 1042432
        %vm2332 = vcmask 1046532
        %vm2333 = vmor %vm2331, %vm2332
        %v2334 = vrot.slane %v2282, 5
        %v2335 = vrot.slane %v2334, 4
        %v2336 = vrot.slane %v1288, 5
        %v2337 = vsel %vm2333, %v2335, %v2336
        %v2338 = vrot.slane %v2336, 4
        %v2339 = vrot.slane %v1320, 5
        %v2340 = vsel %vm2333, %v2338, %v2339
        %v2341 = vrot.slane %v2283, 5
        %v2342 = vrot.slane %v2341, 4
        %v2343 = vrot.slane %v1290, 5
        %v2344 = vsel %vm2333, %v2342, %v2343
        %v2345 = vrot.slane %v2343, 4
        %v2346 = vrot.slane %v1321, 5
        %v2347 = vsel %vm2333, %v2345, %v2346
        %v2348 = vrot.slane %v2284, 5
        %v2349 = vrot.slane %v2348, 4
        %v2350 = vrot.slane %v1292, 5
        %v2351 = vsel %vm2333, %v2349, %v2350
        %v2352 = vrot.slane %v2350, 4
        %v2353 = vrot.slane %v1322, 5
        %v2354 = vsel %vm2333, %v2352, %v2353
        %v2355 = vrot.slane %v2285, 5
        %v2356 = vrot.slane %v2355, 4
        %v2357 = vrot.slane %v1294, 5
        %v2358 = vsel %vm2333, %v2356, %v2357
        %v2359 = vrot.slane %v2357, 4
        %v2360 = vrot.slane %v1323, 5
        %v2361 = vsel %vm2333, %v2359, %v2360
        %v2362 = vrot.slane %v2286, 5
        %v2363 = vrot.slane %v2362, 4
        %v2364 = vrot.slane %v1296, 5
        %v2365 = vsel %vm2333, %v2363, %v2364
        %v2366 = vrot.slane %v2364, 4
        %v2367 = vrot.slane %v1324, 5
        %v2368 = vsel %vm2333, %v2366, %v2367
        %v2369 = vrot.slane %v2287, 5
        %v2370 = vrot.slane %v2369, 4
        %v2371 = vrot.slane %v1298, 5
        %v2372 = vsel %vm2333, %v2370, %v2371
        %v2373 = vrot.slane %v2371, 4
        %v2374 = vrot.slane %v1325, 5
        %v2375 = vsel %vm2333, %v2373, %v2374
        %v2376 = vrot.slane %v2288, 5
        %v2377 = vrot.slane %v2376, 4
        %v2378 = vrot.slane %v1300, 5
        %v2379 = vsel %vm2333, %v2377, %v2378
        %v2380 = vrot.slane %v2378, 4
        %v2381 = vrot.slane %v1326, 5
        %v2382 = vsel %vm2333, %v2380, %v2381
        %v2383 = vrot.slane %v2289, 5
        %v2384 = vrot.slane %v2383, 4
        %v2385 = vrot.slane %v1302, 5
        %v2386 = vsel %vm2333, %v2384, %v2385
        %v2387 = vrot.slane %v2385, 4
        %v2388 = vrot.slane %v1327, 5
        %v2389 = vsel %vm2333, %v2387, %v2388
        %v2390 = vrot.slane %v2290, 5
        %v2391 = vrot.slane %v2390, 4
        %v2392 = vrot.slane %v1304, 5
        %v2393 = vsel %vm2333, %v2391, %v2392
        %v2394 = vrot.slane %v2392, 4
        %v2395 = vrot.slane %v1328, 5
        %v2396 = vsel %vm2333, %v2394, %v2395
        %v2397 = vrot.slane %v2291, 5
        %v2398 = vrot.slane %v2397, 4
        %v2399 = vrot.slane %v1306, 5
        %v2400 = vsel %vm2333, %v2398, %v2399
        %v2401 = vrot.slane %v2399, 4
        %v2402 = vrot.slane %v1329, 5
        %v2403 = vsel %vm2333, %v2401, %v2402
        %v2404 = vrot.slane %v2292, 5
        %v2405 = vrot.slane %v2404, 4
        %v2406 = vrot.slane %v1308, 5
        %v2407 = vsel %vm2333, %v2405, %v2406
        %v2408 = vrot.slane %v2406, 4
        %v2409 = vrot.slane %v1330, 5
        %v2410 = vsel %vm2333, %v2408, %v2409
        %v2411 = vrot.slane %v2293, 5
        %v2412 = vrot.slane %v2411, 4
        %v2413 = vrot.slane %v1310, 5
        %v2414 = vsel %vm2333, %v2412, %v2413
        %v2415 = vrot.slane %v2413, 4
        %v2416 = vrot.slane %v1331, 5
        %v2417 = vsel %vm2333, %v2415, %v2416
        %v2418 = vrot.slane %v2294, 5
        %v2419 = vrot.slane %v2418, 4
        %v2420 = vrot.slane %v1312, 5
        %v2421 = vsel %vm2333, %v2419, %v2420
        %v2422 = vrot.slane %v2420, 4
        %v2423 = vrot.slane %v1332, 5
        %v2424 = vsel %vm2333, %v2422, %v2423
        %v2425 = vrot.slane %v2295, 5
        %v2426 = vrot.slane %v2425, 4
        %v2427 = vrot.slane %v1314, 5
        %v2428 = vsel %vm2333, %v2426, %v2427
        %v2429 = vrot.slane %v2427, 4
        %v2430 = vrot.slane %v1333, 5
        %v2431 = vsel %vm2333, %v2429, %v2430
        %v2432 = vrot.slane %v2296, 5
        %v2433 = vrot.slane %v2432, 4
        %v2434 = vrot.slane %v1316, 5
        %v2435 = vsel %vm2333, %v2433, %v2434
        %v2436 = vrot.slane %v2434, 4
        %v2437 = vrot.slane %v1334, 5
        %v2438 = vsel %vm2333, %v2436, %v2437
        %v2439 = vrot.slane %v2297, 5
        %v2440 = vrot.slane %v2439, 4
        %v2441 = vrot.slane %v1318, 5
        %v2442 = vsel %vm2333, %v2440, %v2441
        %v2443 = vrot.slane %v2441, 4
        %v2444 = vrot.slane %v1335, 5
        %v2445 = vsel %vm2333, %v2443, %v2444
        %v2446 = vunpack.c.l.b16 %v2337
        %v2447 = vunpack.c.l.b16 %v2340
        %v2448 = vunpack.c.l.b16 %v2344
        %v2449 = vunpack.c.l.b16 %v2347
        %v2450 = vunpack.c.l.b16 %v2351
        %v2451 = vunpack.c.l.b16 %v2354
        %v2452 = vunpack.c.l.b16 %v2358
        %v2453 = vunpack.c.l.b16 %v2361
        %v2454 = vunpack.c.l.b16 %v2365
        %v2455 = vunpack.c.l.b16 %v2368
        %v2456 = vunpack.c.l.b16 %v2372
        %v2457 = vunpack.c.l.b16 %v2375
        %v2458 = vunpack.c.l.b16 %v2379
        %v2459 = vunpack.c.l.b16 %v2382
        %v2460 = vunpack.c.l.b16 %v2386
        %v2461 = vunpack.c.l.b16 %v2389
        %v2462 = vunpack.c.l.b16 %v2393
        %v2463 = vunpack.c.l.b16 %v2396
        %v2464 = vunpack.c.l.b16 %v2400
        %v2465 = vunpack.c.l.b16 %v2403
        %v2466 = vunpack.c.l.b16 %v2407
        %v2467 = vunpack.c.l.b16 %v2410
        %v2468 = vunpack.c.l.b16 %v2414
        %v2469 = vunpack.c.l.b16 %v2417
        %v2470 = vunpack.c.l.b16 %v2421
        %v2471 = vunpack.c.l.b16 %v2424
        %v2472 = vunpack.c.l.b16 %v2428
        %v2473 = vunpack.c.l.b16 %v2431
        %v2474 = vunpack.c.l.b16 %v2435
        %v2475 = vunpack.c.l.b16 %v2438
        %v2476 = vunpack.c.l.b16 %v2442
        %v2477 = vunpack.c.l.b16 %v2445
        %v2478 = vpack.c.b16 %v2447, %v2446
        %v2479 = vpack.c.b16 %v2449, %v2448
        %v2480 = vpack.c.b16 %v2451, %v2450
        %v2481 = vpack.c.b16 %v2453, %v2452
        %v2482 = vpack.c.b16 %v2455, %v2454
        %v2483 = vpack.c.b16 %v2457, %v2456
        %v2484 = vpack.c.b16 %v2459, %v2458
        %v2485 = vpack.c.b16 %v2461, %v2460
        %v2486 = vpack.c.b16 %v2463, %v2462
        %v2487 = vpack.c.b16 %v2465, %v2464
        %v2488 = vpack.c.b16 %v2467, %v2466
        %v2489 = vpack.c.b16 %v2469, %v2468
        %v2490 = vpack.c.b16 %v2471, %v2470
        %v2491 = vpack.c.b16 %v2473, %v2472
        %v2492 = vpack.c.b16 %v2475, %v2474
        %v2493 = vpack.c.b16 %v2477, %v2476
        %v2495 = vsel %vm1776, %v2478, 0
        %v2498 = vsel %vm1776, %v2479, 0
        %v2501 = vsel %vm1776, %v2480, 0
        %v2504 = vsel %vm1776, %v2481, 0
        %v2507 = vsel %vm1776, %v2482, 0
        %v2510 = vsel %vm1776, %v2483, 0
        %v2513 = vsel %vm1776, %v2484, 0
        %v2516 = vsel %vm1776, %v2485, 0
        %v2519 = vsel %vm1776, %v2486, 0
        %v2522 = vsel %vm1776, %v2487, 0
        %v2525 = vsel %vm1776, %v2488, 0
        %v2528 = vsel %vm1776, %v2489, 0
        %v2531 = vsel %vm1776, %v2490, 0
        %v2534 = vsel %vm1776, %v2491, 0
        %v2537 = vsel %vm1776, %v2492, 0
        %v2540 = vsel %vm1776, %v2493, 0
        %v2543 = vsel %vm1825, %v2298, 0
        %2545 = vmatprep.subr.bf16.mxu0 0
        %2546 = vmatpush1.bf16.msra.mxu0 0
        %2547 = vmatprep.subr.bf16.mxu0 0
        %2548 = vmatpush1.bf16.msra.mxu0 0
        %2549 = vmatprep.subr.bf16.mxu0 0
        %2550 = vmatpush1.bf16.msra.mxu0 0
        %2551 = vmatprep.subr.bf16.mxu0 0
        %2552 = vmatpush1.bf16.msra.mxu0 0
        %2553 = vmatprep.subr.bf16.mxu0 0
        %2554 = vmatpush1.bf16.msra.mxu0 0
        %2555 = vmatprep.subr.bf16.mxu0 0
        %2556 = vmatpush1.bf16.msra.mxu0 0
        %2557 = vmatprep.subr.bf16.mxu0 0
        %2558 = vmatpush1.bf16.msra.mxu0 0
        %2559 = vmatprep.subr.bf16.mxu0 0
        %2560 = vmatpush1.bf16.msra.mxu0 %v2543
        %2561 = vmatprep.subr.bf16.mxu0 0
        %2562 = vmatpush2.bf16.msra.mxu0 0
        %2563 = vmatprep.subr.bf16.mxu0 0
        %2564 = vmatpush2.bf16.msra.mxu0 0
        %2565 = vmatprep.subr.bf16.mxu0 0
        %2566 = vmatpush2.bf16.msra.mxu0 0
        %2567 = vmatprep.subr.bf16.mxu0 0
        %2568 = vmatpush2.bf16.msra.mxu0 0
        %2569 = vmatprep.subr.bf16.mxu0 0
        %2570 = vmatpush2.bf16.msra.mxu0 0
        %2571 = vmatprep.subr.bf16.mxu0 0
        %2572 = vmatpush2.bf16.msra.mxu0 0
        %2573 = vmatprep.subr.bf16.mxu0 0
        %2574 = vmatpush2.bf16.msra.mxu0 0
        %2575 = vmatprep.subr.bf16.mxu0 0
        %2576 = vmatpush2.bf16.msra.mxu0 0
        %2577 = vmatprep.mubr.bf16.mxu0 0
        %2578 = vmatmul.mubr.bf16.gmra.mxu0 %v2495
        %v2579 = vpop.f32.mrf.mxu0
        %v2580 = vadd.f32 0.0, %v2579
        %v2581 = vpop.f32.mrf.mxu0
        %v2582 = vpop.f32.mrf.mxu0
        %v2583 = vadd.f32 0.0, %v2582
        %v2584 = vpop.f32.mrf.mxu0
        %2585 = vmatprep.mubr.bf16.mxu0 0
        %2586 = vmatmul.mubr.bf16.gmra.mxu0 %v2498
        %v2587 = vpop.f32.mrf.mxu0
        %v2588 = vadd.f32 0.0, %v2587
        %v2589 = vpop.f32.mrf.mxu0
        %v2590 = vpop.f32.mrf.mxu0
        %v2591 = vadd.f32 0.0, %v2590
        %v2592 = vpop.f32.mrf.mxu0
        %2593 = vmatprep.mubr.bf16.mxu0 0
        %2594 = vmatmul.mubr.bf16.gmra.mxu0 %v2501
        %v2595 = vpop.f32.mrf.mxu0
        %v2596 = vadd.f32 0.0, %v2595
        %v2597 = vpop.f32.mrf.mxu0
        %v2598 = vpop.f32.mrf.mxu0
        %v2599 = vadd.f32 0.0, %v2598
        %v2600 = vpop.f32.mrf.mxu0
        %2601 = vmatprep.mubr.bf16.mxu0 0
        %2602 = vmatmul.mubr.bf16.gmra.mxu0 %v2504
        %v2603 = vpop.f32.mrf.mxu0
        %v2604 = vadd.f32 0.0, %v2603
        %v2605 = vpop.f32.mrf.mxu0
        %v2606 = vpop.f32.mrf.mxu0
        %v2607 = vadd.f32 0.0, %v2606
        %v2608 = vpop.f32.mrf.mxu0
        %2609 = vmatprep.mubr.bf16.mxu0 0
        %2610 = vmatmul.mubr.bf16.gmra.mxu0 %v2507
        %v2611 = vpop.f32.mrf.mxu0
        %v2612 = vadd.f32 0.0, %v2611
        %v2613 = vpop.f32.mrf.mxu0
        %v2614 = vpop.f32.mrf.mxu0
        %v2615 = vadd.f32 0.0, %v2614
        %v2616 = vpop.f32.mrf.mxu0
        %2617 = vmatprep.mubr.bf16.mxu0 0
        %2618 = vmatmul.mubr.bf16.gmra.mxu0 %v2510
        %v2619 = vpop.f32.mrf.mxu0
        %v2620 = vadd.f32 0.0, %v2619
        %v2621 = vpop.f32.mrf.mxu0
        %v2622 = vpop.f32.mrf.mxu0
        %v2623 = vadd.f32 0.0, %v2622
        %v2624 = vpop.f32.mrf.mxu0
        %2625 = vmatprep.mubr.bf16.mxu0 0
        %2626 = vmatmul.mubr.bf16.gmra.mxu0 %v2513
        %v2627 = vpop.f32.mrf.mxu0
        %v2628 = vadd.f32 0.0, %v2627
        %v2629 = vpop.f32.mrf.mxu0
        %v2630 = vpop.f32.mrf.mxu0
        %v2631 = vadd.f32 0.0, %v2630
        %v2632 = vpop.f32.mrf.mxu0
        %2633 = vmatprep.mubr.bf16.mxu0 0
        %2634 = vmatmul.mubr.bf16.gmra.mxu0 %v2516
        %v2635 = vpop.f32.mrf.mxu0
        %v2636 = vadd.f32 0.0, %v2635
        %v2637 = vpop.f32.mrf.mxu0
        %v2638 = vpop.f32.mrf.mxu0
        %v2639 = vadd.f32 0.0, %v2638
        %v2640 = vpop.f32.mrf.mxu0
        %2641 = vmatprep.mubr.bf16.mxu0 0
        %2642 = vmatmul.mubr.bf16.gmra.mxu0 %v2519
        %v2643 = vpop.f32.mrf.mxu0
        %v2644 = vadd.f32 0.0, %v2643
        %v2645 = vpop.f32.mrf.mxu0
        %v2646 = vpop.f32.mrf.mxu0
        %v2647 = vadd.f32 0.0, %v2646
        %v2648 = vpop.f32.mrf.mxu0
        %2649 = vmatprep.mubr.bf16.mxu0 0
        %2650 = vmatmul.mubr.bf16.gmra.mxu0 %v2522
        %v2651 = vpop.f32.mrf.mxu0
        %v2652 = vadd.f32 0.0, %v2651
        %v2653 = vpop.f32.mrf.mxu0
        %v2654 = vpop.f32.mrf.mxu0
        %v2655 = vadd.f32 0.0, %v2654
        %v2656 = vpop.f32.mrf.mxu0
        %2657 = vmatprep.mubr.bf16.mxu0 0
        %2658 = vmatmul.mubr.bf16.gmra.mxu0 %v2525
        %v2659 = vpop.f32.mrf.mxu0
        %v2660 = vadd.f32 0.0, %v2659
        %v2661 = vpop.f32.mrf.mxu0
        %v2662 = vpop.f32.mrf.mxu0
        %v2663 = vadd.f32 0.0, %v2662
        %v2664 = vpop.f32.mrf.mxu0
        %2665 = vmatprep.mubr.bf16.mxu0 0
        %2666 = vmatmul.mubr.bf16.gmra.mxu0 %v2528
        %v2667 = vpop.f32.mrf.mxu0
        %v2668 = vadd.f32 0.0, %v2667
        %v2669 = vpop.f32.mrf.mxu0
        %v2670 = vpop.f32.mrf.mxu0
        %v2671 = vadd.f32 0.0, %v2670
        %v2672 = vpop.f32.mrf.mxu0
        %2673 = vmatprep.mubr.bf16.mxu0 0
        %2674 = vmatmul.mubr.bf16.gmra.mxu0 %v2531
        %v2675 = vpop.f32.mrf.mxu0
        %v2676 = vadd.f32 0.0, %v2675
        %v2677 = vpop.f32.mrf.mxu0
        %v2678 = vpop.f32.mrf.mxu0
        %v2679 = vadd.f32 0.0, %v2678
        %v2680 = vpop.f32.mrf.mxu0
        %2681 = vmatprep.mubr.bf16.mxu0 0
        %2682 = vmatmul.mubr.bf16.gmra.mxu0 %v2534
        %v2683 = vpop.f32.mrf.mxu0
        %v2684 = vadd.f32 0.0, %v2683
        %v2685 = vpop.f32.mrf.mxu0
        %v2686 = vpop.f32.mrf.mxu0
        %v2687 = vadd.f32 0.0, %v2686
        %v2688 = vpop.f32.mrf.mxu0
        %2689 = vmatprep.mubr.bf16.mxu0 0
        %2690 = vmatmul.mubr.bf16.gmra.mxu0 %v2537
        %v2691 = vpop.f32.mrf.mxu0
        %v2692 = vadd.f32 0.0, %v2691
        %v2693 = vpop.f32.mrf.mxu0
        %v2694 = vpop.f32.mrf.mxu0
        %v2695 = vadd.f32 0.0, %v2694
        %v2696 = vpop.f32.mrf.mxu0
        %2697 = vmatprep.mubr.bf16.mxu0 0
        %2698 = vmatmul.mubr.bf16.gmra.mxu0 %v2540
        %v2699 = vpop.f32.mrf.mxu0
        %v2700 = vadd.f32 0.0, %v2699
        %v2701 = vpop.f32.mrf.mxu0
        %v2702 = vpop.f32.mrf.mxu0
        %v2703 = vadd.f32 0.0, %v2702
        %v2704 = vpop.f32.mrf.mxu0
        %2705 = vdwg.mxu0
        %v2706 = vadd.f32 %v2156, %v2580
        %v2707 = vadd.f32 %v2159, %v2583
        %v2708 = vadd.f32 %v2164, %v2588
        %v2709 = vadd.f32 %v2167, %v2591
        %v2710 = vadd.f32 %v2172, %v2596
        %v2711 = vadd.f32 %v2175, %v2599
        %v2712 = vadd.f32 %v2180, %v2604
        %v2713 = vadd.f32 %v2183, %v2607
        %v2714 = vadd.f32 %v2188, %v2612
        %v2715 = vadd.f32 %v2191, %v2615
        %v2716 = vadd.f32 %v2196, %v2620
        %v2717 = vadd.f32 %v2199, %v2623
        %v2718 = vadd.f32 %v2204, %v2628
        %v2719 = vadd.f32 %v2207, %v2631
        %v2720 = vadd.f32 %v2212, %v2636
        %v2721 = vadd.f32 %v2215, %v2639
        %v2722 = vadd.f32 %v2220, %v2644
        %v2723 = vadd.f32 %v2223, %v2647
        %v2724 = vadd.f32 %v2228, %v2652
        %v2725 = vadd.f32 %v2231, %v2655
        %v2726 = vadd.f32 %v2236, %v2660
        %v2727 = vadd.f32 %v2239, %v2663
        %v2728 = vadd.f32 %v2244, %v2668
        %v2729 = vadd.f32 %v2247, %v2671
        %v2730 = vadd.f32 %v2252, %v2676
        %v2731 = vadd.f32 %v2255, %v2679
        %v2732 = vadd.f32 %v2260, %v2684
        %v2733 = vadd.f32 %v2263, %v2687
        %v2734 = vadd.f32 %v2268, %v2692
        %v2735 = vadd.f32 %v2271, %v2695
        %v2736 = vadd.f32 %v2276, %v2700
        %v2737 = vadd.f32 %v2279, %v2703
        %v2738 = vld [vmem:[%s653] sm:$0xf]
        %v2739 = vld [vmem:[%s653 + $0x4] sm:$0xf]
        %v2740 = vld [vmem:[%s653 + $0xc] sm:$0xf]
        %v2741 = vld [vmem:[%s653 + $0x10] sm:$0xf]
        %v2742 = vld [vmem:[%s653 + $0x18] sm:$0xf]
        %v2743 = vld [vmem:[%s653 + $0x1c] sm:$0xf]
        %v2744 = vld [vmem:[%s653 + $0x24] sm:$0xf]
        %v2745 = vld [vmem:[%s653 + $0x28] sm:$0xf]
        %v2746 = vld [vmem:[%s653 + $0x30] sm:$0xf]
        %v2747 = vld [vmem:[%s653 + $0x34] sm:$0xf]
        %v2748 = vld [vmem:[%s653 + $0x3c] sm:$0xf]
        %v2749 = vld [vmem:[%s653 + $0x40] sm:$0xf]
        %v2750 = vld [vmem:[%s653 + $0x48] sm:$0xf]
        %v2751 = vld [vmem:[%s653 + $0x4c] sm:$0xf]
        %v2752 = vld [vmem:[%s653 + $0x54] sm:$0xf]
        %v2753 = vld [vmem:[%s653 + $0x58] sm:$0xf]
        %v2754 = vld [vmem:[%s653 + $0x60] sm:$0xf]
        %v2755 = vld [vmem:[%s653 + $0x64] sm:$0xf]
        %v2756 = vld [vmem:[%s653 + $0x6c] sm:$0xf]
        %v2757 = vld [vmem:[%s653 + $0x70] sm:$0xf]
        %v2758 = vld [vmem:[%s653 + $0x78] sm:$0xf]
        %v2759 = vld [vmem:[%s653 + $0x7c] sm:$0xf]
        %v2760 = vld [vmem:[%s653 + $0x84] sm:$0xf]
        %v2761 = vld [vmem:[%s653 + $0x88] sm:$0xf]
        %v2762 = vld [vmem:[%s653 + $0x90] sm:$0xf]
        %v2763 = vld [vmem:[%s653 + $0x94] sm:$0xf]
        %v2764 = vld [vmem:[%s653 + $0x9c] sm:$0xf]
        %v2765 = vld [vmem:[%s653 + $0xa0] sm:$0xf]
        %v2766 = vld [vmem:[%s653 + $0xa8] sm:$0xf]
        %v2767 = vld [vmem:[%s653 + $0xac] sm:$0xf]
        %v2768 = vld [vmem:[%s653 + $0xb4] sm:$0xf]
        %v2769 = vld [vmem:[%s653 + $0xb8] sm:$0xf]
        %v2770 = vld [vmem:[%s2 + $0x4] sm:$0xc]
        %v2803 = vunpack.c.l.b16 %v2738
        %v2804 = vunpack.c.l.b16 %v2739
        %v2805 = vunpack.c.l.b16 %v2740
        %v2806 = vunpack.c.l.b16 %v2741
        %v2807 = vunpack.c.l.b16 %v2742
        %v2808 = vunpack.c.l.b16 %v2743
        %v2809 = vunpack.c.l.b16 %v2744
        %v2810 = vunpack.c.l.b16 %v2745
        %v2811 = vunpack.c.l.b16 %v2746
        %v2812 = vunpack.c.l.b16 %v2747
        %v2813 = vunpack.c.l.b16 %v2748
        %v2814 = vunpack.c.l.b16 %v2749
        %v2815 = vunpack.c.l.b16 %v2750
        %v2816 = vunpack.c.l.b16 %v2751
        %v2817 = vunpack.c.l.b16 %v2752
        %v2818 = vunpack.c.l.b16 %v2753
        %v2819 = vunpack.c.l.b16 %v2754
        %v2820 = vunpack.c.l.b16 %v2755
        %v2821 = vunpack.c.l.b16 %v2756
        %v2822 = vunpack.c.l.b16 %v2757
        %v2823 = vunpack.c.l.b16 %v2758
        %v2824 = vunpack.c.l.b16 %v2759
        %v2825 = vunpack.c.l.b16 %v2760
        %v2826 = vunpack.c.l.b16 %v2761
        %v2827 = vunpack.c.l.b16 %v2762
        %v2828 = vunpack.c.l.b16 %v2763
        %v2829 = vunpack.c.l.b16 %v2764
        %v2830 = vunpack.c.l.b16 %v2765
        %v2831 = vunpack.c.l.b16 %v2766
        %v2832 = vunpack.c.l.b16 %v2767
        %v2833 = vunpack.c.l.b16 %v2768
        %v2834 = vunpack.c.l.b16 %v2769
        %v2835 = vpack.c.b16 %v2804, %v2803
        %v2836 = vpack.c.b16 %v2806, %v2805
        %v2837 = vpack.c.b16 %v2808, %v2807
        %v2838 = vpack.c.b16 %v2810, %v2809
        %v2839 = vpack.c.b16 %v2812, %v2811
        %v2840 = vpack.c.b16 %v2814, %v2813
        %v2841 = vpack.c.b16 %v2816, %v2815
        %v2842 = vpack.c.b16 %v2818, %v2817
        %v2843 = vpack.c.b16 %v2820, %v2819
        %v2844 = vpack.c.b16 %v2822, %v2821
        %v2845 = vpack.c.b16 %v2824, %v2823
        %v2846 = vpack.c.b16 %v2826, %v2825
        %v2847 = vpack.c.b16 %v2828, %v2827
        %v2848 = vpack.c.b16 %v2830, %v2829
        %v2849 = vpack.c.b16 %v2832, %v2831
        %v2850 = vpack.c.b16 %v2834, %v2833
        %v2852 = vunpack.c.l.b16 %v2770
        %v2853 = vpack.c.b16 %v2852, %v2852
        %v2854 = vrot.slane %v2853, 2
        %v2856 = vsel %vm1776, %v2835, 0
        %v2859 = vsel %vm1776, %v2836, 0
        %v2862 = vsel %vm1776, %v2837, 0
        %v2865 = vsel %vm1776, %v2838, 0
        %v2868 = vsel %vm1776, %v2839, 0
        %v2871 = vsel %vm1776, %v2840, 0
        %v2874 = vsel %vm1776, %v2841, 0
        %v2877 = vsel %vm1776, %v2842, 0
        %v2880 = vsel %vm1776, %v2843, 0
        %v2883 = vsel %vm1776, %v2844, 0
        %v2886 = vsel %vm1776, %v2845, 0
        %v2889 = vsel %vm1776, %v2846, 0
        %v2892 = vsel %vm1776, %v2847, 0
        %v2895 = vsel %vm1776, %v2848, 0
        %v2898 = vsel %vm1776, %v2849, 0
        %v2901 = vsel %vm1776, %v2850, 0
        %v2904 = vsel %vm1825, %v2854, 0
        %2906 = vmatprep.subr.bf16.mxu0 0
        %2907 = vmatpush1.bf16.msra.mxu0 0
        %2908 = vmatprep.subr.bf16.mxu0 0
        %2909 = vmatpush1.bf16.msra.mxu0 0
        %2910 = vmatprep.subr.bf16.mxu0 0
        %2911 = vmatpush1.bf16.msra.mxu0 0
        %2912 = vmatprep.subr.bf16.mxu0 0
        %2913 = vmatpush1.bf16.msra.mxu0 0
        %2914 = vmatprep.subr.bf16.mxu0 0
        %2915 = vmatpush1.bf16.msra.mxu0 0
        %2916 = vmatprep.subr.bf16.mxu0 0
        %2917 = vmatpush1.bf16.msra.mxu0 0
        %2918 = vmatprep.subr.bf16.mxu0 0
        %2919 = vmatpush1.bf16.msra.mxu0 0
        %2920 = vmatprep.subr.bf16.mxu0 0
        %2921 = vmatpush1.bf16.msra.mxu0 %v2904
        %2922 = vmatprep.subr.bf16.mxu0 0
        %2923 = vmatpush2.bf16.msra.mxu0 0
        %2924 = vmatprep.subr.bf16.mxu0 0
        %2925 = vmatpush2.bf16.msra.mxu0 0
        %2926 = vmatprep.subr.bf16.mxu0 0
        %2927 = vmatpush2.bf16.msra.mxu0 0
        %2928 = vmatprep.subr.bf16.mxu0 0
        %2929 = vmatpush2.bf16.msra.mxu0 0
        %2930 = vmatprep.subr.bf16.mxu0 0
        %2931 = vmatpush2.bf16.msra.mxu0 0
        %2932 = vmatprep.subr.bf16.mxu0 0
        %2933 = vmatpush2.bf16.msra.mxu0 0
        %2934 = vmatprep.subr.bf16.mxu0 0
        %2935 = vmatpush2.bf16.msra.mxu0 0
        %2936 = vmatprep.subr.bf16.mxu0 0
        %2937 = vmatpush2.bf16.msra.mxu0 0
        %2938 = vmatprep.mubr.bf16.mxu0 0
        %2939 = vmatmul.mubr.bf16.gmra.mxu0 %v2856
        %v2940 = vpop.f32.mrf.mxu0
        %v2941 = vadd.f32 0.0, %v2940
        %v2942 = vpop.f32.mrf.mxu0
        %v2943 = vpop.f32.mrf.mxu0
        %v2944 = vadd.f32 0.0, %v2943
        %v2945 = vpop.f32.mrf.mxu0
        %2946 = vmatprep.mubr.bf16.mxu0 0
        %2947 = vmatmul.mubr.bf16.gmra.mxu0 %v2859
        %v2948 = vpop.f32.mrf.mxu0
        %v2949 = vadd.f32 0.0, %v2948
        %v2950 = vpop.f32.mrf.mxu0
        %v2951 = vpop.f32.mrf.mxu0
        %v2952 = vadd.f32 0.0, %v2951
        %v2953 = vpop.f32.mrf.mxu0
        %2954 = vmatprep.mubr.bf16.mxu0 0
        %2955 = vmatmul.mubr.bf16.gmra.mxu0 %v2862
        %v2956 = vpop.f32.mrf.mxu0
        %v2957 = vadd.f32 0.0, %v2956
        %v2958 = vpop.f32.mrf.mxu0
        %v2959 = vpop.f32.mrf.mxu0
        %v2960 = vadd.f32 0.0, %v2959
        %v2961 = vpop.f32.mrf.mxu0
        %2962 = vmatprep.mubr.bf16.mxu0 0
        %2963 = vmatmul.mubr.bf16.gmra.mxu0 %v2865
        %v2964 = vpop.f32.mrf.mxu0
        %v2965 = vadd.f32 0.0, %v2964
        %v2966 = vpop.f32.mrf.mxu0
        %v2967 = vpop.f32.mrf.mxu0
        %v2968 = vadd.f32 0.0, %v2967
        %v2969 = vpop.f32.mrf.mxu0
        %2970 = vmatprep.mubr.bf16.mxu0 0
        %2971 = vmatmul.mubr.bf16.gmra.mxu0 %v2868
        %v2972 = vpop.f32.mrf.mxu0
        %v2973 = vadd.f32 0.0, %v2972
        %v2974 = vpop.f32.mrf.mxu0
        %v2975 = vpop.f32.mrf.mxu0
        %v2976 = vadd.f32 0.0, %v2975
        %v2977 = vpop.f32.mrf.mxu0
        %2978 = vmatprep.mubr.bf16.mxu0 0
        %2979 = vmatmul.mubr.bf16.gmra.mxu0 %v2871
        %v2980 = vpop.f32.mrf.mxu0
        %v2981 = vadd.f32 0.0, %v2980
        %v2982 = vpop.f32.mrf.mxu0
        %v2983 = vpop.f32.mrf.mxu0
        %v2984 = vadd.f32 0.0, %v2983
        %v2985 = vpop.f32.mrf.mxu0
        %2986 = vmatprep.mubr.bf16.mxu0 0
        %2987 = vmatmul.mubr.bf16.gmra.mxu0 %v2874
        %v2988 = vpop.f32.mrf.mxu0
        %v2989 = vadd.f32 0.0, %v2988
        %v2990 = vpop.f32.mrf.mxu0
        %v2991 = vpop.f32.mrf.mxu0
        %v2992 = vadd.f32 0.0, %v2991
        %v2993 = vpop.f32.mrf.mxu0
        %2994 = vmatprep.mubr.bf16.mxu0 0
        %2995 = vmatmul.mubr.bf16.gmra.mxu0 %v2877
        %v2996 = vpop.f32.mrf.mxu0
        %v2997 = vadd.f32 0.0, %v2996
        %v2998 = vpop.f32.mrf.mxu0
        %v2999 = vpop.f32.mrf.mxu0
        %v3000 = vadd.f32 0.0, %v2999
        %v3001 = vpop.f32.mrf.mxu0
        %3002 = vmatprep.mubr.bf16.mxu0 0
        %3003 = vmatmul.mubr.bf16.gmra.mxu0 %v2880
        %v3004 = vpop.f32.mrf.mxu0
        %v3005 = vadd.f32 0.0, %v3004
        %v3006 = vpop.f32.mrf.mxu0
        %v3007 = vpop.f32.mrf.mxu0
        %v3008 = vadd.f32 0.0, %v3007
        %v3009 = vpop.f32.mrf.mxu0
        %3010 = vmatprep.mubr.bf16.mxu0 0
        %3011 = vmatmul.mubr.bf16.gmra.mxu0 %v2883
        %v3012 = vpop.f32.mrf.mxu0
        %v3013 = vadd.f32 0.0, %v3012
        %v3014 = vpop.f32.mrf.mxu0
        %v3015 = vpop.f32.mrf.mxu0
        %v3016 = vadd.f32 0.0, %v3015
        %v3017 = vpop.f32.mrf.mxu0
        %3018 = vmatprep.mubr.bf16.mxu0 0
        %3019 = vmatmul.mubr.bf16.gmra.mxu0 %v2886
        %v3020 = vpop.f32.mrf.mxu0
        %v3021 = vadd.f32 0.0, %v3020
        %v3022 = vpop.f32.mrf.mxu0
        %v3023 = vpop.f32.mrf.mxu0
        %v3024 = vadd.f32 0.0, %v3023
        %v3025 = vpop.f32.mrf.mxu0
        %3026 = vmatprep.mubr.bf16.mxu0 0
        %3027 = vmatmul.mubr.bf16.gmra.mxu0 %v2889
        %v3028 = vpop.f32.mrf.mxu0
        %v3029 = vadd.f32 0.0, %v3028
        %v3030 = vpop.f32.mrf.mxu0
        %v3031 = vpop.f32.mrf.mxu0
        %v3032 = vadd.f32 0.0, %v3031
        %v3033 = vpop.f32.mrf.mxu0
        %3034 = vmatprep.mubr.bf16.mxu0 0
        %3035 = vmatmul.mubr.bf16.gmra.mxu0 %v2892
        %v3036 = vpop.f32.mrf.mxu0
        %v3037 = vadd.f32 0.0, %v3036
        %v3038 = vpop.f32.mrf.mxu0
        %v3039 = vpop.f32.mrf.mxu0
        %v3040 = vadd.f32 0.0, %v3039
        %v3041 = vpop.f32.mrf.mxu0
        %3042 = vmatprep.mubr.bf16.mxu0 0
        %3043 = vmatmul.mubr.bf16.gmra.mxu0 %v2895
        %v3044 = vpop.f32.mrf.mxu0
        %v3045 = vadd.f32 0.0, %v3044
        %v3046 = vpop.f32.mrf.mxu0
        %v3047 = vpop.f32.mrf.mxu0
        %v3048 = vadd.f32 0.0, %v3047
        %v3049 = vpop.f32.mrf.mxu0
        %3050 = vmatprep.mubr.bf16.mxu0 0
        %3051 = vmatmul.mubr.bf16.gmra.mxu0 %v2898
        %v3052 = vpop.f32.mrf.mxu0
        %v3053 = vadd.f32 0.0, %v3052
        %v3054 = vpop.f32.mrf.mxu0
        %v3055 = vpop.f32.mrf.mxu0
        %v3056 = vadd.f32 0.0, %v3055
        %v3057 = vpop.f32.mrf.mxu0
        %3058 = vmatprep.mubr.bf16.mxu0 0
        %3059 = vmatmul.mubr.bf16.gmra.mxu0 %v2901
        %v3060 = vpop.f32.mrf.mxu0
        %v3061 = vadd.f32 0.0, %v3060
        %v3062 = vpop.f32.mrf.mxu0
        %v3063 = vpop.f32.mrf.mxu0
        %v3064 = vadd.f32 0.0, %v3063
        %v3065 = vpop.f32.mrf.mxu0
        %3066 = vdwg.mxu0
        %v3067 = vadd.f32 %v2706, %v2941
        %v3068 = vadd.f32 %v2707, %v2944
        %v3069 = vadd.f32 %v2708, %v2949
        %v3070 = vadd.f32 %v2709, %v2952
        %v3071 = vadd.f32 %v2710, %v2957
        %v3072 = vadd.f32 %v2711, %v2960
        %v3073 = vadd.f32 %v2712, %v2965
        %v3074 = vadd.f32 %v2713, %v2968
        %v3075 = vadd.f32 %v2714, %v2973
        %v3076 = vadd.f32 %v2715, %v2976
        %v3077 = vadd.f32 %v2716, %v2981
        %v3078 = vadd.f32 %v2717, %v2984
        %v3079 = vadd.f32 %v2718, %v2989
        %v3080 = vadd.f32 %v2719, %v2992
        %v3081 = vadd.f32 %v2720, %v2997
        %v3082 = vadd.f32 %v2721, %v3000
        %v3083 = vadd.f32 %v2722, %v3005
        %v3084 = vadd.f32 %v2723, %v3008
        %v3085 = vadd.f32 %v2724, %v3013
        %v3086 = vadd.f32 %v2725, %v3016
        %v3087 = vadd.f32 %v2726, %v3021
        %v3088 = vadd.f32 %v2727, %v3024
        %v3089 = vadd.f32 %v2728, %v3029
        %v3090 = vadd.f32 %v2729, %v3032
        %v3091 = vadd.f32 %v2730, %v3037
        %v3092 = vadd.f32 %v2731, %v3040
        %v3093 = vadd.f32 %v2732, %v3045
        %v3094 = vadd.f32 %v2733, %v3048
        %v3095 = vadd.f32 %v2734, %v3053
        %v3096 = vadd.f32 %v2735, %v3056
        %v3097 = vadd.f32 %v2736, %v3061
        %v3098 = vadd.f32 %v2737, %v3064
        %v3099 = vld [vmem:[%s653] sm:$0xf]
        %v3100 = vld [vmem:[%s653 + $0x4] sm:$0xf]
        %v3101 = vld [vmem:[%s653 + $0x8] sm:$0x1]
        %v3102 = vld [vmem:[%s653 + $0xc] sm:$0xf]
        %v3103 = vld [vmem:[%s653 + $0x10] sm:$0xf]
        %v3104 = vld [vmem:[%s653 + $0x14] sm:$0x1]
        %v3105 = vld [vmem:[%s653 + $0x18] sm:$0xf]
        %v3106 = vld [vmem:[%s653 + $0x1c] sm:$0xf]
        %v3107 = vld [vmem:[%s653 + $0x20] sm:$0x1]
        %v3108 = vld [vmem:[%s653 + $0x24] sm:$0xf]
        %v3109 = vld [vmem:[%s653 + $0x28] sm:$0xf]
        %v3110 = vld [vmem:[%s653 + $0x2c] sm:$0x1]
        %v3111 = vld [vmem:[%s653 + $0x30] sm:$0xf]
        %v3112 = vld [vmem:[%s653 + $0x34] sm:$0xf]
        %v3113 = vld [vmem:[%s653 + $0x38] sm:$0x1]
        %v3114 = vld [vmem:[%s653 + $0x3c] sm:$0xf]
        %v3115 = vld [vmem:[%s653 + $0x40] sm:$0xf]
        %v3116 = vld [vmem:[%s653 + $0x44] sm:$0x1]
        %v3117 = vld [vmem:[%s653 + $0x48] sm:$0xf]
        %v3118 = vld [vmem:[%s653 + $0x4c] sm:$0xf]
        %v3119 = vld [vmem:[%s653 + $0x50] sm:$0x1]
        %v3120 = vld [vmem:[%s653 + $0x54] sm:$0xf]
        %v3121 = vld [vmem:[%s653 + $0x58] sm:$0xf]
        %v3122 = vld [vmem:[%s653 + $0x5c] sm:$0x1]
        %v3123 = vld [vmem:[%s653 + $0x60] sm:$0xf]
        %v3124 = vld [vmem:[%s653 + $0x64] sm:$0xf]
        %v3125 = vld [vmem:[%s653 + $0x68] sm:$0x1]
        %v3126 = vld [vmem:[%s653 + $0x6c] sm:$0xf]
        %v3127 = vld [vmem:[%s653 + $0x70] sm:$0xf]
        %v3128 = vld [vmem:[%s653 + $0x74] sm:$0x1]
        %v3129 = vld [vmem:[%s653 + $0x78] sm:$0xf]
        %v3130 = vld [vmem:[%s653 + $0x7c] sm:$0xf]
        %v3131 = vld [vmem:[%s653 + $0x80] sm:$0x1]
        %v3132 = vld [vmem:[%s653 + $0x84] sm:$0xf]
        %v3133 = vld [vmem:[%s653 + $0x88] sm:$0xf]
        %v3134 = vld [vmem:[%s653 + $0x8c] sm:$0x1]
        %v3135 = vld [vmem:[%s653 + $0x90] sm:$0xf]
        %v3136 = vld [vmem:[%s653 + $0x94] sm:$0xf]
        %v3137 = vld [vmem:[%s653 + $0x98] sm:$0x1]
        %v3138 = vld [vmem:[%s653 + $0x9c] sm:$0xf]
        %v3139 = vld [vmem:[%s653 + $0xa0] sm:$0xf]
        %v3140 = vld [vmem:[%s653 + $0xa4] sm:$0x1]
        %v3141 = vld [vmem:[%s653 + $0xa8] sm:$0xf]
        %v3142 = vld [vmem:[%s653 + $0xac] sm:$0xf]
        %v3143 = vld [vmem:[%s653 + $0xb0] sm:$0x1]
        %v3144 = vld [vmem:[%s653 + $0xb4] sm:$0xf]
        %v3145 = vld [vmem:[%s653 + $0xb8] sm:$0xf]
        %v3146 = vld [vmem:[%s653 + $0xbc] sm:$0x1]
        %v3147 = vld [vmem:[%s2 + $0x8] sm:$0x3]
        %v3149 = vshrl.u32 %v3099, 16
        %v3151 = vrot.slane %v3149, 4
        %v3152 = vshll.u32 %v3099, 16
        %v3154 = vrot.slane %v3152, 5
        %v3155 = vor.u32 %v3151, %v3154
        %v3156 = vrot.slane %v3155, 4
        %v3158 = vshll.u32 %v3100, 16
        %v3160 = vrot.slane %v3158, 5
        %v3161 = vsel %vm1339, %v3156, %v3160
        %v3162 = vshrl.u32 %v3100, 16
        %v3164 = vrot.slane %v3162, 4
        %v3165 = vor.u32 %v3164, %v3160
        %v3166 = vrot.slane %v3165, 4
        %v3168 = vshll.u32 %v3101, 16
        %v3170 = vrot.slane %v3168, 5
        %v3171 = vsel %vm1339, %v3166, %v3170
        %v3173 = vshrl.u32 %v3102, 16
        %v3175 = vrot.slane %v3173, 4
        %v3176 = vshll.u32 %v3102, 16
        %v3178 = vrot.slane %v3176, 5
        %v3179 = vor.u32 %v3175, %v3178
        %v3180 = vrot.slane %v3179, 4
        %v3182 = vshll.u32 %v3103, 16
        %v3184 = vrot.slane %v3182, 5
        %v3185 = vsel %vm1339, %v3180, %v3184
        %v3186 = vshrl.u32 %v3103, 16
        %v3188 = vrot.slane %v3186, 4
        %v3189 = vor.u32 %v3188, %v3184
        %v3190 = vrot.slane %v3189, 4
        %v3192 = vshll.u32 %v3104, 16
        %v3194 = vrot.slane %v3192, 5
        %v3195 = vsel %vm1339, %v3190, %v3194
        %v3197 = vshrl.u32 %v3105, 16
        %v3199 = vrot.slane %v3197, 4
        %v3200 = vshll.u32 %v3105, 16
        %v3202 = vrot.slane %v3200, 5
        %v3203 = vor.u32 %v3199, %v3202
        %v3204 = vrot.slane %v3203, 4
        %v3206 = vshll.u32 %v3106, 16
        %v3208 = vrot.slane %v3206, 5
        %v3209 = vsel %vm1339, %v3204, %v3208
        %v3210 = vshrl.u32 %v3106, 16
        %v3212 = vrot.slane %v3210, 4
        %v3213 = vor.u32 %v3212, %v3208
        %v3214 = vrot.slane %v3213, 4
        %v3216 = vshll.u32 %v3107, 16
        %v3218 = vrot.slane %v3216, 5
        %v3219 = vsel %vm1339, %v3214, %v3218
        %v3221 = vshrl.u32 %v3108, 16
        %v3223 = vrot.slane %v3221, 4
        %v3224 = vshll.u32 %v3108, 16
        %v3226 = vrot.slane %v3224, 5
        %v3227 = vor.u32 %v3223, %v3226
        %v3228 = vrot.slane %v3227, 4
        %v3230 = vshll.u32 %v3109, 16
        %v3232 = vrot.slane %v3230, 5
        %v3233 = vsel %vm1339, %v3228, %v3232
        %v3234 = vshrl.u32 %v3109, 16
        %v3236 = vrot.slane %v3234, 4
        %v3237 = vor.u32 %v3236, %v3232
        %v3238 = vrot.slane %v3237, 4
        %v3240 = vshll.u32 %v3110, 16
        %v3242 = vrot.slane %v3240, 5
        %v3243 = vsel %vm1339, %v3238, %v3242
        %v3245 = vshrl.u32 %v3111, 16
        %v3247 = vrot.slane %v3245, 4
        %v3248 = vshll.u32 %v3111, 16
        %v3250 = vrot.slane %v3248, 5
        %v3251 = vor.u32 %v3247, %v3250
        %v3252 = vrot.slane %v3251, 4
        %v3254 = vshll.u32 %v3112, 16
        %v3256 = vrot.slane %v3254, 5
        %v3257 = vsel %vm1339, %v3252, %v3256
        %v3258 = vshrl.u32 %v3112, 16
        %v3260 = vrot.slane %v3258, 4
        %v3261 = vor.u32 %v3260, %v3256
        %v3262 = vrot.slane %v3261, 4
        %v3264 = vshll.u32 %v3113, 16
        %v3266 = vrot.slane %v3264, 5
        %v3267 = vsel %vm1339, %v3262, %v3266
        %v3269 = vshrl.u32 %v3114, 16
        %v3271 = vrot.slane %v3269, 4
        %v3272 = vshll.u32 %v3114, 16
        %v3274 = vrot.slane %v3272, 5
        %v3275 = vor.u32 %v3271, %v3274
        %v3276 = vrot.slane %v3275, 4
        %v3278 = vshll.u32 %v3115, 16
        %v3280 = vrot.slane %v3278, 5
        %v3281 = vsel %vm1339, %v3276, %v3280
        %v3282 = vshrl.u32 %v3115, 16
        %v3284 = vrot.slane %v3282, 4
        %v3285 = vor.u32 %v3284, %v3280
        %v3286 = vrot.slane %v3285, 4
        %v3288 = vshll.u32 %v3116, 16
        %v3290 = vrot.slane %v3288, 5
        %v3291 = vsel %vm1339, %v3286, %v3290
        %v3293 = vshrl.u32 %v3117, 16
        %v3295 = vrot.slane %v3293, 4
        %v3296 = vshll.u32 %v3117, 16
        %v3298 = vrot.slane %v3296, 5
        %v3299 = vor.u32 %v3295, %v3298
        %v3300 = vrot.slane %v3299, 4
        %v3302 = vshll.u32 %v3118, 16
        %v3304 = vrot.slane %v3302, 5
        %v3305 = vsel %vm1339, %v3300, %v3304
        %v3306 = vshrl.u32 %v3118, 16
        %v3308 = vrot.slane %v3306, 4
        %v3309 = vor.u32 %v3308, %v3304
        %v3310 = vrot.slane %v3309, 4
        %v3312 = vshll.u32 %v3119, 16
        %v3314 = vrot.slane %v3312, 5
        %v3315 = vsel %vm1339, %v3310, %v3314
        %v3317 = vshrl.u32 %v3120, 16
        %v3319 = vrot.slane %v3317, 4
        %v3320 = vshll.u32 %v3120, 16
        %v3322 = vrot.slane %v3320, 5
        %v3323 = vor.u32 %v3319, %v3322
        %v3324 = vrot.slane %v3323, 4
        %v3326 = vshll.u32 %v3121, 16
        %v3328 = vrot.slane %v3326, 5
        %v3329 = vsel %vm1339, %v3324, %v3328
        %v3330 = vshrl.u32 %v3121, 16
        %v3332 = vrot.slane %v3330, 4
        %v3333 = vor.u32 %v3332, %v3328
        %v3334 = vrot.slane %v3333, 4
        %v3336 = vshll.u32 %v3122, 16
        %v3338 = vrot.slane %v3336, 5
        %v3339 = vsel %vm1339, %v3334, %v3338
        %v3341 = vshrl.u32 %v3123, 16
        %v3343 = vrot.slane %v3341, 4
        %v3344 = vshll.u32 %v3123, 16
        %v3346 = vrot.slane %v3344, 5
        %v3347 = vor.u32 %v3343, %v3346
        %v3348 = vrot.slane %v3347, 4
        %v3350 = vshll.u32 %v3124, 16
        %v3352 = vrot.slane %v3350, 5
        %v3353 = vsel %vm1339, %v3348, %v3352
        %v3354 = vshrl.u32 %v3124, 16
        %v3356 = vrot.slane %v3354, 4
        %v3357 = vor.u32 %v3356, %v3352
        %v3358 = vrot.slane %v3357, 4
        %v3360 = vshll.u32 %v3125, 16
        %v3362 = vrot.slane %v3360, 5
        %v3363 = vsel %vm1339, %v3358, %v3362
        %v3365 = vshrl.u32 %v3126, 16
        %v3367 = vrot.slane %v3365, 4
        %v3368 = vshll.u32 %v3126, 16
        %v3370 = vrot.slane %v3368, 5
        %v3371 = vor.u32 %v3367, %v3370
        %v3372 = vrot.slane %v3371, 4
        %v3374 = vshll.u32 %v3127, 16
        %v3376 = vrot.slane %v3374, 5
        %v3377 = vsel %vm1339, %v3372, %v3376
        %v3378 = vshrl.u32 %v3127, 16
        %v3380 = vrot.slane %v3378, 4
        %v3381 = vor.u32 %v3380, %v3376
        %v3382 = vrot.slane %v3381, 4
        %v3384 = vshll.u32 %v3128, 16
        %v3386 = vrot.slane %v3384, 5
        %v3387 = vsel %vm1339, %v3382, %v3386
        %v3389 = vshrl.u32 %v3129, 16
        %v3391 = vrot.slane %v3389, 4
        %v3392 = vshll.u32 %v3129, 16
        %v3394 = vrot.slane %v3392, 5
        %v3395 = vor.u32 %v3391, %v3394
        %v3396 = vrot.slane %v3395, 4
        %v3398 = vshll.u32 %v3130, 16
        %v3400 = vrot.slane %v3398, 5
        %v3401 = vsel %vm1339, %v3396, %v3400
        %v3402 = vshrl.u32 %v3130, 16
        %v3404 = vrot.slane %v3402, 4
        %v3405 = vor.u32 %v3404, %v3400
        %v3406 = vrot.slane %v3405, 4
        %v3408 = vshll.u32 %v3131, 16
        %v3410 = vrot.slane %v3408, 5
        %v3411 = vsel %vm1339, %v3406, %v3410
        %v3413 = vshrl.u32 %v3132, 16
        %v3415 = vrot.slane %v3413, 4
        %v3416 = vshll.u32 %v3132, 16
        %v3418 = vrot.slane %v3416, 5
        %v3419 = vor.u32 %v3415, %v3418
        %v3420 = vrot.slane %v3419, 4
        %v3422 = vshll.u32 %v3133, 16
        %v3424 = vrot.slane %v3422, 5
        %v3425 = vsel %vm1339, %v3420, %v3424
        %v3426 = vshrl.u32 %v3133, 16
        %v3428 = vrot.slane %v3426, 4
        %v3429 = vor.u32 %v3428, %v3424
        %v3430 = vrot.slane %v3429, 4
        %v3432 = vshll.u32 %v3134, 16
        %v3434 = vrot.slane %v3432, 5
        %v3435 = vsel %vm1339, %v3430, %v3434
        %v3437 = vshrl.u32 %v3135, 16
        %v3439 = vrot.slane %v3437, 4
        %v3440 = vshll.u32 %v3135, 16
        %v3442 = vrot.slane %v3440, 5
        %v3443 = vor.u32 %v3439, %v3442
        %v3444 = vrot.slane %v3443, 4
        %v3446 = vshll.u32 %v3136, 16
        %v3448 = vrot.slane %v3446, 5
        %v3449 = vsel %vm1339, %v3444, %v3448
        %v3450 = vshrl.u32 %v3136, 16
        %v3452 = vrot.slane %v3450, 4
        %v3453 = vor.u32 %v3452, %v3448
        %v3454 = vrot.slane %v3453, 4
        %v3456 = vshll.u32 %v3137, 16
        %v3458 = vrot.slane %v3456, 5
        %v3459 = vsel %vm1339, %v3454, %v3458
        %v3461 = vshrl.u32 %v3138, 16
        %v3463 = vrot.slane %v3461, 4
        %v3464 = vshll.u32 %v3138, 16
        %v3466 = vrot.slane %v3464, 5
        %v3467 = vor.u32 %v3463, %v3466
        %v3468 = vrot.slane %v3467, 4
        %v3470 = vshll.u32 %v3139, 16
        %v3472 = vrot.slane %v3470, 5
        %v3473 = vsel %vm1339, %v3468, %v3472
        %v3474 = vshrl.u32 %v3139, 16
        %v3476 = vrot.slane %v3474, 4
        %v3477 = vor.u32 %v3476, %v3472
        %v3478 = vrot.slane %v3477, 4
        %v3480 = vshll.u32 %v3140, 16
        %v3482 = vrot.slane %v3480, 5
        %v3483 = vsel %vm1339, %v3478, %v3482
        %v3485 = vshrl.u32 %v3141, 16
        %v3487 = vrot.slane %v3485, 4
        %v3488 = vshll.u32 %v3141, 16
        %v3490 = vrot.slane %v3488, 5
        %v3491 = vor.u32 %v3487, %v3490
        %v3492 = vrot.slane %v3491, 4
        %v3494 = vshll.u32 %v3142, 16
        %v3496 = vrot.slane %v3494, 5
        %v3497 = vsel %vm1339, %v3492, %v3496
        %v3498 = vshrl.u32 %v3142, 16
        %v3500 = vrot.slane %v3498, 4
        %v3501 = vor.u32 %v3500, %v3496
        %v3502 = vrot.slane %v3501, 4
        %v3504 = vshll.u32 %v3143, 16
        %v3506 = vrot.slane %v3504, 5
        %v3507 = vsel %vm1339, %v3502, %v3506
        %v3509 = vshrl.u32 %v3144, 16
        %v3511 = vrot.slane %v3509, 4
        %v3512 = vshll.u32 %v3144, 16
        %v3514 = vrot.slane %v3512, 5
        %v3515 = vor.u32 %v3511, %v3514
        %v3516 = vrot.slane %v3515, 4
        %v3518 = vshll.u32 %v3145, 16
        %v3520 = vrot.slane %v3518, 5
        %v3521 = vsel %vm1339, %v3516, %v3520
        %v3522 = vshrl.u32 %v3145, 16
        %v3524 = vrot.slane %v3522, 4
        %v3525 = vor.u32 %v3524, %v3520
        %v3526 = vrot.slane %v3525, 4
        %v3528 = vshll.u32 %v3146, 16
        %v3530 = vrot.slane %v3528, 5
        %v3531 = vsel %vm1339, %v3526, %v3530
        %v3532 = vunpack.c.l.b16 %v3161
        %v3533 = vunpack.c.l.b16 %v3171
        %v3534 = vunpack.c.l.b16 %v3185
        %v3535 = vunpack.c.l.b16 %v3195
        %v3536 = vunpack.c.l.b16 %v3209
        %v3537 = vunpack.c.l.b16 %v3219
        %v3538 = vunpack.c.l.b16 %v3233
        %v3539 = vunpack.c.l.b16 %v3243
        %v3540 = vunpack.c.l.b16 %v3257
        %v3541 = vunpack.c.l.b16 %v3267
        %v3542 = vunpack.c.l.b16 %v3281
        %v3543 = vunpack.c.l.b16 %v3291
        %v3544 = vunpack.c.l.b16 %v3305
        %v3545 = vunpack.c.l.b16 %v3315
        %v3546 = vunpack.c.l.b16 %v3329
        %v3547 = vunpack.c.l.b16 %v3339
        %v3548 = vunpack.c.l.b16 %v3353
        %v3549 = vunpack.c.l.b16 %v3363
        %v3550 = vunpack.c.l.b16 %v3377
        %v3551 = vunpack.c.l.b16 %v3387
        %v3552 = vunpack.c.l.b16 %v3401
        %v3553 = vunpack.c.l.b16 %v3411
        %v3554 = vunpack.c.l.b16 %v3425
        %v3555 = vunpack.c.l.b16 %v3435
        %v3556 = vunpack.c.l.b16 %v3449
        %v3557 = vunpack.c.l.b16 %v3459
        %v3558 = vunpack.c.l.b16 %v3473
        %v3559 = vunpack.c.l.b16 %v3483
        %v3560 = vunpack.c.l.b16 %v3497
        %v3561 = vunpack.c.l.b16 %v3507
        %v3562 = vunpack.c.l.b16 %v3521
        %v3563 = vunpack.c.l.b16 %v3531
        %v3564 = vpack.c.b16 %v3533, %v3532
        %v3565 = vpack.c.b16 %v3535, %v3534
        %v3566 = vpack.c.b16 %v3537, %v3536
        %v3567 = vpack.c.b16 %v3539, %v3538
        %v3568 = vpack.c.b16 %v3541, %v3540
        %v3569 = vpack.c.b16 %v3543, %v3542
        %v3570 = vpack.c.b16 %v3545, %v3544
        %v3571 = vpack.c.b16 %v3547, %v3546
        %v3572 = vpack.c.b16 %v3549, %v3548
        %v3573 = vpack.c.b16 %v3551, %v3550
        %v3574 = vpack.c.b16 %v3553, %v3552
        %v3575 = vpack.c.b16 %v3555, %v3554
        %v3576 = vpack.c.b16 %v3557, %v3556
        %v3577 = vpack.c.b16 %v3559, %v3558
        %v3578 = vpack.c.b16 %v3561, %v3560
        %v3579 = vpack.c.b16 %v3563, %v3562
        %v3581 = vsel %vm1776, %v3564, 0
        %v3584 = vsel %vm1776, %v3565, 0
        %v3587 = vsel %vm1776, %v3566, 0
        %v3590 = vsel %vm1776, %v3567, 0
        %v3593 = vsel %vm1776, %v3568, 0
        %v3596 = vsel %vm1776, %v3569, 0
        %v3599 = vsel %vm1776, %v3570, 0
        %v3602 = vsel %vm1776, %v3571, 0
        %v3605 = vsel %vm1776, %v3572, 0
        %v3608 = vsel %vm1776, %v3573, 0
        %v3611 = vsel %vm1776, %v3574, 0
        %v3614 = vsel %vm1776, %v3575, 0
        %v3617 = vsel %vm1776, %v3576, 0
        %v3620 = vsel %vm1776, %v3577, 0
        %v3623 = vsel %vm1776, %v3578, 0
        %v3626 = vsel %vm1776, %v3579, 0
        %v3629 = vsel %vm1825, %v3147, 0
        %3631 = vmatprep.subr.bf16.mxu0 0
        %3632 = vmatpush1.bf16.msra.mxu0 0
        %3633 = vmatprep.subr.bf16.mxu0 0
        %3634 = vmatpush1.bf16.msra.mxu0 0
        %3635 = vmatprep.subr.bf16.mxu0 0
        %3636 = vmatpush1.bf16.msra.mxu0 0
        %3637 = vmatprep.subr.bf16.mxu0 0
        %3638 = vmatpush1.bf16.msra.mxu0 0
        %3639 = vmatprep.subr.bf16.mxu0 0
        %3640 = vmatpush1.bf16.msra.mxu0 0
        %3641 = vmatprep.subr.bf16.mxu0 0
        %3642 = vmatpush1.bf16.msra.mxu0 0
        %3643 = vmatprep.subr.bf16.mxu0 0
        %3644 = vmatpush1.bf16.msra.mxu0 0
        %3645 = vmatprep.subr.bf16.mxu0 0
        %3646 = vmatpush1.bf16.msra.mxu0 %v3629
        %3647 = vmatprep.subr.bf16.mxu0 0
        %3648 = vmatpush2.bf16.msra.mxu0 0
        %3649 = vmatprep.subr.bf16.mxu0 0
        %3650 = vmatpush2.bf16.msra.mxu0 0
        %3651 = vmatprep.subr.bf16.mxu0 0
        %3652 = vmatpush2.bf16.msra.mxu0 0
        %3653 = vmatprep.subr.bf16.mxu0 0
        %3654 = vmatpush2.bf16.msra.mxu0 0
        %3655 = vmatprep.subr.bf16.mxu0 0
        %3656 = vmatpush2.bf16.msra.mxu0 0
        %3657 = vmatprep.subr.bf16.mxu0 0
        %3658 = vmatpush2.bf16.msra.mxu0 0
        %3659 = vmatprep.subr.bf16.mxu0 0
        %3660 = vmatpush2.bf16.msra.mxu0 0
        %3661 = vmatprep.subr.bf16.mxu0 0
        %3662 = vmatpush2.bf16.msra.mxu0 0
        %3663 = vmatprep.mubr.bf16.mxu0 0
        %3664 = vmatmul.mubr.bf16.gmra.mxu0 %v3581
        %v3665 = vpop.f32.mrf.mxu0
        %v3666 = vadd.f32 0.0, %v3665
        %v3667 = vpop.f32.mrf.mxu0
        %v3668 = vpop.f32.mrf.mxu0
        %v3669 = vadd.f32 0.0, %v3668
        %v3670 = vpop.f32.mrf.mxu0
        %3671 = vmatprep.mubr.bf16.mxu0 0
        %3672 = vmatmul.mubr.bf16.gmra.mxu0 %v3584
        %v3673 = vpop.f32.mrf.mxu0
        %v3674 = vadd.f32 0.0, %v3673
        %v3675 = vpop.f32.mrf.mxu0
        %v3676 = vpop.f32.mrf.mxu0
        %v3677 = vadd.f32 0.0, %v3676
        %v3678 = vpop.f32.mrf.mxu0
        %3679 = vmatprep.mubr.bf16.mxu0 0
        %3680 = vmatmul.mubr.bf16.gmra.mxu0 %v3587
        %v3681 = vpop.f32.mrf.mxu0
        %v3682 = vadd.f32 0.0, %v3681
        %v3683 = vpop.f32.mrf.mxu0
        %v3684 = vpop.f32.mrf.mxu0
        %v3685 = vadd.f32 0.0, %v3684
        %v3686 = vpop.f32.mrf.mxu0
        %3687 = vmatprep.mubr.bf16.mxu0 0
        %3688 = vmatmul.mubr.bf16.gmra.mxu0 %v3590
        %v3689 = vpop.f32.mrf.mxu0
        %v3690 = vadd.f32 0.0, %v3689
        %v3691 = vpop.f32.mrf.mxu0
        %v3692 = vpop.f32.mrf.mxu0
        %v3693 = vadd.f32 0.0, %v3692
        %v3694 = vpop.f32.mrf.mxu0
        %3695 = vmatprep.mubr.bf16.mxu0 0
        %3696 = vmatmul.mubr.bf16.gmra.mxu0 %v3593
        %v3697 = vpop.f32.mrf.mxu0
        %v3698 = vadd.f32 0.0, %v3697
        %v3699 = vpop.f32.mrf.mxu0
        %v3700 = vpop.f32.mrf.mxu0
        %v3701 = vadd.f32 0.0, %v3700
        %v3702 = vpop.f32.mrf.mxu0
        %3703 = vmatprep.mubr.bf16.mxu0 0
        %3704 = vmatmul.mubr.bf16.gmra.mxu0 %v3596
        %v3705 = vpop.f32.mrf.mxu0
        %v3706 = vadd.f32 0.0, %v3705
        %v3707 = vpop.f32.mrf.mxu0
        %v3708 = vpop.f32.mrf.mxu0
        %v3709 = vadd.f32 0.0, %v3708
        %v3710 = vpop.f32.mrf.mxu0
        %3711 = vmatprep.mubr.bf16.mxu0 0
        %3712 = vmatmul.mubr.bf16.gmra.mxu0 %v3599
        %v3713 = vpop.f32.mrf.mxu0
        %v3714 = vadd.f32 0.0, %v3713
        %v3715 = vpop.f32.mrf.mxu0
        %v3716 = vpop.f32.mrf.mxu0
        %v3717 = vadd.f32 0.0, %v3716
        %v3718 = vpop.f32.mrf.mxu0
        %3719 = vmatprep.mubr.bf16.mxu0 0
        %3720 = vmatmul.mubr.bf16.gmra.mxu0 %v3602
        %v3721 = vpop.f32.mrf.mxu0
        %v3722 = vadd.f32 0.0, %v3721
        %v3723 = vpop.f32.mrf.mxu0
        %v3724 = vpop.f32.mrf.mxu0
        %v3725 = vadd.f32 0.0, %v3724
        %v3726 = vpop.f32.mrf.mxu0
        %3727 = vmatprep.mubr.bf16.mxu0 0
        %3728 = vmatmul.mubr.bf16.gmra.mxu0 %v3605
        %v3729 = vpop.f32.mrf.mxu0
        %v3730 = vadd.f32 0.0, %v3729
        %v3731 = vpop.f32.mrf.mxu0
        %v3732 = vpop.f32.mrf.mxu0
        %v3733 = vadd.f32 0.0, %v3732
        %v3734 = vpop.f32.mrf.mxu0
        %3735 = vmatprep.mubr.bf16.mxu0 0
        %3736 = vmatmul.mubr.bf16.gmra.mxu0 %v3608
        %v3737 = vpop.f32.mrf.mxu0
        %v3738 = vadd.f32 0.0, %v3737
        %v3739 = vpop.f32.mrf.mxu0
        %v3740 = vpop.f32.mrf.mxu0
        %v3741 = vadd.f32 0.0, %v3740
        %v3742 = vpop.f32.mrf.mxu0
        %3743 = vmatprep.mubr.bf16.mxu0 0
        %3744 = vmatmul.mubr.bf16.gmra.mxu0 %v3611
        %v3745 = vpop.f32.mrf.mxu0
        %v3746 = vadd.f32 0.0, %v3745
        %v3747 = vpop.f32.mrf.mxu0
        %v3748 = vpop.f32.mrf.mxu0
        %v3749 = vadd.f32 0.0, %v3748
        %v3750 = vpop.f32.mrf.mxu0
        %3751 = vmatprep.mubr.bf16.mxu0 0
        %3752 = vmatmul.mubr.bf16.gmra.mxu0 %v3614
        %v3753 = vpop.f32.mrf.mxu0
        %v3754 = vadd.f32 0.0, %v3753
        %v3755 = vpop.f32.mrf.mxu0
        %v3756 = vpop.f32.mrf.mxu0
        %v3757 = vadd.f32 0.0, %v3756
        %v3758 = vpop.f32.mrf.mxu0
        %3759 = vmatprep.mubr.bf16.mxu0 0
        %3760 = vmatmul.mubr.bf16.gmra.mxu0 %v3617
        %v3761 = vpop.f32.mrf.mxu0
        %v3762 = vadd.f32 0.0, %v3761
        %v3763 = vpop.f32.mrf.mxu0
        %v3764 = vpop.f32.mrf.mxu0
        %v3765 = vadd.f32 0.0, %v3764
        %v3766 = vpop.f32.mrf.mxu0
        %3767 = vmatprep.mubr.bf16.mxu0 0
        %3768 = vmatmul.mubr.bf16.gmra.mxu0 %v3620
        %v3769 = vpop.f32.mrf.mxu0
        %v3770 = vadd.f32 0.0, %v3769
        %v3771 = vpop.f32.mrf.mxu0
        %v3772 = vpop.f32.mrf.mxu0
        %v3773 = vadd.f32 0.0, %v3772
        %v3774 = vpop.f32.mrf.mxu0
        %3775 = vmatprep.mubr.bf16.mxu0 0
        %3776 = vmatmul.mubr.bf16.gmra.mxu0 %v3623
        %v3777 = vpop.f32.mrf.mxu0
        %v3778 = vadd.f32 0.0, %v3777
        %v3779 = vpop.f32.mrf.mxu0
        %v3780 = vpop.f32.mrf.mxu0
        %v3781 = vadd.f32 0.0, %v3780
        %v3782 = vpop.f32.mrf.mxu0
        %3783 = vmatprep.mubr.bf16.mxu0 0
        %3784 = vmatmul.mubr.bf16.gmra.mxu0 %v3626
        %v3785 = vpop.f32.mrf.mxu0
        %v3786 = vadd.f32 0.0, %v3785
        %v3787 = vpop.f32.mrf.mxu0
        %v3788 = vpop.f32.mrf.mxu0
        %v3789 = vadd.f32 0.0, %v3788
        %v3790 = vpop.f32.mrf.mxu0
        %3791 = vdwg.mxu0
        %v3792 = vadd.f32 %v3067, %v3666
        %v3793 = vadd.f32 %v3068, %v3669
        %v3794 = vadd.f32 %v3069, %v3674
        %v3795 = vadd.f32 %v3070, %v3677
        %v3796 = vadd.f32 %v3071, %v3682
        %v3797 = vadd.f32 %v3072, %v3685
        %v3798 = vadd.f32 %v3073, %v3690
        %v3799 = vadd.f32 %v3074, %v3693
        %v3800 = vadd.f32 %v3075, %v3698
        %v3801 = vadd.f32 %v3076, %v3701
        %v3802 = vadd.f32 %v3077, %v3706
        %v3803 = vadd.f32 %v3078, %v3709
        %v3804 = vadd.f32 %v3079, %v3714
        %v3805 = vadd.f32 %v3080, %v3717
        %v3806 = vadd.f32 %v3081, %v3722
        %v3807 = vadd.f32 %v3082, %v3725
        %v3808 = vadd.f32 %v3083, %v3730
        %v3809 = vadd.f32 %v3084, %v3733
        %v3810 = vadd.f32 %v3085, %v3738
        %v3811 = vadd.f32 %v3086, %v3741
        %v3812 = vadd.f32 %v3087, %v3746
        %v3813 = vadd.f32 %v3088, %v3749
        %v3814 = vadd.f32 %v3089, %v3754
        %v3815 = vadd.f32 %v3090, %v3757
        %v3816 = vadd.f32 %v3091, %v3762
        %v3817 = vadd.f32 %v3092, %v3765
        %v3818 = vadd.f32 %v3093, %v3770
        %v3819 = vadd.f32 %v3094, %v3773
        %v3820 = vadd.f32 %v3095, %v3778
        %v3821 = vadd.f32 %v3096, %v3781
        %v3822 = vadd.f32 %v3097, %v3786
        %v3823 = vadd.f32 %v3098, %v3789
        %v3824 = vld [vmem:[%s653] sm:$0xe]
        %v3825 = vld [vmem:[%s653 + $0xc] sm:$0xe]
        %v3826 = vld [vmem:[%s653 + $0x18] sm:$0xe]
        %v3827 = vld [vmem:[%s653 + $0x24] sm:$0xe]
        %v3828 = vld [vmem:[%s653 + $0x30] sm:$0xe]
        %v3829 = vld [vmem:[%s653 + $0x3c] sm:$0xe]
        %v3830 = vld [vmem:[%s653 + $0x48] sm:$0xe]
        %v3831 = vld [vmem:[%s653 + $0x54] sm:$0xe]
        %v3832 = vld [vmem:[%s653 + $0x60] sm:$0xe]
        %v3833 = vld [vmem:[%s653 + $0x6c] sm:$0xe]
        %v3834 = vld [vmem:[%s653 + $0x78] sm:$0xe]
        %v3835 = vld [vmem:[%s653 + $0x84] sm:$0xe]
        %v3836 = vld [vmem:[%s653 + $0x90] sm:$0xe]
        %v3837 = vld [vmem:[%s653 + $0x9c] sm:$0xe]
        %v3838 = vld [vmem:[%s653 + $0xa8] sm:$0xe]
        %v3839 = vld [vmem:[%s653 + $0xb4] sm:$0xe]
        %v3840 = vld [vmem:[%s2 + $0x8] sm:$0xc]
        %v3889 = vrot.slane %v3824, 5
        %v3890 = vrot.slane %v3889, 4
        %v3891 = vrot.slane %v3100, 5
        %v3892 = vsel %vm2333, %v3890, %v3891
        %v3893 = vrot.slane %v3891, 4
        %v3894 = vrot.slane %v3101, 5
        %v3895 = vsel %vm2333, %v3893, %v3894
        %v3896 = vrot.slane %v3825, 5
        %v3897 = vrot.slane %v3896, 4
        %v3898 = vrot.slane %v3103, 5
        %v3899 = vsel %vm2333, %v3897, %v3898
        %v3900 = vrot.slane %v3898, 4
        %v3901 = vrot.slane %v3104, 5
        %v3902 = vsel %vm2333, %v3900, %v3901
        %v3903 = vrot.slane %v3826, 5
        %v3904 = vrot.slane %v3903, 4
        %v3905 = vrot.slane %v3106, 5
        %v3906 = vsel %vm2333, %v3904, %v3905
        %v3907 = vrot.slane %v3905, 4
        %v3908 = vrot.slane %v3107, 5
        %v3909 = vsel %vm2333, %v3907, %v3908
        %v3910 = vrot.slane %v3827, 5
        %v3911 = vrot.slane %v3910, 4
        %v3912 = vrot.slane %v3109, 5
        %v3913 = vsel %vm2333, %v3911, %v3912
        %v3914 = vrot.slane %v3912, 4
        %v3915 = vrot.slane %v3110, 5
        %v3916 = vsel %vm2333, %v3914, %v3915
        %v3917 = vrot.slane %v3828, 5
        %v3918 = vrot.slane %v3917, 4
        %v3919 = vrot.slane %v3112, 5
        %v3920 = vsel %vm2333, %v3918, %v3919
        %v3921 = vrot.slane %v3919, 4
        %v3922 = vrot.slane %v3113, 5
        %v3923 = vsel %vm2333, %v3921, %v3922
        %v3924 = vrot.slane %v3829, 5
        %v3925 = vrot.slane %v3924, 4
        %v3926 = vrot.slane %v3115, 5
        %v3927 = vsel %vm2333, %v3925, %v3926
        %v3928 = vrot.slane %v3926, 4
        %v3929 = vrot.slane %v3116, 5
        %v3930 = vsel %vm2333, %v3928, %v3929
        %v3931 = vrot.slane %v3830, 5
        %v3932 = vrot.slane %v3931, 4
        %v3933 = vrot.slane %v3118, 5
        %v3934 = vsel %vm2333, %v3932, %v3933
        %v3935 = vrot.slane %v3933, 4
        %v3936 = vrot.slane %v3119, 5
        %v3937 = vsel %vm2333, %v3935, %v3936
        %v3938 = vrot.slane %v3831, 5
        %v3939 = vrot.slane %v3938, 4
        %v3940 = vrot.slane %v3121, 5
        %v3941 = vsel %vm2333, %v3939, %v3940
        %v3942 = vrot.slane %v3940, 4
        %v3943 = vrot.slane %v3122, 5
        %v3944 = vsel %vm2333, %v3942, %v3943
        %v3945 = vrot.slane %v3832, 5
        %v3946 = vrot.slane %v3945, 4
        %v3947 = vrot.slane %v3124, 5
        %v3948 = vsel %vm2333, %v3946, %v3947
        %v3949 = vrot.slane %v3947, 4
        %v3950 = vrot.slane %v3125, 5
        %v3951 = vsel %vm2333, %v3949, %v3950
        %v3952 = vrot.slane %v3833, 5
        %v3953 = vrot.slane %v3952, 4
        %v3954 = vrot.slane %v3127, 5
        %v3955 = vsel %vm2333, %v3953, %v3954
        %v3956 = vrot.slane %v3954, 4
        %v3957 = vrot.slane %v3128, 5
        %v3958 = vsel %vm2333, %v3956, %v3957
        %v3959 = vrot.slane %v3834, 5
        %v3960 = vrot.slane %v3959, 4
        %v3961 = vrot.slane %v3130, 5
        %v3962 = vsel %vm2333, %v3960, %v3961
        %v3963 = vrot.slane %v3961, 4
        %v3964 = vrot.slane %v3131, 5
        %v3965 = vsel %vm2333, %v3963, %v3964
        %v3966 = vrot.slane %v3835, 5
        %v3967 = vrot.slane %v3966, 4
        %v3968 = vrot.slane %v3133, 5
        %v3969 = vsel %vm2333, %v3967, %v3968
        %v3970 = vrot.slane %v3968, 4
        %v3971 = vrot.slane %v3134, 5
        %v3972 = vsel %vm2333, %v3970, %v3971
        %v3973 = vrot.slane %v3836, 5
        %v3974 = vrot.slane %v3973, 4
        %v3975 = vrot.slane %v3136, 5
        %v3976 = vsel %vm2333, %v3974, %v3975
        %v3977 = vrot.slane %v3975, 4
        %v3978 = vrot.slane %v3137, 5
        %v3979 = vsel %vm2333, %v3977, %v3978
        %v3980 = vrot.slane %v3837, 5
        %v3981 = vrot.slane %v3980, 4
        %v3982 = vrot.slane %v3139, 5
        %v3983 = vsel %vm2333, %v3981, %v3982
        %v3984 = vrot.slane %v3982, 4
        %v3985 = vrot.slane %v3140, 5
        %v3986 = vsel %vm2333, %v3984, %v3985
        %v3987 = vrot.slane %v3838, 5
        %v3988 = vrot.slane %v3987, 4
        %v3989 = vrot.slane %v3142, 5
        %v3990 = vsel %vm2333, %v3988, %v3989
        %v3991 = vrot.slane %v3989, 4
        %v3992 = vrot.slane %v3143, 5
        %v3993 = vsel %vm2333, %v3991, %v3992
        %v3994 = vrot.slane %v3839, 5
        %v3995 = vrot.slane %v3994, 4
        %v3996 = vrot.slane %v3145, 5
        %v3997 = vsel %vm2333, %v3995, %v3996
        %v3998 = vrot.slane %v3996, 4
        %v3999 = vrot.slane %v3146, 5
        %v4000 = vsel %vm2333, %v3998, %v3999
        %v4001 = vunpack.c.l.b16 %v3892
        %v4002 = vunpack.c.l.b16 %v3895
        %v4003 = vunpack.c.l.b16 %v3899
        %v4004 = vunpack.c.l.b16 %v3902
        %v4005 = vunpack.c.l.b16 %v3906
        %v4006 = vunpack.c.l.b16 %v3909
        %v4007 = vunpack.c.l.b16 %v3913
        %v4008 = vunpack.c.l.b16 %v3916
        %v4009 = vunpack.c.l.b16 %v3920
        %v4010 = vunpack.c.l.b16 %v3923
        %v4011 = vunpack.c.l.b16 %v3927
        %v4012 = vunpack.c.l.b16 %v3930
        %v4013 = vunpack.c.l.b16 %v3934
        %v4014 = vunpack.c.l.b16 %v3937
        %v4015 = vunpack.c.l.b16 %v3941
        %v4016 = vunpack.c.l.b16 %v3944
        %v4017 = vunpack.c.l.b16 %v3948
        %v4018 = vunpack.c.l.b16 %v3951
        %v4019 = vunpack.c.l.b16 %v3955
        %v4020 = vunpack.c.l.b16 %v3958
        %v4021 = vunpack.c.l.b16 %v3962
        %v4022 = vunpack.c.l.b16 %v3965
        %v4023 = vunpack.c.l.b16 %v3969
        %v4024 = vunpack.c.l.b16 %v3972
        %v4025 = vunpack.c.l.b16 %v3976
        %v4026 = vunpack.c.l.b16 %v3979
        %v4027 = vunpack.c.l.b16 %v3983
        %v4028 = vunpack.c.l.b16 %v3986
        %v4029 = vunpack.c.l.b16 %v3990
        %v4030 = vunpack.c.l.b16 %v3993
        %v4031 = vunpack.c.l.b16 %v3997
        %v4032 = vunpack.c.l.b16 %v4000
        %v4033 = vpack.c.b16 %v4002, %v4001
        %v4034 = vpack.c.b16 %v4004, %v4003
        %v4035 = vpack.c.b16 %v4006, %v4005
        %v4036 = vpack.c.b16 %v4008, %v4007
        %v4037 = vpack.c.b16 %v4010, %v4009
        %v4038 = vpack.c.b16 %v4012, %v4011
        %v4039 = vpack.c.b16 %v4014, %v4013
        %v4040 = vpack.c.b16 %v4016, %v4015
        %v4041 = vpack.c.b16 %v4018, %v4017
        %v4042 = vpack.c.b16 %v4020, %v4019
        %v4043 = vpack.c.b16 %v4022, %v4021
        %v4044 = vpack.c.b16 %v4024, %v4023
        %v4045 = vpack.c.b16 %v4026, %v4025
        %v4046 = vpack.c.b16 %v4028, %v4027
        %v4047 = vpack.c.b16 %v4030, %v4029
        %v4048 = vpack.c.b16 %v4032, %v4031
        %v4050 = vunpack.c.l.b16 %v3840
        %v4051 = vpack.c.b16 %v4050, %v4050
        %v4052 = vrot.slane %v4051, 2
        %v4054 = vsel %vm1776, %v4033, 0
        %v4057 = vsel %vm1776, %v4034, 0
        %v4060 = vsel %vm1776, %v4035, 0
        %v4063 = vsel %vm1776, %v4036, 0
        %v4066 = vsel %vm1776, %v4037, 0
        %v4069 = vsel %vm1776, %v4038, 0
        %v4072 = vsel %vm1776, %v4039, 0
        %v4075 = vsel %vm1776, %v4040, 0
        %v4078 = vsel %vm1776, %v4041, 0
        %v4081 = vsel %vm1776, %v4042, 0
        %v4084 = vsel %vm1776, %v4043, 0
        %v4087 = vsel %vm1776, %v4044, 0
        %v4090 = vsel %vm1776, %v4045, 0
        %v4093 = vsel %vm1776, %v4046, 0
        %v4096 = vsel %vm1776, %v4047, 0
        %v4099 = vsel %vm1776, %v4048, 0
        %v4102 = vsel %vm1825, %v4052, 0
        %4104 = vmatprep.subr.bf16.mxu0 0
        %4105 = vmatpush1.bf16.msra.mxu0 0
        %4106 = vmatprep.subr.bf16.mxu0 0
        %4107 = vmatpush1.bf16.msra.mxu0 0
        %4108 = vmatprep.subr.bf16.mxu0 0
        %4109 = vmatpush1.bf16.msra.mxu0 0
        %4110 = vmatprep.subr.bf16.mxu0 0
        %4111 = vmatpush1.bf16.msra.mxu0 0
        %4112 = vmatprep.subr.bf16.mxu0 0
        %4113 = vmatpush1.bf16.msra.mxu0 0
        %4114 = vmatprep.subr.bf16.mxu0 0
        %4115 = vmatpush1.bf16.msra.mxu0 0
        %4116 = vmatprep.subr.bf16.mxu0 0
        %4117 = vmatpush1.bf16.msra.mxu0 0
        %4118 = vmatprep.subr.bf16.mxu0 0
        %4119 = vmatpush1.bf16.msra.mxu0 %v4102
        %4120 = vmatprep.subr.bf16.mxu0 0
        %4121 = vmatpush2.bf16.msra.mxu0 0
        %4122 = vmatprep.subr.bf16.mxu0 0
        %4123 = vmatpush2.bf16.msra.mxu0 0
        %4124 = vmatprep.subr.bf16.mxu0 0
        %4125 = vmatpush2.bf16.msra.mxu0 0
        %4126 = vmatprep.subr.bf16.mxu0 0
        %4127 = vmatpush2.bf16.msra.mxu0 0
        %4128 = vmatprep.subr.bf16.mxu0 0
        %4129 = vmatpush2.bf16.msra.mxu0 0
        %4130 = vmatprep.subr.bf16.mxu0 0
        %4131 = vmatpush2.bf16.msra.mxu0 0
        %4132 = vmatprep.subr.bf16.mxu0 0
        %4133 = vmatpush2.bf16.msra.mxu0 0
        %4134 = vmatprep.subr.bf16.mxu0 0
        %4135 = vmatpush2.bf16.msra.mxu0 0
        %4136 = vmatprep.mubr.bf16.mxu0 0
        %4137 = vmatmul.mubr.bf16.gmra.mxu0 %v4054
        %v4138 = vpop.f32.mrf.mxu0
        %v4139 = vadd.f32 0.0, %v4138
        %v4140 = vpop.f32.mrf.mxu0
        %v4141 = vpop.f32.mrf.mxu0
        %v4142 = vadd.f32 0.0, %v4141
        %v4143 = vpop.f32.mrf.mxu0
        %4144 = vmatprep.mubr.bf16.mxu0 0
        %4145 = vmatmul.mubr.bf16.gmra.mxu0 %v4057
        %v4146 = vpop.f32.mrf.mxu0
        %v4147 = vadd.f32 0.0, %v4146
        %v4148 = vpop.f32.mrf.mxu0
        %v4149 = vpop.f32.mrf.mxu0
        %v4150 = vadd.f32 0.0, %v4149
        %v4151 = vpop.f32.mrf.mxu0
        %4152 = vmatprep.mubr.bf16.mxu0 0
        %4153 = vmatmul.mubr.bf16.gmra.mxu0 %v4060
        %v4154 = vpop.f32.mrf.mxu0
        %v4155 = vadd.f32 0.0, %v4154
        %v4156 = vpop.f32.mrf.mxu0
        %v4157 = vpop.f32.mrf.mxu0
        %v4158 = vadd.f32 0.0, %v4157
        %v4159 = vpop.f32.mrf.mxu0
        %4160 = vmatprep.mubr.bf16.mxu0 0
        %4161 = vmatmul.mubr.bf16.gmra.mxu0 %v4063
        %v4162 = vpop.f32.mrf.mxu0
        %v4163 = vadd.f32 0.0, %v4162
        %v4164 = vpop.f32.mrf.mxu0
        %v4165 = vpop.f32.mrf.mxu0
        %v4166 = vadd.f32 0.0, %v4165
        %v4167 = vpop.f32.mrf.mxu0
        %4168 = vmatprep.mubr.bf16.mxu0 0
        %4169 = vmatmul.mubr.bf16.gmra.mxu0 %v4066
        %v4170 = vpop.f32.mrf.mxu0
        %v4171 = vadd.f32 0.0, %v4170
        %v4172 = vpop.f32.mrf.mxu0
        %v4173 = vpop.f32.mrf.mxu0
        %v4174 = vadd.f32 0.0, %v4173
        %v4175 = vpop.f32.mrf.mxu0
        %4176 = vmatprep.mubr.bf16.mxu0 0
        %4177 = vmatmul.mubr.bf16.gmra.mxu0 %v4069
        %v4178 = vpop.f32.mrf.mxu0
        %v4179 = vadd.f32 0.0, %v4178
        %v4180 = vpop.f32.mrf.mxu0
        %v4181 = vpop.f32.mrf.mxu0
        %v4182 = vadd.f32 0.0, %v4181
        %v4183 = vpop.f32.mrf.mxu0
        %4184 = vmatprep.mubr.bf16.mxu0 0
        %4185 = vmatmul.mubr.bf16.gmra.mxu0 %v4072
        %v4186 = vpop.f32.mrf.mxu0
        %v4187 = vadd.f32 0.0, %v4186
        %v4188 = vpop.f32.mrf.mxu0
        %v4189 = vpop.f32.mrf.mxu0
        %v4190 = vadd.f32 0.0, %v4189
        %v4191 = vpop.f32.mrf.mxu0
        %4192 = vmatprep.mubr.bf16.mxu0 0
        %4193 = vmatmul.mubr.bf16.gmra.mxu0 %v4075
        %v4194 = vpop.f32.mrf.mxu0
        %v4195 = vadd.f32 0.0, %v4194
        %v4196 = vpop.f32.mrf.mxu0
        %v4197 = vpop.f32.mrf.mxu0
        %v4198 = vadd.f32 0.0, %v4197
        %v4199 = vpop.f32.mrf.mxu0
        %4200 = vmatprep.mubr.bf16.mxu0 0
        %4201 = vmatmul.mubr.bf16.gmra.mxu0 %v4078
        %v4202 = vpop.f32.mrf.mxu0
        %v4203 = vadd.f32 0.0, %v4202
        %v4204 = vpop.f32.mrf.mxu0
        %v4205 = vpop.f32.mrf.mxu0
        %v4206 = vadd.f32 0.0, %v4205
        %v4207 = vpop.f32.mrf.mxu0
        %4208 = vmatprep.mubr.bf16.mxu0 0
        %4209 = vmatmul.mubr.bf16.gmra.mxu0 %v4081
        %v4210 = vpop.f32.mrf.mxu0
        %v4211 = vadd.f32 0.0, %v4210
        %v4212 = vpop.f32.mrf.mxu0
        %v4213 = vpop.f32.mrf.mxu0
        %v4214 = vadd.f32 0.0, %v4213
        %v4215 = vpop.f32.mrf.mxu0
        %4216 = vmatprep.mubr.bf16.mxu0 0
        %4217 = vmatmul.mubr.bf16.gmra.mxu0 %v4084
        %v4218 = vpop.f32.mrf.mxu0
        %v4219 = vadd.f32 0.0, %v4218
        %v4220 = vpop.f32.mrf.mxu0
        %v4221 = vpop.f32.mrf.mxu0
        %v4222 = vadd.f32 0.0, %v4221
        %v4223 = vpop.f32.mrf.mxu0
        %4224 = vmatprep.mubr.bf16.mxu0 0
        %4225 = vmatmul.mubr.bf16.gmra.mxu0 %v4087
        %v4226 = vpop.f32.mrf.mxu0
        %v4227 = vadd.f32 0.0, %v4226
        %v4228 = vpop.f32.mrf.mxu0
        %v4229 = vpop.f32.mrf.mxu0
        %v4230 = vadd.f32 0.0, %v4229
        %v4231 = vpop.f32.mrf.mxu0
        %4232 = vmatprep.mubr.bf16.mxu0 0
        %4233 = vmatmul.mubr.bf16.gmra.mxu0 %v4090
        %v4234 = vpop.f32.mrf.mxu0
        %v4235 = vadd.f32 0.0, %v4234
        %v4236 = vpop.f32.mrf.mxu0
        %v4237 = vpop.f32.mrf.mxu0
        %v4238 = vadd.f32 0.0, %v4237
        %v4239 = vpop.f32.mrf.mxu0
        %4240 = vmatprep.mubr.bf16.mxu0 0
        %4241 = vmatmul.mubr.bf16.gmra.mxu0 %v4093
        %v4242 = vpop.f32.mrf.mxu0
        %v4243 = vadd.f32 0.0, %v4242
        %v4244 = vpop.f32.mrf.mxu0
        %v4245 = vpop.f32.mrf.mxu0
        %v4246 = vadd.f32 0.0, %v4245
        %v4247 = vpop.f32.mrf.mxu0
        %4248 = vmatprep.mubr.bf16.mxu0 0
        %4249 = vmatmul.mubr.bf16.gmra.mxu0 %v4096
        %v4250 = vpop.f32.mrf.mxu0
        %v4251 = vadd.f32 0.0, %v4250
        %v4252 = vpop.f32.mrf.mxu0
        %v4253 = vpop.f32.mrf.mxu0
        %v4254 = vadd.f32 0.0, %v4253
        %v4255 = vpop.f32.mrf.mxu0
        %4256 = vmatprep.mubr.bf16.mxu0 0
        %4257 = vmatmul.mubr.bf16.gmra.mxu0 %v4099
        %v4258 = vpop.f32.mrf.mxu0
        %v4259 = vadd.f32 0.0, %v4258
        %v4260 = vpop.f32.mrf.mxu0
        %v4261 = vpop.f32.mrf.mxu0
        %v4262 = vadd.f32 0.0, %v4261
        %v4263 = vpop.f32.mrf.mxu0
        %4264 = vdwg.mxu0
        %v4265 = vadd.f32 %v3792, %v4139
        %v4266 = vadd.f32 %v3793, %v4142
        %v4267 = vadd.f32 %v3794, %v4147
        %v4268 = vadd.f32 %v3795, %v4150
        %v4269 = vadd.f32 %v3796, %v4155
        %v4270 = vadd.f32 %v3797, %v4158
        %v4271 = vadd.f32 %v3798, %v4163
        %v4272 = vadd.f32 %v3799, %v4166
        %v4273 = vadd.f32 %v3800, %v4171
        %v4274 = vadd.f32 %v3801, %v4174
        %v4275 = vadd.f32 %v3802, %v4179
        %v4276 = vadd.f32 %v3803, %v4182
        %v4277 = vadd.f32 %v3804, %v4187
        %v4278 = vadd.f32 %v3805, %v4190
        %v4279 = vadd.f32 %v3806, %v4195
        %v4280 = vadd.f32 %v3807, %v4198
        %v4281 = vadd.f32 %v3808, %v4203
        %v4282 = vadd.f32 %v3809, %v4206
        %v4283 = vadd.f32 %v3810, %v4211
        %v4284 = vadd.f32 %v3811, %v4214
        %v4285 = vadd.f32 %v3812, %v4219
        %v4286 = vadd.f32 %v3813, %v4222
        %v4287 = vadd.f32 %v3814, %v4227
        %v4288 = vadd.f32 %v3815, %v4230
        %v4289 = vadd.f32 %v3816, %v4235
        %v4290 = vadd.f32 %v3817, %v4238
        %v4291 = vadd.f32 %v3818, %v4243
        %v4292 = vadd.f32 %v3819, %v4246
        %v4293 = vadd.f32 %v3820, %v4251
        %v4294 = vadd.f32 %v3821, %v4254
        %v4295 = vadd.f32 %v3822, %v4259
        %v4296 = vadd.f32 %v3823, %v4262
        %s4297 = scalar_lea.vmem [#allocation2], 24
        %v4298 = vld [vmem:[%s4297] sm:$0xf]
        %v4299 = vld [vmem:[%s4297 + $0x4] sm:$0xf]
        %v4300 = vld [vmem:[%s4297 + $0xc] sm:$0xf]
        %v4301 = vld [vmem:[%s4297 + $0x10] sm:$0xf]
        %v4302 = vld [vmem:[%s4297 + $0x18] sm:$0xf]
        %v4303 = vld [vmem:[%s4297 + $0x1c] sm:$0xf]
        %v4304 = vld [vmem:[%s4297 + $0x24] sm:$0xf]
        %v4305 = vld [vmem:[%s4297 + $0x28] sm:$0xf]
        %v4306 = vld [vmem:[%s4297 + $0x30] sm:$0xf]
        %v4307 = vld [vmem:[%s4297 + $0x34] sm:$0xf]
        %v4308 = vld [vmem:[%s4297 + $0x3c] sm:$0xf]
        %v4309 = vld [vmem:[%s4297 + $0x40] sm:$0xf]
        %v4310 = vld [vmem:[%s4297 + $0x48] sm:$0xf]
        %v4311 = vld [vmem:[%s4297 + $0x4c] sm:$0xf]
        %v4312 = vld [vmem:[%s4297 + $0x54] sm:$0xf]
        %v4313 = vld [vmem:[%s4297 + $0x58] sm:$0xf]
        %v4314 = vld [vmem:[%s4297 + $0x60] sm:$0xf]
        %v4315 = vld [vmem:[%s4297 + $0x64] sm:$0xf]
        %v4316 = vld [vmem:[%s4297 + $0x6c] sm:$0xf]
        %v4317 = vld [vmem:[%s4297 + $0x70] sm:$0xf]
        %v4318 = vld [vmem:[%s4297 + $0x78] sm:$0xf]
        %v4319 = vld [vmem:[%s4297 + $0x7c] sm:$0xf]
        %v4320 = vld [vmem:[%s4297 + $0x84] sm:$0xf]
        %v4321 = vld [vmem:[%s4297 + $0x88] sm:$0xf]
        %v4322 = vld [vmem:[%s4297 + $0x90] sm:$0xf]
        %v4323 = vld [vmem:[%s4297 + $0x94] sm:$0xf]
        %v4324 = vld [vmem:[%s4297 + $0x9c] sm:$0xf]
        %v4325 = vld [vmem:[%s4297 + $0xa0] sm:$0xf]
        %v4326 = vld [vmem:[%s4297 + $0xa8] sm:$0xf]
        %v4327 = vld [vmem:[%s4297 + $0xac] sm:$0xf]
        %v4328 = vld [vmem:[%s4297 + $0xb4] sm:$0xf]
        %v4329 = vld [vmem:[%s4297 + $0xb8] sm:$0xf]
        %v4330 = vld [vmem:[%s2 + $0xc] sm:$0x3]
        %v4363 = vunpack.c.l.b16 %v4298
        %v4364 = vunpack.c.l.b16 %v4299
        %v4365 = vunpack.c.l.b16 %v4300
        %v4366 = vunpack.c.l.b16 %v4301
        %v4367 = vunpack.c.l.b16 %v4302
        %v4368 = vunpack.c.l.b16 %v4303
        %v4369 = vunpack.c.l.b16 %v4304
        %v4370 = vunpack.c.l.b16 %v4305
        %v4371 = vunpack.c.l.b16 %v4306
        %v4372 = vunpack.c.l.b16 %v4307
        %v4373 = vunpack.c.l.b16 %v4308
        %v4374 = vunpack.c.l.b16 %v4309
        %v4375 = vunpack.c.l.b16 %v4310
        %v4376 = vunpack.c.l.b16 %v4311
        %v4377 = vunpack.c.l.b16 %v4312
        %v4378 = vunpack.c.l.b16 %v4313
        %v4379 = vunpack.c.l.b16 %v4314
        %v4380 = vunpack.c.l.b16 %v4315
        %v4381 = vunpack.c.l.b16 %v4316
        %v4382 = vunpack.c.l.b16 %v4317
        %v4383 = vunpack.c.l.b16 %v4318
        %v4384 = vunpack.c.l.b16 %v4319
        %v4385 = vunpack.c.l.b16 %v4320
        %v4386 = vunpack.c.l.b16 %v4321
        %v4387 = vunpack.c.l.b16 %v4322
        %v4388 = vunpack.c.l.b16 %v4323
        %v4389 = vunpack.c.l.b16 %v4324
        %v4390 = vunpack.c.l.b16 %v4325
        %v4391 = vunpack.c.l.b16 %v4326
        %v4392 = vunpack.c.l.b16 %v4327
        %v4393 = vunpack.c.l.b16 %v4328
        %v4394 = vunpack.c.l.b16 %v4329
        %v4395 = vpack.c.b16 %v4364, %v4363
        %v4396 = vpack.c.b16 %v4366, %v4365
        %v4397 = vpack.c.b16 %v4368, %v4367
        %v4398 = vpack.c.b16 %v4370, %v4369
        %v4399 = vpack.c.b16 %v4372, %v4371
        %v4400 = vpack.c.b16 %v4374, %v4373
        %v4401 = vpack.c.b16 %v4376, %v4375
        %v4402 = vpack.c.b16 %v4378, %v4377
        %v4403 = vpack.c.b16 %v4380, %v4379
        %v4404 = vpack.c.b16 %v4382, %v4381
        %v4405 = vpack.c.b16 %v4384, %v4383
        %v4406 = vpack.c.b16 %v4386, %v4385
        %v4407 = vpack.c.b16 %v4388, %v4387
        %v4408 = vpack.c.b16 %v4390, %v4389
        %v4409 = vpack.c.b16 %v4392, %v4391
        %v4410 = vpack.c.b16 %v4394, %v4393
        %v4412 = vsel %vm1776, %v4395, 0
        %v4415 = vsel %vm1776, %v4396, 0
        %v4418 = vsel %vm1776, %v4397, 0
        %v4421 = vsel %vm1776, %v4398, 0
        %v4424 = vsel %vm1776, %v4399, 0
        %v4427 = vsel %vm1776, %v4400, 0
        %v4430 = vsel %vm1776, %v4401, 0
        %v4433 = vsel %vm1776, %v4402, 0
        %v4436 = vsel %vm1776, %v4403, 0
        %v4439 = vsel %vm1776, %v4404, 0
        %v4442 = vsel %vm1776, %v4405, 0
        %v4445 = vsel %vm1776, %v4406, 0
        %v4448 = vsel %vm1776, %v4407, 0
        %v4451 = vsel %vm1776, %v4408, 0
        %v4454 = vsel %vm1776, %v4409, 0
        %v4457 = vsel %vm1776, %v4410, 0
        %v4460 = vsel %vm1825, %v4330, 0
        %4462 = vmatprep.subr.bf16.mxu0 0
        %4463 = vmatpush1.bf16.msra.mxu0 0
        %4464 = vmatprep.subr.bf16.mxu0 0
        %4465 = vmatpush1.bf16.msra.mxu0 0
        %4466 = vmatprep.subr.bf16.mxu0 0
        %4467 = vmatpush1.bf16.msra.mxu0 0
        %4468 = vmatprep.subr.bf16.mxu0 0
        %4469 = vmatpush1.bf16.msra.mxu0 0
        %4470 = vmatprep.subr.bf16.mxu0 0
        %4471 = vmatpush1.bf16.msra.mxu0 0
        %4472 = vmatprep.subr.bf16.mxu0 0
        %4473 = vmatpush1.bf16.msra.mxu0 0
        %4474 = vmatprep.subr.bf16.mxu0 0
        %4475 = vmatpush1.bf16.msra.mxu0 0
        %4476 = vmatprep.subr.bf16.mxu0 0
        %4477 = vmatpush1.bf16.msra.mxu0 %v4460
        %4478 = vmatprep.subr.bf16.mxu0 0
        %4479 = vmatpush2.bf16.msra.mxu0 0
        %4480 = vmatprep.subr.bf16.mxu0 0
        %4481 = vmatpush2.bf16.msra.mxu0 0
        %4482 = vmatprep.subr.bf16.mxu0 0
        %4483 = vmatpush2.bf16.msra.mxu0 0
        %4484 = vmatprep.subr.bf16.mxu0 0
        %4485 = vmatpush2.bf16.msra.mxu0 0
        %4486 = vmatprep.subr.bf16.mxu0 0
        %4487 = vmatpush2.bf16.msra.mxu0 0
        %4488 = vmatprep.subr.bf16.mxu0 0
        %4489 = vmatpush2.bf16.msra.mxu0 0
        %4490 = vmatprep.subr.bf16.mxu0 0
        %4491 = vmatpush2.bf16.msra.mxu0 0
        %4492 = vmatprep.subr.bf16.mxu0 0
        %4493 = vmatpush2.bf16.msra.mxu0 0
        %4494 = vmatprep.mubr.bf16.mxu0 0
        %4495 = vmatmul.mubr.bf16.gmra.mxu0 %v4412
        %v4496 = vpop.f32.mrf.mxu0
        %v4497 = vadd.f32 0.0, %v4496
        %v4498 = vpop.f32.mrf.mxu0
        %v4499 = vpop.f32.mrf.mxu0
        %v4500 = vadd.f32 0.0, %v4499
        %v4501 = vpop.f32.mrf.mxu0
        %4502 = vmatprep.mubr.bf16.mxu0 0
        %4503 = vmatmul.mubr.bf16.gmra.mxu0 %v4415
        %v4504 = vpop.f32.mrf.mxu0
        %v4505 = vadd.f32 0.0, %v4504
        %v4506 = vpop.f32.mrf.mxu0
        %v4507 = vpop.f32.mrf.mxu0
        %v4508 = vadd.f32 0.0, %v4507
        %v4509 = vpop.f32.mrf.mxu0
        %4510 = vmatprep.mubr.bf16.mxu0 0
        %4511 = vmatmul.mubr.bf16.gmra.mxu0 %v4418
        %v4512 = vpop.f32.mrf.mxu0
        %v4513 = vadd.f32 0.0, %v4512
        %v4514 = vpop.f32.mrf.mxu0
        %v4515 = vpop.f32.mrf.mxu0
        %v4516 = vadd.f32 0.0, %v4515
        %v4517 = vpop.f32.mrf.mxu0
        %4518 = vmatprep.mubr.bf16.mxu0 0
        %4519 = vmatmul.mubr.bf16.gmra.mxu0 %v4421
        %v4520 = vpop.f32.mrf.mxu0
        %v4521 = vadd.f32 0.0, %v4520
        %v4522 = vpop.f32.mrf.mxu0
        %v4523 = vpop.f32.mrf.mxu0
        %v4524 = vadd.f32 0.0, %v4523
        %v4525 = vpop.f32.mrf.mxu0
        %4526 = vmatprep.mubr.bf16.mxu0 0
        %4527 = vmatmul.mubr.bf16.gmra.mxu0 %v4424
        %v4528 = vpop.f32.mrf.mxu0
        %v4529 = vadd.f32 0.0, %v4528
        %v4530 = vpop.f32.mrf.mxu0
        %v4531 = vpop.f32.mrf.mxu0
        %v4532 = vadd.f32 0.0, %v4531
        %v4533 = vpop.f32.mrf.mxu0
        %4534 = vmatprep.mubr.bf16.mxu0 0
        %4535 = vmatmul.mubr.bf16.gmra.mxu0 %v4427
        %v4536 = vpop.f32.mrf.mxu0
        %v4537 = vadd.f32 0.0, %v4536
        %v4538 = vpop.f32.mrf.mxu0
        %v4539 = vpop.f32.mrf.mxu0
        %v4540 = vadd.f32 0.0, %v4539
        %v4541 = vpop.f32.mrf.mxu0
        %4542 = vmatprep.mubr.bf16.mxu0 0
        %4543 = vmatmul.mubr.bf16.gmra.mxu0 %v4430
        %v4544 = vpop.f32.mrf.mxu0
        %v4545 = vadd.f32 0.0, %v4544
        %v4546 = vpop.f32.mrf.mxu0
        %v4547 = vpop.f32.mrf.mxu0
        %v4548 = vadd.f32 0.0, %v4547
        %v4549 = vpop.f32.mrf.mxu0
        %4550 = vmatprep.mubr.bf16.mxu0 0
        %4551 = vmatmul.mubr.bf16.gmra.mxu0 %v4433
        %v4552 = vpop.f32.mrf.mxu0
        %v4553 = vadd.f32 0.0, %v4552
        %v4554 = vpop.f32.mrf.mxu0
        %v4555 = vpop.f32.mrf.mxu0
        %v4556 = vadd.f32 0.0, %v4555
        %v4557 = vpop.f32.mrf.mxu0
        %4558 = vmatprep.mubr.bf16.mxu0 0
        %4559 = vmatmul.mubr.bf16.gmra.mxu0 %v4436
        %v4560 = vpop.f32.mrf.mxu0
        %v4561 = vadd.f32 0.0, %v4560
        %v4562 = vpop.f32.mrf.mxu0
        %v4563 = vpop.f32.mrf.mxu0
        %v4564 = vadd.f32 0.0, %v4563
        %v4565 = vpop.f32.mrf.mxu0
        %4566 = vmatprep.mubr.bf16.mxu0 0
        %4567 = vmatmul.mubr.bf16.gmra.mxu0 %v4439
        %v4568 = vpop.f32.mrf.mxu0
        %v4569 = vadd.f32 0.0, %v4568
        %v4570 = vpop.f32.mrf.mxu0
        %v4571 = vpop.f32.mrf.mxu0
        %v4572 = vadd.f32 0.0, %v4571
        %v4573 = vpop.f32.mrf.mxu0
        %4574 = vmatprep.mubr.bf16.mxu0 0
        %4575 = vmatmul.mubr.bf16.gmra.mxu0 %v4442
        %v4576 = vpop.f32.mrf.mxu0
        %v4577 = vadd.f32 0.0, %v4576
        %v4578 = vpop.f32.mrf.mxu0
        %v4579 = vpop.f32.mrf.mxu0
        %v4580 = vadd.f32 0.0, %v4579
        %v4581 = vpop.f32.mrf.mxu0
        %4582 = vmatprep.mubr.bf16.mxu0 0
        %4583 = vmatmul.mubr.bf16.gmra.mxu0 %v4445
        %v4584 = vpop.f32.mrf.mxu0
        %v4585 = vadd.f32 0.0, %v4584
        %v4586 = vpop.f32.mrf.mxu0
        %v4587 = vpop.f32.mrf.mxu0
        %v4588 = vadd.f32 0.0, %v4587
        %v4589 = vpop.f32.mrf.mxu0
        %4590 = vmatprep.mubr.bf16.mxu0 0
        %4591 = vmatmul.mubr.bf16.gmra.mxu0 %v4448
        %v4592 = vpop.f32.mrf.mxu0
        %v4593 = vadd.f32 0.0, %v4592
        %v4594 = vpop.f32.mrf.mxu0
        %v4595 = vpop.f32.mrf.mxu0
        %v4596 = vadd.f32 0.0, %v4595
        %v4597 = vpop.f32.mrf.mxu0
        %4598 = vmatprep.mubr.bf16.mxu0 0
        %4599 = vmatmul.mubr.bf16.gmra.mxu0 %v4451
        %v4600 = vpop.f32.mrf.mxu0
        %v4601 = vadd.f32 0.0, %v4600
        %v4602 = vpop.f32.mrf.mxu0
        %v4603 = vpop.f32.mrf.mxu0
        %v4604 = vadd.f32 0.0, %v4603
        %v4605 = vpop.f32.mrf.mxu0
        %4606 = vmatprep.mubr.bf16.mxu0 0
        %4607 = vmatmul.mubr.bf16.gmra.mxu0 %v4454
        %v4608 = vpop.f32.mrf.mxu0
        %v4609 = vadd.f32 0.0, %v4608
        %v4610 = vpop.f32.mrf.mxu0
        %v4611 = vpop.f32.mrf.mxu0
        %v4612 = vadd.f32 0.0, %v4611
        %v4613 = vpop.f32.mrf.mxu0
        %4614 = vmatprep.mubr.bf16.mxu0 0
        %4615 = vmatmul.mubr.bf16.gmra.mxu0 %v4457
        %v4616 = vpop.f32.mrf.mxu0
        %v4617 = vadd.f32 0.0, %v4616
        %v4618 = vpop.f32.mrf.mxu0
        %v4619 = vpop.f32.mrf.mxu0
        %v4620 = vadd.f32 0.0, %v4619
        %v4621 = vpop.f32.mrf.mxu0
        %4622 = vdwg.mxu0
        %v4623 = vadd.f32 %v4265, %v4497
        %v4624 = vadd.f32 %v4266, %v4500
        %v4625 = vadd.f32 %v4267, %v4505
        %v4626 = vadd.f32 %v4268, %v4508
        %v4627 = vadd.f32 %v4269, %v4513
        %v4628 = vadd.f32 %v4270, %v4516
        %v4629 = vadd.f32 %v4271, %v4521
        %v4630 = vadd.f32 %v4272, %v4524
        %v4631 = vadd.f32 %v4273, %v4529
        %v4632 = vadd.f32 %v4274, %v4532
        %v4633 = vadd.f32 %v4275, %v4537
        %v4634 = vadd.f32 %v4276, %v4540
        %v4635 = vadd.f32 %v4277, %v4545
        %v4636 = vadd.f32 %v4278, %v4548
        %v4637 = vadd.f32 %v4279, %v4553
        %v4638 = vadd.f32 %v4280, %v4556
        %v4639 = vadd.f32 %v4281, %v4561
        %v4640 = vadd.f32 %v4282, %v4564
        %v4641 = vadd.f32 %v4283, %v4569
        %v4642 = vadd.f32 %v4284, %v4572
        %v4643 = vadd.f32 %v4285, %v4577
        %v4644 = vadd.f32 %v4286, %v4580
        %v4645 = vadd.f32 %v4287, %v4585
        %v4646 = vadd.f32 %v4288, %v4588
        %v4647 = vadd.f32 %v4289, %v4593
        %v4648 = vadd.f32 %v4290, %v4596
        %v4649 = vadd.f32 %v4291, %v4601
        %v4650 = vadd.f32 %v4292, %v4604
        %v4651 = vadd.f32 %v4293, %v4609
        %v4652 = vadd.f32 %v4294, %v4612
        %v4653 = vadd.f32 %v4295, %v4617
        %v4654 = vadd.f32 %v4296, %v4620
        %v4655 = vld [vmem:[%s4297] sm:$0xf]
        %v4656 = vld [vmem:[%s4297 + $0x4] sm:$0xf]
        %v4657 = vld [vmem:[%s4297 + $0x8] sm:$0x1]
        %v4658 = vld [vmem:[%s4297 + $0xc] sm:$0xf]
        %v4659 = vld [vmem:[%s4297 + $0x10] sm:$0xf]
        %v4660 = vld [vmem:[%s4297 + $0x14] sm:$0x1]
        %v4661 = vld [vmem:[%s4297 + $0x18] sm:$0xf]
        %v4662 = vld [vmem:[%s4297 + $0x1c] sm:$0xf]
        %v4663 = vld [vmem:[%s4297 + $0x20] sm:$0x1]
        %v4664 = vld [vmem:[%s4297 + $0x24] sm:$0xf]
        %v4665 = vld [vmem:[%s4297 + $0x28] sm:$0xf]
        %v4666 = vld [vmem:[%s4297 + $0x2c] sm:$0x1]
        %v4667 = vld [vmem:[%s4297 + $0x30] sm:$0xf]
        %v4668 = vld [vmem:[%s4297 + $0x34] sm:$0xf]
        %v4669 = vld [vmem:[%s4297 + $0x38] sm:$0x1]
        %v4670 = vld [vmem:[%s4297 + $0x3c] sm:$0xf]
        %v4671 = vld [vmem:[%s4297 + $0x40] sm:$0xf]
        %v4672 = vld [vmem:[%s4297 + $0x44] sm:$0x1]
        %v4673 = vld [vmem:[%s4297 + $0x48] sm:$0xf]
        %v4674 = vld [vmem:[%s4297 + $0x4c] sm:$0xf]
        %v4675 = vld [vmem:[%s4297 + $0x50] sm:$0x1]
        %v4676 = vld [vmem:[%s4297 + $0x54] sm:$0xf]
        %v4677 = vld [vmem:[%s4297 + $0x58] sm:$0xf]
        %v4678 = vld [vmem:[%s4297 + $0x5c] sm:$0x1]
        %v4679 = vld [vmem:[%s4297 + $0x60] sm:$0xf]
        %v4680 = vld [vmem:[%s4297 + $0x64] sm:$0xf]
        %v4681 = vld [vmem:[%s4297 + $0x68] sm:$0x1]
        %v4682 = vld [vmem:[%s4297 + $0x6c] sm:$0xf]
        %v4683 = vld [vmem:[%s4297 + $0x70] sm:$0xf]
        %v4684 = vld [vmem:[%s4297 + $0x74] sm:$0x1]
        %v4685 = vld [vmem:[%s4297 + $0x78] sm:$0xf]
        %v4686 = vld [vmem:[%s4297 + $0x7c] sm:$0xf]
        %v4687 = vld [vmem:[%s4297 + $0x80] sm:$0x1]
        %v4688 = vld [vmem:[%s4297 + $0x84] sm:$0xf]
        %v4689 = vld [vmem:[%s4297 + $0x88] sm:$0xf]
        %v4690 = vld [vmem:[%s4297 + $0x8c] sm:$0x1]
        %v4691 = vld [vmem:[%s4297 + $0x90] sm:$0xf]
        %v4692 = vld [vmem:[%s4297 + $0x94] sm:$0xf]
        %v4693 = vld [vmem:[%s4297 + $0x98] sm:$0x1]
        %v4694 = vld [vmem:[%s4297 + $0x9c] sm:$0xf]
        %v4695 = vld [vmem:[%s4297 + $0xa0] sm:$0xf]
        %v4696 = vld [vmem:[%s4297 + $0xa4] sm:$0x1]
        %v4697 = vld [vmem:[%s4297 + $0xa8] sm:$0xf]
        %v4698 = vld [vmem:[%s4297 + $0xac] sm:$0xf]
        %v4699 = vld [vmem:[%s4297 + $0xb0] sm:$0x1]
        %v4700 = vld [vmem:[%s4297 + $0xb4] sm:$0xf]
        %v4701 = vld [vmem:[%s4297 + $0xb8] sm:$0xf]
        %v4702 = vld [vmem:[%s4297 + $0xbc] sm:$0x1]
        %v4703 = vld [vmem:[%s2 + $0xc] sm:$0xc]
        %v4705 = vshrl.u32 %v4655, 16
        %v4707 = vrot.slane %v4705, 4
        %v4708 = vshll.u32 %v4655, 16
        %v4710 = vrot.slane %v4708, 5
        %v4711 = vor.u32 %v4707, %v4710
        %v4712 = vrot.slane %v4711, 4
        %v4714 = vshll.u32 %v4656, 16
        %v4716 = vrot.slane %v4714, 5
        %v4717 = vsel %vm1339, %v4712, %v4716
        %v4718 = vshrl.u32 %v4656, 16
        %v4720 = vrot.slane %v4718, 4
        %v4721 = vor.u32 %v4720, %v4716
        %v4722 = vrot.slane %v4721, 4
        %v4724 = vshll.u32 %v4657, 16
        %v4726 = vrot.slane %v4724, 5
        %v4727 = vsel %vm1339, %v4722, %v4726
        %v4729 = vshrl.u32 %v4658, 16
        %v4731 = vrot.slane %v4729, 4
        %v4732 = vshll.u32 %v4658, 16
        %v4734 = vrot.slane %v4732, 5
        %v4735 = vor.u32 %v4731, %v4734
        %v4736 = vrot.slane %v4735, 4
        %v4738 = vshll.u32 %v4659, 16
        %v4740 = vrot.slane %v4738, 5
        %v4741 = vsel %vm1339, %v4736, %v4740
        %v4742 = vshrl.u32 %v4659, 16
        %v4744 = vrot.slane %v4742, 4
        %v4745 = vor.u32 %v4744, %v4740
        %v4746 = vrot.slane %v4745, 4
        %v4748 = vshll.u32 %v4660, 16
        %v4750 = vrot.slane %v4748, 5
        %v4751 = vsel %vm1339, %v4746, %v4750
        %v4753 = vshrl.u32 %v4661, 16
        %v4755 = vrot.slane %v4753, 4
        %v4756 = vshll.u32 %v4661, 16
        %v4758 = vrot.slane %v4756, 5
        %v4759 = vor.u32 %v4755, %v4758
        %v4760 = vrot.slane %v4759, 4
        %v4762 = vshll.u32 %v4662, 16
        %v4764 = vrot.slane %v4762, 5
        %v4765 = vsel %vm1339, %v4760, %v4764
        %v4766 = vshrl.u32 %v4662, 16
        %v4768 = vrot.slane %v4766, 4
        %v4769 = vor.u32 %v4768, %v4764
        %v4770 = vrot.slane %v4769, 4
        %v4772 = vshll.u32 %v4663, 16
        %v4774 = vrot.slane %v4772, 5
        %v4775 = vsel %vm1339, %v4770, %v4774
        %v4777 = vshrl.u32 %v4664, 16
        %v4779 = vrot.slane %v4777, 4
        %v4780 = vshll.u32 %v4664, 16
        %v4782 = vrot.slane %v4780, 5
        %v4783 = vor.u32 %v4779, %v4782
        %v4784 = vrot.slane %v4783, 4
        %v4786 = vshll.u32 %v4665, 16
        %v4788 = vrot.slane %v4786, 5
        %v4789 = vsel %vm1339, %v4784, %v4788
        %v4790 = vshrl.u32 %v4665, 16
        %v4792 = vrot.slane %v4790, 4
        %v4793 = vor.u32 %v4792, %v4788
        %v4794 = vrot.slane %v4793, 4
        %v4796 = vshll.u32 %v4666, 16
        %v4798 = vrot.slane %v4796, 5
        %v4799 = vsel %vm1339, %v4794, %v4798
        %v4801 = vshrl.u32 %v4667, 16
        %v4803 = vrot.slane %v4801, 4
        %v4804 = vshll.u32 %v4667, 16
        %v4806 = vrot.slane %v4804, 5
        %v4807 = vor.u32 %v4803, %v4806
        %v4808 = vrot.slane %v4807, 4
        %v4810 = vshll.u32 %v4668, 16
        %v4812 = vrot.slane %v4810, 5
        %v4813 = vsel %vm1339, %v4808, %v4812
        %v4814 = vshrl.u32 %v4668, 16
        %v4816 = vrot.slane %v4814, 4
        %v4817 = vor.u32 %v4816, %v4812
        %v4818 = vrot.slane %v4817, 4
        %v4820 = vshll.u32 %v4669, 16
        %v4822 = vrot.slane %v4820, 5
        %v4823 = vsel %vm1339, %v4818, %v4822
        %v4825 = vshrl.u32 %v4670, 16
        %v4827 = vrot.slane %v4825, 4
        %v4828 = vshll.u32 %v4670, 16
        %v4830 = vrot.slane %v4828, 5
        %v4831 = vor.u32 %v4827, %v4830
        %v4832 = vrot.slane %v4831, 4
        %v4834 = vshll.u32 %v4671, 16
        %v4836 = vrot.slane %v4834, 5
        %v4837 = vsel %vm1339, %v4832, %v4836
        %v4838 = vshrl.u32 %v4671, 16
        %v4840 = vrot.slane %v4838, 4
        %v4841 = vor.u32 %v4840, %v4836
        %v4842 = vrot.slane %v4841, 4
        %v4844 = vshll.u32 %v4672, 16
        %v4846 = vrot.slane %v4844, 5
        %v4847 = vsel %vm1339, %v4842, %v4846
        %v4849 = vshrl.u32 %v4673, 16
        %v4851 = vrot.slane %v4849, 4
        %v4852 = vshll.u32 %v4673, 16
        %v4854 = vrot.slane %v4852, 5
        %v4855 = vor.u32 %v4851, %v4854
        %v4856 = vrot.slane %v4855, 4
        %v4858 = vshll.u32 %v4674, 16
        %v4860 = vrot.slane %v4858, 5
        %v4861 = vsel %vm1339, %v4856, %v4860
        %v4862 = vshrl.u32 %v4674, 16
        %v4864 = vrot.slane %v4862, 4
        %v4865 = vor.u32 %v4864, %v4860
        %v4866 = vrot.slane %v4865, 4
        %v4868 = vshll.u32 %v4675, 16
        %v4870 = vrot.slane %v4868, 5
        %v4871 = vsel %vm1339, %v4866, %v4870
        %v4873 = vshrl.u32 %v4676, 16
        %v4875 = vrot.slane %v4873, 4
        %v4876 = vshll.u32 %v4676, 16
        %v4878 = vrot.slane %v4876, 5
        %v4879 = vor.u32 %v4875, %v4878
        %v4880 = vrot.slane %v4879, 4
        %v4882 = vshll.u32 %v4677, 16
        %v4884 = vrot.slane %v4882, 5
        %v4885 = vsel %vm1339, %v4880, %v4884
        %v4886 = vshrl.u32 %v4677, 16
        %v4888 = vrot.slane %v4886, 4
        %v4889 = vor.u32 %v4888, %v4884
        %v4890 = vrot.slane %v4889, 4
        %v4892 = vshll.u32 %v4678, 16
        %v4894 = vrot.slane %v4892, 5
        %v4895 = vsel %vm1339, %v4890, %v4894
        %v4897 = vshrl.u32 %v4679, 16
        %v4899 = vrot.slane %v4897, 4
        %v4900 = vshll.u32 %v4679, 16
        %v4902 = vrot.slane %v4900, 5
        %v4903 = vor.u32 %v4899, %v4902
        %v4904 = vrot.slane %v4903, 4
        %v4906 = vshll.u32 %v4680, 16
        %v4908 = vrot.slane %v4906, 5
        %v4909 = vsel %vm1339, %v4904, %v4908
        %v4910 = vshrl.u32 %v4680, 16
        %v4912 = vrot.slane %v4910, 4
        %v4913 = vor.u32 %v4912, %v4908
        %v4914 = vrot.slane %v4913, 4
        %v4916 = vshll.u32 %v4681, 16
        %v4918 = vrot.slane %v4916, 5
        %v4919 = vsel %vm1339, %v4914, %v4918
        %v4921 = vshrl.u32 %v4682, 16
        %v4923 = vrot.slane %v4921, 4
        %v4924 = vshll.u32 %v4682, 16
        %v4926 = vrot.slane %v4924, 5
        %v4927 = vor.u32 %v4923, %v4926
        %v4928 = vrot.slane %v4927, 4
        %v4930 = vshll.u32 %v4683, 16
        %v4932 = vrot.slane %v4930, 5
        %v4933 = vsel %vm1339, %v4928, %v4932
        %v4934 = vshrl.u32 %v4683, 16
        %v4936 = vrot.slane %v4934, 4
        %v4937 = vor.u32 %v4936, %v4932
        %v4938 = vrot.slane %v4937, 4
        %v4940 = vshll.u32 %v4684, 16
        %v4942 = vrot.slane %v4940, 5
        %v4943 = vsel %vm1339, %v4938, %v4942
        %v4945 = vshrl.u32 %v4685, 16
        %v4947 = vrot.slane %v4945, 4
        %v4948 = vshll.u32 %v4685, 16
        %v4950 = vrot.slane %v4948, 5
        %v4951 = vor.u32 %v4947, %v4950
        %v4952 = vrot.slane %v4951, 4
        %v4954 = vshll.u32 %v4686, 16
        %v4956 = vrot.slane %v4954, 5
        %v4957 = vsel %vm1339, %v4952, %v4956
        %v4958 = vshrl.u32 %v4686, 16
        %v4960 = vrot.slane %v4958, 4
        %v4961 = vor.u32 %v4960, %v4956
        %v4962 = vrot.slane %v4961, 4
        %v4964 = vshll.u32 %v4687, 16
        %v4966 = vrot.slane %v4964, 5
        %v4967 = vsel %vm1339, %v4962, %v4966
        %v4969 = vshrl.u32 %v4688, 16
        %v4971 = vrot.slane %v4969, 4
        %v4972 = vshll.u32 %v4688, 16
        %v4974 = vrot.slane %v4972, 5
        %v4975 = vor.u32 %v4971, %v4974
        %v4976 = vrot.slane %v4975, 4
        %v4978 = vshll.u32 %v4689, 16
        %v4980 = vrot.slane %v4978, 5
        %v4981 = vsel %vm1339, %v4976, %v4980
        %v4982 = vshrl.u32 %v4689, 16
        %v4984 = vrot.slane %v4982, 4
        %v4985 = vor.u32 %v4984, %v4980
        %v4986 = vrot.slane %v4985, 4
        %v4988 = vshll.u32 %v4690, 16
        %v4990 = vrot.slane %v4988, 5
        %v4991 = vsel %vm1339, %v4986, %v4990
        %v4993 = vshrl.u32 %v4691, 16
        %v4995 = vrot.slane %v4993, 4
        %v4996 = vshll.u32 %v4691, 16
        %v4998 = vrot.slane %v4996, 5
        %v4999 = vor.u32 %v4995, %v4998
        %v5000 = vrot.slane %v4999, 4
        %v5002 = vshll.u32 %v4692, 16
        %v5004 = vrot.slane %v5002, 5
        %v5005 = vsel %vm1339, %v5000, %v5004
        %v5006 = vshrl.u32 %v4692, 16
        %v5008 = vrot.slane %v5006, 4
        %v5009 = vor.u32 %v5008, %v5004
        %v5010 = vrot.slane %v5009, 4
        %v5012 = vshll.u32 %v4693, 16
        %v5014 = vrot.slane %v5012, 5
        %v5015 = vsel %vm1339, %v5010, %v5014
        %v5017 = vshrl.u32 %v4694, 16
        %v5019 = vrot.slane %v5017, 4
        %v5020 = vshll.u32 %v4694, 16
        %v5022 = vrot.slane %v5020, 5
        %v5023 = vor.u32 %v5019, %v5022
        %v5024 = vrot.slane %v5023, 4
        %v5026 = vshll.u32 %v4695, 16
        %v5028 = vrot.slane %v5026, 5
        %v5029 = vsel %vm1339, %v5024, %v5028
        %v5030 = vshrl.u32 %v4695, 16
        %v5032 = vrot.slane %v5030, 4
        %v5033 = vor.u32 %v5032, %v5028
        %v5034 = vrot.slane %v5033, 4
        %v5036 = vshll.u32 %v4696, 16
        %v5038 = vrot.slane %v5036, 5
        %v5039 = vsel %vm1339, %v5034, %v5038
        %v5041 = vshrl.u32 %v4697, 16
        %v5043 = vrot.slane %v5041, 4
        %v5044 = vshll.u32 %v4697, 16
        %v5046 = vrot.slane %v5044, 5
        %v5047 = vor.u32 %v5043, %v5046
        %v5048 = vrot.slane %v5047, 4
        %v5050 = vshll.u32 %v4698, 16
        %v5052 = vrot.slane %v5050, 5
        %v5053 = vsel %vm1339, %v5048, %v5052
        %v5054 = vshrl.u32 %v4698, 16
        %v5056 = vrot.slane %v5054, 4
        %v5057 = vor.u32 %v5056, %v5052
        %v5058 = vrot.slane %v5057, 4
        %v5060 = vshll.u32 %v4699, 16
        %v5062 = vrot.slane %v5060, 5
        %v5063 = vsel %vm1339, %v5058, %v5062
        %v5065 = vshrl.u32 %v4700, 16
        %v5067 = vrot.slane %v5065, 4
        %v5068 = vshll.u32 %v4700, 16
        %v5070 = vrot.slane %v5068, 5
        %v5071 = vor.u32 %v5067, %v5070
        %v5072 = vrot.slane %v5071, 4
        %v5074 = vshll.u32 %v4701, 16
        %v5076 = vrot.slane %v5074, 5
        %v5077 = vsel %vm1339, %v5072, %v5076
        %v5078 = vshrl.u32 %v4701, 16
        %v5080 = vrot.slane %v5078, 4
        %v5081 = vor.u32 %v5080, %v5076
        %v5082 = vrot.slane %v5081, 4
        %v5084 = vshll.u32 %v4702, 16
        %v5086 = vrot.slane %v5084, 5
        %v5087 = vsel %vm1339, %v5082, %v5086
        %v5088 = vunpack.c.l.b16 %v4717
        %v5089 = vunpack.c.l.b16 %v4727
        %v5090 = vunpack.c.l.b16 %v4741
        %v5091 = vunpack.c.l.b16 %v4751
        %v5092 = vunpack.c.l.b16 %v4765
        %v5093 = vunpack.c.l.b16 %v4775
        %v5094 = vunpack.c.l.b16 %v4789
        %v5095 = vunpack.c.l.b16 %v4799
        %v5096 = vunpack.c.l.b16 %v4813
        %v5097 = vunpack.c.l.b16 %v4823
        %v5098 = vunpack.c.l.b16 %v4837
        %v5099 = vunpack.c.l.b16 %v4847
        %v5100 = vunpack.c.l.b16 %v4861
        %v5101 = vunpack.c.l.b16 %v4871
        %v5102 = vunpack.c.l.b16 %v4885
        %v5103 = vunpack.c.l.b16 %v4895
        %v5104 = vunpack.c.l.b16 %v4909
        %v5105 = vunpack.c.l.b16 %v4919
        %v5106 = vunpack.c.l.b16 %v4933
        %v5107 = vunpack.c.l.b16 %v4943
        %v5108 = vunpack.c.l.b16 %v4957
        %v5109 = vunpack.c.l.b16 %v4967
        %v5110 = vunpack.c.l.b16 %v4981
        %v5111 = vunpack.c.l.b16 %v4991
        %v5112 = vunpack.c.l.b16 %v5005
        %v5113 = vunpack.c.l.b16 %v5015
        %v5114 = vunpack.c.l.b16 %v5029
        %v5115 = vunpack.c.l.b16 %v5039
        %v5116 = vunpack.c.l.b16 %v5053
        %v5117 = vunpack.c.l.b16 %v5063
        %v5118 = vunpack.c.l.b16 %v5077
        %v5119 = vunpack.c.l.b16 %v5087
        %v5120 = vpack.c.b16 %v5089, %v5088
        %v5121 = vpack.c.b16 %v5091, %v5090
        %v5122 = vpack.c.b16 %v5093, %v5092
        %v5123 = vpack.c.b16 %v5095, %v5094
        %v5124 = vpack.c.b16 %v5097, %v5096
        %v5125 = vpack.c.b16 %v5099, %v5098
        %v5126 = vpack.c.b16 %v5101, %v5100
        %v5127 = vpack.c.b16 %v5103, %v5102
        %v5128 = vpack.c.b16 %v5105, %v5104
        %v5129 = vpack.c.b16 %v5107, %v5106
        %v5130 = vpack.c.b16 %v5109, %v5108
        %v5131 = vpack.c.b16 %v5111, %v5110
        %v5132 = vpack.c.b16 %v5113, %v5112
        %v5133 = vpack.c.b16 %v5115, %v5114
        %v5134 = vpack.c.b16 %v5117, %v5116
        %v5135 = vpack.c.b16 %v5119, %v5118
        %v5137 = vunpack.c.l.b16 %v4703
        %v5138 = vpack.c.b16 %v5137, %v5137
        %v5139 = vrot.slane %v5138, 2
        %v5141 = vsel %vm1776, %v5120, 0
        %v5144 = vsel %vm1776, %v5121, 0
        %v5147 = vsel %vm1776, %v5122, 0
        %v5150 = vsel %vm1776, %v5123, 0
        %v5153 = vsel %vm1776, %v5124, 0
        %v5156 = vsel %vm1776, %v5125, 0
        %v5159 = vsel %vm1776, %v5126, 0
        %v5162 = vsel %vm1776, %v5127, 0
        %v5165 = vsel %vm1776, %v5128, 0
        %v5168 = vsel %vm1776, %v5129, 0
        %v5171 = vsel %vm1776, %v5130, 0
        %v5174 = vsel %vm1776, %v5131, 0
        %v5177 = vsel %vm1776, %v5132, 0
        %v5180 = vsel %vm1776, %v5133, 0
        %v5183 = vsel %vm1776, %v5134, 0
        %v5186 = vsel %vm1776, %v5135, 0
        %v5189 = vsel %vm1825, %v5139, 0
        %5191 = vmatprep.subr.bf16.mxu0 0
        %5192 = vmatpush1.bf16.msra.mxu0 0
        %5193 = vmatprep.subr.bf16.mxu0 0
        %5194 = vmatpush1.bf16.msra.mxu0 0
        %5195 = vmatprep.subr.bf16.mxu0 0
        %5196 = vmatpush1.bf16.msra.mxu0 0
        %5197 = vmatprep.subr.bf16.mxu0 0
        %5198 = vmatpush1.bf16.msra.mxu0 0
        %5199 = vmatprep.subr.bf16.mxu0 0
        %5200 = vmatpush1.bf16.msra.mxu0 0
        %5201 = vmatprep.subr.bf16.mxu0 0
        %5202 = vmatpush1.bf16.msra.mxu0 0
        %5203 = vmatprep.subr.bf16.mxu0 0
        %5204 = vmatpush1.bf16.msra.mxu0 0
        %5205 = vmatprep.subr.bf16.mxu0 0
        %5206 = vmatpush1.bf16.msra.mxu0 %v5189
        %5207 = vmatprep.subr.bf16.mxu0 0
        %5208 = vmatpush2.bf16.msra.mxu0 0
        %5209 = vmatprep.subr.bf16.mxu0 0
        %5210 = vmatpush2.bf16.msra.mxu0 0
        %5211 = vmatprep.subr.bf16.mxu0 0
        %5212 = vmatpush2.bf16.msra.mxu0 0
        %5213 = vmatprep.subr.bf16.mxu0 0
        %5214 = vmatpush2.bf16.msra.mxu0 0
        %5215 = vmatprep.subr.bf16.mxu0 0
        %5216 = vmatpush2.bf16.msra.mxu0 0
        %5217 = vmatprep.subr.bf16.mxu0 0
        %5218 = vmatpush2.bf16.msra.mxu0 0
        %5219 = vmatprep.subr.bf16.mxu0 0
        %5220 = vmatpush2.bf16.msra.mxu0 0
        %5221 = vmatprep.subr.bf16.mxu0 0
        %5222 = vmatpush2.bf16.msra.mxu0 0
        %5223 = vmatprep.mubr.bf16.mxu0 0
        %5224 = vmatmul.mubr.bf16.gmra.mxu0 %v5141
        %v5225 = vpop.f32.mrf.mxu0
        %v5226 = vadd.f32 0.0, %v5225
        %v5227 = vpop.f32.mrf.mxu0
        %v5228 = vpop.f32.mrf.mxu0
        %v5229 = vadd.f32 0.0, %v5228
        %v5230 = vpop.f32.mrf.mxu0
        %5231 = vmatprep.mubr.bf16.mxu0 0
        %5232 = vmatmul.mubr.bf16.gmra.mxu0 %v5144
        %v5233 = vpop.f32.mrf.mxu0
        %v5234 = vadd.f32 0.0, %v5233
        %v5235 = vpop.f32.mrf.mxu0
        %v5236 = vpop.f32.mrf.mxu0
        %v5237 = vadd.f32 0.0, %v5236
        %v5238 = vpop.f32.mrf.mxu0
        %5239 = vmatprep.mubr.bf16.mxu0 0
        %5240 = vmatmul.mubr.bf16.gmra.mxu0 %v5147
        %v5241 = vpop.f32.mrf.mxu0
        %v5242 = vadd.f32 0.0, %v5241
        %v5243 = vpop.f32.mrf.mxu0
        %v5244 = vpop.f32.mrf.mxu0
        %v5245 = vadd.f32 0.0, %v5244
        %v5246 = vpop.f32.mrf.mxu0
        %5247 = vmatprep.mubr.bf16.mxu0 0
        %5248 = vmatmul.mubr.bf16.gmra.mxu0 %v5150
        %v5249 = vpop.f32.mrf.mxu0
        %v5250 = vadd.f32 0.0, %v5249
        %v5251 = vpop.f32.mrf.mxu0
        %v5252 = vpop.f32.mrf.mxu0
        %v5253 = vadd.f32 0.0, %v5252
        %v5254 = vpop.f32.mrf.mxu0
        %5255 = vmatprep.mubr.bf16.mxu0 0
        %5256 = vmatmul.mubr.bf16.gmra.mxu0 %v5153
        %v5257 = vpop.f32.mrf.mxu0
        %v5258 = vadd.f32 0.0, %v5257
        %v5259 = vpop.f32.mrf.mxu0
        %v5260 = vpop.f32.mrf.mxu0
        %v5261 = vadd.f32 0.0, %v5260
        %v5262 = vpop.f32.mrf.mxu0
        %5263 = vmatprep.mubr.bf16.mxu0 0
        %5264 = vmatmul.mubr.bf16.gmra.mxu0 %v5156
        %v5265 = vpop.f32.mrf.mxu0
        %v5266 = vadd.f32 0.0, %v5265
        %v5267 = vpop.f32.mrf.mxu0
        %v5268 = vpop.f32.mrf.mxu0
        %v5269 = vadd.f32 0.0, %v5268
        %v5270 = vpop.f32.mrf.mxu0
        %5271 = vmatprep.mubr.bf16.mxu0 0
        %5272 = vmatmul.mubr.bf16.gmra.mxu0 %v5159
        %v5273 = vpop.f32.mrf.mxu0
        %v5274 = vadd.f32 0.0, %v5273
        %v5275 = vpop.f32.mrf.mxu0
        %v5276 = vpop.f32.mrf.mxu0
        %v5277 = vadd.f32 0.0, %v5276
        %v5278 = vpop.f32.mrf.mxu0
        %5279 = vmatprep.mubr.bf16.mxu0 0
        %5280 = vmatmul.mubr.bf16.gmra.mxu0 %v5162
        %v5281 = vpop.f32.mrf.mxu0
        %v5282 = vadd.f32 0.0, %v5281
        %v5283 = vpop.f32.mrf.mxu0
        %v5284 = vpop.f32.mrf.mxu0
        %v5285 = vadd.f32 0.0, %v5284
        %v5286 = vpop.f32.mrf.mxu0
        %5287 = vmatprep.mubr.bf16.mxu0 0
        %5288 = vmatmul.mubr.bf16.gmra.mxu0 %v5165
        %v5289 = vpop.f32.mrf.mxu0
        %v5290 = vadd.f32 0.0, %v5289
        %v5291 = vpop.f32.mrf.mxu0
        %v5292 = vpop.f32.mrf.mxu0
        %v5293 = vadd.f32 0.0, %v5292
        %v5294 = vpop.f32.mrf.mxu0
        %5295 = vmatprep.mubr.bf16.mxu0 0
        %5296 = vmatmul.mubr.bf16.gmra.mxu0 %v5168
        %v5297 = vpop.f32.mrf.mxu0
        %v5298 = vadd.f32 0.0, %v5297
        %v5299 = vpop.f32.mrf.mxu0
        %v5300 = vpop.f32.mrf.mxu0
        %v5301 = vadd.f32 0.0, %v5300
        %v5302 = vpop.f32.mrf.mxu0
        %5303 = vmatprep.mubr.bf16.mxu0 0
        %5304 = vmatmul.mubr.bf16.gmra.mxu0 %v5171
        %v5305 = vpop.f32.mrf.mxu0
        %v5306 = vadd.f32 0.0, %v5305
        %v5307 = vpop.f32.mrf.mxu0
        %v5308 = vpop.f32.mrf.mxu0
        %v5309 = vadd.f32 0.0, %v5308
        %v5310 = vpop.f32.mrf.mxu0
        %5311 = vmatprep.mubr.bf16.mxu0 0
        %5312 = vmatmul.mubr.bf16.gmra.mxu0 %v5174
        %v5313 = vpop.f32.mrf.mxu0
        %v5314 = vadd.f32 0.0, %v5313
        %v5315 = vpop.f32.mrf.mxu0
        %v5316 = vpop.f32.mrf.mxu0
        %v5317 = vadd.f32 0.0, %v5316
        %v5318 = vpop.f32.mrf.mxu0
        %5319 = vmatprep.mubr.bf16.mxu0 0
        %5320 = vmatmul.mubr.bf16.gmra.mxu0 %v5177
        %v5321 = vpop.f32.mrf.mxu0
        %v5322 = vadd.f32 0.0, %v5321
        %v5323 = vpop.f32.mrf.mxu0
        %v5324 = vpop.f32.mrf.mxu0
        %v5325 = vadd.f32 0.0, %v5324
        %v5326 = vpop.f32.mrf.mxu0
        %5327 = vmatprep.mubr.bf16.mxu0 0
        %5328 = vmatmul.mubr.bf16.gmra.mxu0 %v5180
        %v5329 = vpop.f32.mrf.mxu0
        %v5330 = vadd.f32 0.0, %v5329
        %v5331 = vpop.f32.mrf.mxu0
        %v5332 = vpop.f32.mrf.mxu0
        %v5333 = vadd.f32 0.0, %v5332
        %v5334 = vpop.f32.mrf.mxu0
        %5335 = vmatprep.mubr.bf16.mxu0 0
        %5336 = vmatmul.mubr.bf16.gmra.mxu0 %v5183
        %v5337 = vpop.f32.mrf.mxu0
        %v5338 = vadd.f32 0.0, %v5337
        %v5339 = vpop.f32.mrf.mxu0
        %v5340 = vpop.f32.mrf.mxu0
        %v5341 = vadd.f32 0.0, %v5340
        %v5342 = vpop.f32.mrf.mxu0
        %5343 = vmatprep.mubr.bf16.mxu0 0
        %5344 = vmatmul.mubr.bf16.gmra.mxu0 %v5186
        %v5345 = vpop.f32.mrf.mxu0
        %v5346 = vadd.f32 0.0, %v5345
        %v5347 = vpop.f32.mrf.mxu0
        %v5348 = vpop.f32.mrf.mxu0
        %v5349 = vadd.f32 0.0, %v5348
        %v5350 = vpop.f32.mrf.mxu0
        %5351 = vdwg.mxu0
        %v5352 = vadd.f32 %v4623, %v5226
        %v5353 = vadd.f32 %v4624, %v5229
        %v5354 = vadd.f32 %v4625, %v5234
        %v5355 = vadd.f32 %v4626, %v5237
        %v5356 = vadd.f32 %v4627, %v5242
        %v5357 = vadd.f32 %v4628, %v5245
        %v5358 = vadd.f32 %v4629, %v5250
        %v5359 = vadd.f32 %v4630, %v5253
        %v5360 = vadd.f32 %v4631, %v5258
        %v5361 = vadd.f32 %v4632, %v5261
        %v5362 = vadd.f32 %v4633, %v5266
        %v5363 = vadd.f32 %v4634, %v5269
        %v5364 = vadd.f32 %v4635, %v5274
        %v5365 = vadd.f32 %v4636, %v5277
        %v5366 = vadd.f32 %v4637, %v5282
        %v5367 = vadd.f32 %v4638, %v5285
        %v5368 = vadd.f32 %v4639, %v5290
        %v5369 = vadd.f32 %v4640, %v5293
        %v5370 = vadd.f32 %v4641, %v5298
        %v5371 = vadd.f32 %v4642, %v5301
        %v5372 = vadd.f32 %v4643, %v5306
        %v5373 = vadd.f32 %v4644, %v5309
        %v5374 = vadd.f32 %v4645, %v5314
        %v5375 = vadd.f32 %v4646, %v5317
        %v5376 = vadd.f32 %v4647, %v5322
        %v5377 = vadd.f32 %v4648, %v5325
        %v5378 = vadd.f32 %v4649, %v5330
        %v5379 = vadd.f32 %v4650, %v5333
        %v5380 = vadd.f32 %v4651, %v5338
        %v5381 = vadd.f32 %v4652, %v5341
        %v5382 = vadd.f32 %v4653, %v5346
        %v5383 = vadd.f32 %v4654, %v5349
        %v5384 = vld [vmem:[%s4297] sm:$0xe]
        %v5385 = vld [vmem:[%s4297 + $0xc] sm:$0xe]
        %v5386 = vld [vmem:[%s4297 + $0x18] sm:$0xe]
        %v5387 = vld [vmem:[%s4297 + $0x24] sm:$0xe]
        %v5388 = vld [vmem:[%s4297 + $0x30] sm:$0xe]
        %v5389 = vld [vmem:[%s4297 + $0x3c] sm:$0xe]
        %v5390 = vld [vmem:[%s4297 + $0x48] sm:$0xe]
        %v5391 = vld [vmem:[%s4297 + $0x54] sm:$0xe]
        %v5392 = vld [vmem:[%s4297 + $0x60] sm:$0xe]
        %v5393 = vld [vmem:[%s4297 + $0x6c] sm:$0xe]
        %v5394 = vld [vmem:[%s4297 + $0x78] sm:$0xe]
        %v5395 = vld [vmem:[%s4297 + $0x84] sm:$0xe]
        %v5396 = vld [vmem:[%s4297 + $0x90] sm:$0xe]
        %v5397 = vld [vmem:[%s4297 + $0x9c] sm:$0xe]
        %v5398 = vld [vmem:[%s4297 + $0xa8] sm:$0xe]
        %v5399 = vld [vmem:[%s4297 + $0xb4] sm:$0xe]
        %v5400 = vld [vmem:[%s2 + $0x10] sm:$0x3]
        %v5449 = vrot.slane %v5384, 5
        %v5450 = vrot.slane %v5449, 4
        %v5451 = vrot.slane %v4656, 5
        %v5452 = vsel %vm2333, %v5450, %v5451
        %v5453 = vrot.slane %v5451, 4
        %v5454 = vrot.slane %v4657, 5
        %v5455 = vsel %vm2333, %v5453, %v5454
        %v5456 = vrot.slane %v5385, 5
        %v5457 = vrot.slane %v5456, 4
        %v5458 = vrot.slane %v4659, 5
        %v5459 = vsel %vm2333, %v5457, %v5458
        %v5460 = vrot.slane %v5458, 4
        %v5461 = vrot.slane %v4660, 5
        %v5462 = vsel %vm2333, %v5460, %v5461
        %v5463 = vrot.slane %v5386, 5
        %v5464 = vrot.slane %v5463, 4
        %v5465 = vrot.slane %v4662, 5
        %v5466 = vsel %vm2333, %v5464, %v5465
        %v5467 = vrot.slane %v5465, 4
        %v5468 = vrot.slane %v4663, 5
        %v5469 = vsel %vm2333, %v5467, %v5468
        %v5470 = vrot.slane %v5387, 5
        %v5471 = vrot.slane %v5470, 4
        %v5472 = vrot.slane %v4665, 5
        %v5473 = vsel %vm2333, %v5471, %v5472
        %v5474 = vrot.slane %v5472, 4
        %v5475 = vrot.slane %v4666, 5
        %v5476 = vsel %vm2333, %v5474, %v5475
        %v5477 = vrot.slane %v5388, 5
        %v5478 = vrot.slane %v5477, 4
        %v5479 = vrot.slane %v4668, 5
        %v5480 = vsel %vm2333, %v5478, %v5479
        %v5481 = vrot.slane %v5479, 4
        %v5482 = vrot.slane %v4669, 5
        %v5483 = vsel %vm2333, %v5481, %v5482
        %v5484 = vrot.slane %v5389, 5
        %v5485 = vrot.slane %v5484, 4
        %v5486 = vrot.slane %v4671, 5
        %v5487 = vsel %vm2333, %v5485, %v5486
        %v5488 = vrot.slane %v5486, 4
        %v5489 = vrot.slane %v4672, 5
        %v5490 = vsel %vm2333, %v5488, %v5489
        %v5491 = vrot.slane %v5390, 5
        %v5492 = vrot.slane %v5491, 4
        %v5493 = vrot.slane %v4674, 5
        %v5494 = vsel %vm2333, %v5492, %v5493
        %v5495 = vrot.slane %v5493, 4
        %v5496 = vrot.slane %v4675, 5
        %v5497 = vsel %vm2333, %v5495, %v5496
        %v5498 = vrot.slane %v5391, 5
        %v5499 = vrot.slane %v5498, 4
        %v5500 = vrot.slane %v4677, 5
        %v5501 = vsel %vm2333, %v5499, %v5500
        %v5502 = vrot.slane %v5500, 4
        %v5503 = vrot.slane %v4678, 5
        %v5504 = vsel %vm2333, %v5502, %v5503
        %v5505 = vrot.slane %v5392, 5
        %v5506 = vrot.slane %v5505, 4
        %v5507 = vrot.slane %v4680, 5
        %v5508 = vsel %vm2333, %v5506, %v5507
        %v5509 = vrot.slane %v5507, 4
        %v5510 = vrot.slane %v4681, 5
        %v5511 = vsel %vm2333, %v5509, %v5510
        %v5512 = vrot.slane %v5393, 5
        %v5513 = vrot.slane %v5512, 4
        %v5514 = vrot.slane %v4683, 5
        %v5515 = vsel %vm2333, %v5513, %v5514
        %v5516 = vrot.slane %v5514, 4
        %v5517 = vrot.slane %v4684, 5
        %v5518 = vsel %vm2333, %v5516, %v5517
        %v5519 = vrot.slane %v5394, 5
        %v5520 = vrot.slane %v5519, 4
        %v5521 = vrot.slane %v4686, 5
        %v5522 = vsel %vm2333, %v5520, %v5521
        %v5523 = vrot.slane %v5521, 4
        %v5524 = vrot.slane %v4687, 5
        %v5525 = vsel %vm2333, %v5523, %v5524
        %v5526 = vrot.slane %v5395, 5
        %v5527 = vrot.slane %v5526, 4
        %v5528 = vrot.slane %v4689, 5
        %v5529 = vsel %vm2333, %v5527, %v5528
        %v5530 = vrot.slane %v5528, 4
        %v5531 = vrot.slane %v4690, 5
        %v5532 = vsel %vm2333, %v5530, %v5531
        %v5533 = vrot.slane %v5396, 5
        %v5534 = vrot.slane %v5533, 4
        %v5535 = vrot.slane %v4692, 5
        %v5536 = vsel %vm2333, %v5534, %v5535
        %v5537 = vrot.slane %v5535, 4
        %v5538 = vrot.slane %v4693, 5
        %v5539 = vsel %vm2333, %v5537, %v5538
        %v5540 = vrot.slane %v5397, 5
        %v5541 = vrot.slane %v5540, 4
        %v5542 = vrot.slane %v4695, 5
        %v5543 = vsel %vm2333, %v5541, %v5542
        %v5544 = vrot.slane %v5542, 4
        %v5545 = vrot.slane %v4696, 5
        %v5546 = vsel %vm2333, %v5544, %v5545
        %v5547 = vrot.slane %v5398, 5
        %v5548 = vrot.slane %v5547, 4
        %v5549 = vrot.slane %v4698, 5
        %v5550 = vsel %vm2333, %v5548, %v5549
        %v5551 = vrot.slane %v5549, 4
        %v5552 = vrot.slane %v4699, 5
        %v5553 = vsel %vm2333, %v5551, %v5552
        %v5554 = vrot.slane %v5399, 5
        %v5555 = vrot.slane %v5554, 4
        %v5556 = vrot.slane %v4701, 5
        %v5557 = vsel %vm2333, %v5555, %v5556
        %v5558 = vrot.slane %v5556, 4
        %v5559 = vrot.slane %v4702, 5
        %v5560 = vsel %vm2333, %v5558, %v5559
        %v5561 = vunpack.c.l.b16 %v5452
        %v5562 = vunpack.c.l.b16 %v5455
        %v5563 = vunpack.c.l.b16 %v5459
        %v5564 = vunpack.c.l.b16 %v5462
        %v5565 = vunpack.c.l.b16 %v5466
        %v5566 = vunpack.c.l.b16 %v5469
        %v5567 = vunpack.c.l.b16 %v5473
        %v5568 = vunpack.c.l.b16 %v5476
        %v5569 = vunpack.c.l.b16 %v5480
        %v5570 = vunpack.c.l.b16 %v5483
        %v5571 = vunpack.c.l.b16 %v5487
        %v5572 = vunpack.c.l.b16 %v5490
        %v5573 = vunpack.c.l.b16 %v5494
        %v5574 = vunpack.c.l.b16 %v5497
        %v5575 = vunpack.c.l.b16 %v5501
        %v5576 = vunpack.c.l.b16 %v5504
        %v5577 = vunpack.c.l.b16 %v5508
        %v5578 = vunpack.c.l.b16 %v5511
        %v5579 = vunpack.c.l.b16 %v5515
        %v5580 = vunpack.c.l.b16 %v5518
        %v5581 = vunpack.c.l.b16 %v5522
        %v5582 = vunpack.c.l.b16 %v5525
        %v5583 = vunpack.c.l.b16 %v5529
        %v5584 = vunpack.c.l.b16 %v5532
        %v5585 = vunpack.c.l.b16 %v5536
        %v5586 = vunpack.c.l.b16 %v5539
        %v5587 = vunpack.c.l.b16 %v5543
        %v5588 = vunpack.c.l.b16 %v5546
        %v5589 = vunpack.c.l.b16 %v5550
        %v5590 = vunpack.c.l.b16 %v5553
        %v5591 = vunpack.c.l.b16 %v5557
        %v5592 = vunpack.c.l.b16 %v5560
        %v5593 = vpack.c.b16 %v5562, %v5561
        %v5594 = vpack.c.b16 %v5564, %v5563
        %v5595 = vpack.c.b16 %v5566, %v5565
        %v5596 = vpack.c.b16 %v5568, %v5567
        %v5597 = vpack.c.b16 %v5570, %v5569
        %v5598 = vpack.c.b16 %v5572, %v5571
        %v5599 = vpack.c.b16 %v5574, %v5573
        %v5600 = vpack.c.b16 %v5576, %v5575
        %v5601 = vpack.c.b16 %v5578, %v5577
        %v5602 = vpack.c.b16 %v5580, %v5579
        %v5603 = vpack.c.b16 %v5582, %v5581
        %v5604 = vpack.c.b16 %v5584, %v5583
        %v5605 = vpack.c.b16 %v5586, %v5585
        %v5606 = vpack.c.b16 %v5588, %v5587
        %v5607 = vpack.c.b16 %v5590, %v5589
        %v5608 = vpack.c.b16 %v5592, %v5591
        %v5610 = vsel %vm1776, %v5593, 0
        %v5613 = vsel %vm1776, %v5594, 0
        %v5616 = vsel %vm1776, %v5595, 0
        %v5619 = vsel %vm1776, %v5596, 0
        %v5622 = vsel %vm1776, %v5597, 0
        %v5625 = vsel %vm1776, %v5598, 0
        %v5628 = vsel %vm1776, %v5599, 0
        %v5631 = vsel %vm1776, %v5600, 0
        %v5634 = vsel %vm1776, %v5601, 0
        %v5637 = vsel %vm1776, %v5602, 0
        %v5640 = vsel %vm1776, %v5603, 0
        %v5643 = vsel %vm1776, %v5604, 0
        %v5646 = vsel %vm1776, %v5605, 0
        %v5649 = vsel %vm1776, %v5606, 0
        %v5652 = vsel %vm1776, %v5607, 0
        %v5655 = vsel %vm1776, %v5608, 0
        %v5658 = vsel %vm1825, %v5400, 0
        %5660 = vmatprep.subr.bf16.mxu0 0
        %5661 = vmatpush1.bf16.msra.mxu0 0
        %5662 = vmatprep.subr.bf16.mxu0 0
        %5663 = vmatpush1.bf16.msra.mxu0 0
        %5664 = vmatprep.subr.bf16.mxu0 0
        %5665 = vmatpush1.bf16.msra.mxu0 0
        %5666 = vmatprep.subr.bf16.mxu0 0
        %5667 = vmatpush1.bf16.msra.mxu0 0
        %5668 = vmatprep.subr.bf16.mxu0 0
        %5669 = vmatpush1.bf16.msra.mxu0 0
        %5670 = vmatprep.subr.bf16.mxu0 0
        %5671 = vmatpush1.bf16.msra.mxu0 0
        %5672 = vmatprep.subr.bf16.mxu0 0
        %5673 = vmatpush1.bf16.msra.mxu0 0
        %5674 = vmatprep.subr.bf16.mxu0 0
        %5675 = vmatpush1.bf16.msra.mxu0 %v5658
        %5676 = vmatprep.subr.bf16.mxu0 0
        %5677 = vmatpush2.bf16.msra.mxu0 0
        %5678 = vmatprep.subr.bf16.mxu0 0
        %5679 = vmatpush2.bf16.msra.mxu0 0
        %5680 = vmatprep.subr.bf16.mxu0 0
        %5681 = vmatpush2.bf16.msra.mxu0 0
        %5682 = vmatprep.subr.bf16.mxu0 0
        %5683 = vmatpush2.bf16.msra.mxu0 0
        %5684 = vmatprep.subr.bf16.mxu0 0
        %5685 = vmatpush2.bf16.msra.mxu0 0
        %5686 = vmatprep.subr.bf16.mxu0 0
        %5687 = vmatpush2.bf16.msra.mxu0 0
        %5688 = vmatprep.subr.bf16.mxu0 0
        %5689 = vmatpush2.bf16.msra.mxu0 0
        %5690 = vmatprep.subr.bf16.mxu0 0
        %5691 = vmatpush2.bf16.msra.mxu0 0
        %5692 = vmatprep.mubr.bf16.mxu0 0
        %5693 = vmatmul.mubr.bf16.gmra.mxu0 %v5610
        %v5694 = vpop.f32.mrf.mxu0
        %v5695 = vadd.f32 0.0, %v5694
        %v5696 = vpop.f32.mrf.mxu0
        %v5697 = vpop.f32.mrf.mxu0
        %v5698 = vadd.f32 0.0, %v5697
        %v5699 = vpop.f32.mrf.mxu0
        %5700 = vmatprep.mubr.bf16.mxu0 0
        %5701 = vmatmul.mubr.bf16.gmra.mxu0 %v5613
        %v5702 = vpop.f32.mrf.mxu0
        %v5703 = vadd.f32 0.0, %v5702
        %v5704 = vpop.f32.mrf.mxu0
        %v5705 = vpop.f32.mrf.mxu0
        %v5706 = vadd.f32 0.0, %v5705
        %v5707 = vpop.f32.mrf.mxu0
        %5708 = vmatprep.mubr.bf16.mxu0 0
        %5709 = vmatmul.mubr.bf16.gmra.mxu0 %v5616
        %v5710 = vpop.f32.mrf.mxu0
        %v5711 = vadd.f32 0.0, %v5710
        %v5712 = vpop.f32.mrf.mxu0
        %v5713 = vpop.f32.mrf.mxu0
        %v5714 = vadd.f32 0.0, %v5713
        %v5715 = vpop.f32.mrf.mxu0
        %5716 = vmatprep.mubr.bf16.mxu0 0
        %5717 = vmatmul.mubr.bf16.gmra.mxu0 %v5619
        %v5718 = vpop.f32.mrf.mxu0
        %v5719 = vadd.f32 0.0, %v5718
        %v5720 = vpop.f32.mrf.mxu0
        %v5721 = vpop.f32.mrf.mxu0
        %v5722 = vadd.f32 0.0, %v5721
        %v5723 = vpop.f32.mrf.mxu0
        %5724 = vmatprep.mubr.bf16.mxu0 0
        %5725 = vmatmul.mubr.bf16.gmra.mxu0 %v5622
        %v5726 = vpop.f32.mrf.mxu0
        %v5727 = vadd.f32 0.0, %v5726
        %v5728 = vpop.f32.mrf.mxu0
        %v5729 = vpop.f32.mrf.mxu0
        %v5730 = vadd.f32 0.0, %v5729
        %v5731 = vpop.f32.mrf.mxu0
        %5732 = vmatprep.mubr.bf16.mxu0 0
        %5733 = vmatmul.mubr.bf16.gmra.mxu0 %v5625
        %v5734 = vpop.f32.mrf.mxu0
        %v5735 = vadd.f32 0.0, %v5734
        %v5736 = vpop.f32.mrf.mxu0
        %v5737 = vpop.f32.mrf.mxu0
        %v5738 = vadd.f32 0.0, %v5737
        %v5739 = vpop.f32.mrf.mxu0
        %5740 = vmatprep.mubr.bf16.mxu0 0
        %5741 = vmatmul.mubr.bf16.gmra.mxu0 %v5628
        %v5742 = vpop.f32.mrf.mxu0
        %v5743 = vadd.f32 0.0, %v5742
        %v5744 = vpop.f32.mrf.mxu0
        %v5745 = vpop.f32.mrf.mxu0
        %v5746 = vadd.f32 0.0, %v5745
        %v5747 = vpop.f32.mrf.mxu0
        %5748 = vmatprep.mubr.bf16.mxu0 0
        %5749 = vmatmul.mubr.bf16.gmra.mxu0 %v5631
        %v5750 = vpop.f32.mrf.mxu0
        %v5751 = vadd.f32 0.0, %v5750
        %v5752 = vpop.f32.mrf.mxu0
        %v5753 = vpop.f32.mrf.mxu0
        %v5754 = vadd.f32 0.0, %v5753
        %v5755 = vpop.f32.mrf.mxu0
        %5756 = vmatprep.mubr.bf16.mxu0 0
        %5757 = vmatmul.mubr.bf16.gmra.mxu0 %v5634
        %v5758 = vpop.f32.mrf.mxu0
        %v5759 = vadd.f32 0.0, %v5758
        %v5760 = vpop.f32.mrf.mxu0
        %v5761 = vpop.f32.mrf.mxu0
        %v5762 = vadd.f32 0.0, %v5761
        %v5763 = vpop.f32.mrf.mxu0
        %5764 = vmatprep.mubr.bf16.mxu0 0
        %5765 = vmatmul.mubr.bf16.gmra.mxu0 %v5637
        %v5766 = vpop.f32.mrf.mxu0
        %v5767 = vadd.f32 0.0, %v5766
        %v5768 = vpop.f32.mrf.mxu0
        %v5769 = vpop.f32.mrf.mxu0
        %v5770 = vadd.f32 0.0, %v5769
        %v5771 = vpop.f32.mrf.mxu0
        %5772 = vmatprep.mubr.bf16.mxu0 0
        %5773 = vmatmul.mubr.bf16.gmra.mxu0 %v5640
        %v5774 = vpop.f32.mrf.mxu0
        %v5775 = vadd.f32 0.0, %v5774
        %v5776 = vpop.f32.mrf.mxu0
        %v5777 = vpop.f32.mrf.mxu0
        %v5778 = vadd.f32 0.0, %v5777
        %v5779 = vpop.f32.mrf.mxu0
        %5780 = vmatprep.mubr.bf16.mxu0 0
        %5781 = vmatmul.mubr.bf16.gmra.mxu0 %v5643
        %v5782 = vpop.f32.mrf.mxu0
        %v5783 = vadd.f32 0.0, %v5782
        %v5784 = vpop.f32.mrf.mxu0
        %v5785 = vpop.f32.mrf.mxu0
        %v5786 = vadd.f32 0.0, %v5785
        %v5787 = vpop.f32.mrf.mxu0
        %5788 = vmatprep.mubr.bf16.mxu0 0
        %5789 = vmatmul.mubr.bf16.gmra.mxu0 %v5646
        %v5790 = vpop.f32.mrf.mxu0
        %v5791 = vadd.f32 0.0, %v5790
        %v5792 = vpop.f32.mrf.mxu0
        %v5793 = vpop.f32.mrf.mxu0
        %v5794 = vadd.f32 0.0, %v5793
        %v5795 = vpop.f32.mrf.mxu0
        %5796 = vmatprep.mubr.bf16.mxu0 0
        %5797 = vmatmul.mubr.bf16.gmra.mxu0 %v5649
        %v5798 = vpop.f32.mrf.mxu0
        %v5799 = vadd.f32 0.0, %v5798
        %v5800 = vpop.f32.mrf.mxu0
        %v5801 = vpop.f32.mrf.mxu0
        %v5802 = vadd.f32 0.0, %v5801
        %v5803 = vpop.f32.mrf.mxu0
        %5804 = vmatprep.mubr.bf16.mxu0 0
        %5805 = vmatmul.mubr.bf16.gmra.mxu0 %v5652
        %v5806 = vpop.f32.mrf.mxu0
        %v5807 = vadd.f32 0.0, %v5806
        %v5808 = vpop.f32.mrf.mxu0
        %v5809 = vpop.f32.mrf.mxu0
        %v5810 = vadd.f32 0.0, %v5809
        %v5811 = vpop.f32.mrf.mxu0
        %5812 = vmatprep.mubr.bf16.mxu0 0
        %5813 = vmatmul.mubr.bf16.gmra.mxu0 %v5655
        %v5814 = vpop.f32.mrf.mxu0
        %v5815 = vadd.f32 0.0, %v5814
        %v5816 = vpop.f32.mrf.mxu0
        %v5817 = vpop.f32.mrf.mxu0
        %v5818 = vadd.f32 0.0, %v5817
        %v5819 = vpop.f32.mrf.mxu0
        %5820 = vdwg.mxu0
        %v5821 = vadd.f32 %v5352, %v5695
        %v5822 = vadd.f32 %v5353, %v5698
        %v5823 = vadd.f32 %v5354, %v5703
        %v5824 = vadd.f32 %v5355, %v5706
        %v5825 = vadd.f32 %v5356, %v5711
        %v5826 = vadd.f32 %v5357, %v5714
        %v5827 = vadd.f32 %v5358, %v5719
        %v5828 = vadd.f32 %v5359, %v5722
        %v5829 = vadd.f32 %v5360, %v5727
        %v5830 = vadd.f32 %v5361, %v5730
        %v5831 = vadd.f32 %v5362, %v5735
        %v5832 = vadd.f32 %v5363, %v5738
        %v5833 = vadd.f32 %v5364, %v5743
        %v5834 = vadd.f32 %v5365, %v5746
        %v5835 = vadd.f32 %v5366, %v5751
        %v5836 = vadd.f32 %v5367, %v5754
        %v5837 = vadd.f32 %v5368, %v5759
        %v5838 = vadd.f32 %v5369, %v5762
        %v5839 = vadd.f32 %v5370, %v5767
        %v5840 = vadd.f32 %v5371, %v5770
        %v5841 = vadd.f32 %v5372, %v5775
        %v5842 = vadd.f32 %v5373, %v5778
        %v5843 = vadd.f32 %v5374, %v5783
        %v5844 = vadd.f32 %v5375, %v5786
        %v5845 = vadd.f32 %v5376, %v5791
        %v5846 = vadd.f32 %v5377, %v5794
        %v5847 = vadd.f32 %v5378, %v5799
        %v5848 = vadd.f32 %v5379, %v5802
        %v5849 = vadd.f32 %v5380, %v5807
        %v5850 = vadd.f32 %v5381, %v5810
        %v5851 = vadd.f32 %v5382, %v5815
        %v5852 = vadd.f32 %v5383, %v5818
        %v5853 = vld [vmem:[%s5] sm:$0x1]
        %v5855 = vlaneseq
        %v5856 = vshrl.u32 %v5855, 7
        %v5857 = vsub.s32 0, %v5856
        %v5858 = vrot.slane %v5853, %v5857
        %v5860 = vadd.f32 %v5821, %v5858
        %v5861 = vadd.f32 %v5822, %v5858
        %v5862 = vadd.f32 %v5823, %v5858
        %v5863 = vadd.f32 %v5824, %v5858
        %v5864 = vadd.f32 %v5825, %v5858
        %v5865 = vadd.f32 %v5826, %v5858
        %v5866 = vadd.f32 %v5827, %v5858
        %v5867 = vadd.f32 %v5828, %v5858
        %v5868 = vadd.f32 %v5829, %v5858
        %v5869 = vadd.f32 %v5830, %v5858
        %v5870 = vadd.f32 %v5831, %v5858
        %v5871 = vadd.f32 %v5832, %v5858
        %v5872 = vadd.f32 %v5833, %v5858
        %v5873 = vadd.f32 %v5834, %v5858
        %v5874 = vadd.f32 %v5835, %v5858
        %v5875 = vadd.f32 %v5836, %v5858
        %v5876 = vadd.f32 %v5837, %v5858
        %v5877 = vadd.f32 %v5838, %v5858
        %v5878 = vadd.f32 %v5839, %v5858
        %v5879 = vadd.f32 %v5840, %v5858
        %v5880 = vadd.f32 %v5841, %v5858
        %v5881 = vadd.f32 %v5842, %v5858
        %v5882 = vadd.f32 %v5843, %v5858
        %v5883 = vadd.f32 %v5844, %v5858
        %v5884 = vadd.f32 %v5845, %v5858
        %v5885 = vadd.f32 %v5846, %v5858
        %v5886 = vadd.f32 %v5847, %v5858
        %v5887 = vadd.f32 %v5848, %v5858
        %v5888 = vadd.f32 %v5849, %v5858
        %v5889 = vadd.f32 %v5850, %v5858
        %v5890 = vadd.f32 %v5851, %v5858
        %v5891 = vadd.f32 %v5852, %v5858
        %v5892 = vmax.f32 %v5860, 0.0
        %v5893 = vmax.f32 %v5861, 0.0
        %v5894 = vmax.f32 %v5862, 0.0
        %v5895 = vmax.f32 %v5863, 0.0
        %v5896 = vmax.f32 %v5864, 0.0
        %v5897 = vmax.f32 %v5865, 0.0
        %v5898 = vmax.f32 %v5866, 0.0
        %v5899 = vmax.f32 %v5867, 0.0
        %v5900 = vmax.f32 %v5868, 0.0
        %v5901 = vmax.f32 %v5869, 0.0
        %v5902 = vmax.f32 %v5870, 0.0
        %v5903 = vmax.f32 %v5871, 0.0
        %v5904 = vmax.f32 %v5872, 0.0
        %v5905 = vmax.f32 %v5873, 0.0
        %v5906 = vmax.f32 %v5874, 0.0
        %v5907 = vmax.f32 %v5875, 0.0
        %v5908 = vmax.f32 %v5876, 0.0
        %v5909 = vmax.f32 %v5877, 0.0
        %v5910 = vmax.f32 %v5878, 0.0
        %v5911 = vmax.f32 %v5879, 0.0
        %v5912 = vmax.f32 %v5880, 0.0
        %v5913 = vmax.f32 %v5881, 0.0
        %v5914 = vmax.f32 %v5882, 0.0
        %v5915 = vmax.f32 %v5883, 0.0
        %v5916 = vmax.f32 %v5884, 0.0
        %v5917 = vmax.f32 %v5885, 0.0
        %v5918 = vmax.f32 %v5886, 0.0
        %v5919 = vmax.f32 %v5887, 0.0
        %v5920 = vmax.f32 %v5888, 0.0
        %v5921 = vmax.f32 %v5889, 0.0
        %v5922 = vmax.f32 %v5890, 0.0
        %v5923 = vmax.f32 %v5891, 0.0
        %v5924 = vpack.c.bf16 %v5893, %v5892
        %v5925 = vpack.c.bf16 %v5895, %v5894
        %v5926 = vpack.c.bf16 %v5897, %v5896
        %v5927 = vpack.c.bf16 %v5899, %v5898
        %v5928 = vpack.c.bf16 %v5901, %v5900
        %v5929 = vpack.c.bf16 %v5903, %v5902
        %v5930 = vpack.c.bf16 %v5905, %v5904
        %v5931 = vpack.c.bf16 %v5907, %v5906
        %v5932 = vpack.c.bf16 %v5909, %v5908
        %v5933 = vpack.c.bf16 %v5911, %v5910
        %v5934 = vpack.c.bf16 %v5913, %v5912
        %v5935 = vpack.c.bf16 %v5915, %v5914
        %v5936 = vpack.c.bf16 %v5917, %v5916
        %v5937 = vpack.c.bf16 %v5919, %v5918
        %v5938 = vpack.c.bf16 %v5921, %v5920
        %v5939 = vpack.c.bf16 %v5923, %v5922
        %v5940 = vld [vmem:[%s3] sm:$0x3]
        %v5941 = vld [vmem:[%s6] sm:$0x1]
        %v5943 = vlaneseq
        %v5944 = vshrl.u32 %v5943, 7
        %v5945 = vsub.s32 0, %v5944
        %v5946 = vrot.slane %v5941, %v5945
        %v5949 = vsel %vm1776, %v5924, 0
        %v5952 = vsel %vm1776, %v5925, 0
        %v5955 = vsel %vm1776, %v5926, 0
        %v5958 = vsel %vm1776, %v5927, 0
        %v5961 = vsel %vm1776, %v5928, 0
        %v5964 = vsel %vm1776, %v5929, 0
        %v5967 = vsel %vm1776, %v5930, 0
        %v5970 = vsel %vm1776, %v5931, 0
        %v5973 = vsel %vm1776, %v5932, 0
        %v5976 = vsel %vm1776, %v5933, 0
        %v5979 = vsel %vm1776, %v5934, 0
        %v5982 = vsel %vm1776, %v5935, 0
        %v5985 = vsel %vm1776, %v5936, 0
        %v5988 = vsel %vm1776, %v5937, 0
        %v5991 = vsel %vm1776, %v5938, 0
        %v5994 = vsel %vm1776, %v5939, 0
        %v5997 = vsel %vm1825, %v5940, 0
        %5999 = vmatprep.subr.bf16.mxu0 0
        %6000 = vmatpush1.bf16.msra.mxu0 0
        %6001 = vmatprep.subr.bf16.mxu0 0
        %6002 = vmatpush1.bf16.msra.mxu0 0
        %6003 = vmatprep.subr.bf16.mxu0 0
        %6004 = vmatpush1.bf16.msra.mxu0 0
        %6005 = vmatprep.subr.bf16.mxu0 0
        %6006 = vmatpush1.bf16.msra.mxu0 0
        %6007 = vmatprep.subr.bf16.mxu0 0
        %6008 = vmatpush1.bf16.msra.mxu0 0
        %6009 = vmatprep.subr.bf16.mxu0 0
        %6010 = vmatpush1.bf16.msra.mxu0 0
        %6011 = vmatprep.subr.bf16.mxu0 0
        %6012 = vmatpush1.bf16.msra.mxu0 0
        %6013 = vmatprep.subr.bf16.mxu0 0
        %6014 = vmatpush1.bf16.msra.mxu0 %v5997
        %6015 = vmatprep.subr.bf16.mxu0 0
        %6016 = vmatpush2.bf16.msra.mxu0 0
        %6017 = vmatprep.subr.bf16.mxu0 0
        %6018 = vmatpush2.bf16.msra.mxu0 0
        %6019 = vmatprep.subr.bf16.mxu0 0
        %6020 = vmatpush2.bf16.msra.mxu0 0
        %6021 = vmatprep.subr.bf16.mxu0 0
        %6022 = vmatpush2.bf16.msra.mxu0 0
        %6023 = vmatprep.subr.bf16.mxu0 0
        %6024 = vmatpush2.bf16.msra.mxu0 0
        %6025 = vmatprep.subr.bf16.mxu0 0
        %6026 = vmatpush2.bf16.msra.mxu0 0
        %6027 = vmatprep.subr.bf16.mxu0 0
        %6028 = vmatpush2.bf16.msra.mxu0 0
        %6029 = vmatprep.subr.bf16.mxu0 0
        %6030 = vmatpush2.bf16.msra.mxu0 0
        %6031 = vmatprep.mubr.bf16.mxu0 0
        %6032 = vmatmul.mubr.bf16.gmra.mxu0 %v5949
        %v6033 = vpop.f32.mrf.mxu0
        %v6034 = vadd.f32 %v5946, %v6033
        %v6035 = vpop.f32.mrf.mxu0
        %v6036 = vpop.f32.mrf.mxu0
        %v6037 = vadd.f32 %v5946, %v6036
        %v6038 = vpop.f32.mrf.mxu0
        %6039 = vmatprep.mubr.bf16.mxu0 0
        %6040 = vmatmul.mubr.bf16.gmra.mxu0 %v5952
        %v6041 = vpop.f32.mrf.mxu0
        %v6042 = vadd.f32 %v5946, %v6041
        %v6043 = vpop.f32.mrf.mxu0
        %v6044 = vpop.f32.mrf.mxu0
        %v6045 = vadd.f32 %v5946, %v6044
        %v6046 = vpop.f32.mrf.mxu0
        %6047 = vmatprep.mubr.bf16.mxu0 0
        %6048 = vmatmul.mubr.bf16.gmra.mxu0 %v5955
        %v6049 = vpop.f32.mrf.mxu0
        %v6050 = vadd.f32 %v5946, %v6049
        %v6051 = vpop.f32.mrf.mxu0
        %v6052 = vpop.f32.mrf.mxu0
        %v6053 = vadd.f32 %v5946, %v6052
        %v6054 = vpop.f32.mrf.mxu0
        %6055 = vmatprep.mubr.bf16.mxu0 0
        %6056 = vmatmul.mubr.bf16.gmra.mxu0 %v5958
        %v6057 = vpop.f32.mrf.mxu0
        %v6058 = vadd.f32 %v5946, %v6057
        %v6059 = vpop.f32.mrf.mxu0
        %v6060 = vpop.f32.mrf.mxu0
        %v6061 = vadd.f32 %v5946, %v6060
        %v6062 = vpop.f32.mrf.mxu0
        %6063 = vmatprep.mubr.bf16.mxu0 0
        %6064 = vmatmul.mubr.bf16.gmra.mxu0 %v5961
        %v6065 = vpop.f32.mrf.mxu0
        %v6066 = vadd.f32 %v5946, %v6065
        %v6067 = vpop.f32.mrf.mxu0
        %v6068 = vpop.f32.mrf.mxu0
        %v6069 = vadd.f32 %v5946, %v6068
        %v6070 = vpop.f32.mrf.mxu0
        %6071 = vmatprep.mubr.bf16.mxu0 0
        %6072 = vmatmul.mubr.bf16.gmra.mxu0 %v5964
        %v6073 = vpop.f32.mrf.mxu0
        %v6074 = vadd.f32 %v5946, %v6073
        %v6075 = vpop.f32.mrf.mxu0
        %v6076 = vpop.f32.mrf.mxu0
        %v6077 = vadd.f32 %v5946, %v6076
        %v6078 = vpop.f32.mrf.mxu0
        %6079 = vmatprep.mubr.bf16.mxu0 0
        %6080 = vmatmul.mubr.bf16.gmra.mxu0 %v5967
        %v6081 = vpop.f32.mrf.mxu0
        %v6082 = vadd.f32 %v5946, %v6081
        %v6083 = vpop.f32.mrf.mxu0
        %v6084 = vpop.f32.mrf.mxu0
        %v6085 = vadd.f32 %v5946, %v6084
        %v6086 = vpop.f32.mrf.mxu0
        %6087 = vmatprep.mubr.bf16.mxu0 0
        %6088 = vmatmul.mubr.bf16.gmra.mxu0 %v5970
        %v6089 = vpop.f32.mrf.mxu0
        %v6090 = vadd.f32 %v5946, %v6089
        %v6091 = vpop.f32.mrf.mxu0
        %v6092 = vpop.f32.mrf.mxu0
        %v6093 = vadd.f32 %v5946, %v6092
        %v6094 = vpop.f32.mrf.mxu0
        %6095 = vmatprep.mubr.bf16.mxu0 0
        %6096 = vmatmul.mubr.bf16.gmra.mxu0 %v5973
        %v6097 = vpop.f32.mrf.mxu0
        %v6098 = vadd.f32 %v5946, %v6097
        %v6099 = vpop.f32.mrf.mxu0
        %v6100 = vpop.f32.mrf.mxu0
        %v6101 = vadd.f32 %v5946, %v6100
        %v6102 = vpop.f32.mrf.mxu0
        %6103 = vmatprep.mubr.bf16.mxu0 0
        %6104 = vmatmul.mubr.bf16.gmra.mxu0 %v5976
        %v6105 = vpop.f32.mrf.mxu0
        %v6106 = vadd.f32 %v5946, %v6105
        %v6107 = vpop.f32.mrf.mxu0
        %v6108 = vpop.f32.mrf.mxu0
        %v6109 = vadd.f32 %v5946, %v6108
        %v6110 = vpop.f32.mrf.mxu0
        %6111 = vmatprep.mubr.bf16.mxu0 0
        %6112 = vmatmul.mubr.bf16.gmra.mxu0 %v5979
        %v6113 = vpop.f32.mrf.mxu0
        %v6114 = vadd.f32 %v5946, %v6113
        %v6115 = vpop.f32.mrf.mxu0
        %v6116 = vpop.f32.mrf.mxu0
        %v6117 = vadd.f32 %v5946, %v6116
        %v6118 = vpop.f32.mrf.mxu0
        %6119 = vmatprep.mubr.bf16.mxu0 0
        %6120 = vmatmul.mubr.bf16.gmra.mxu0 %v5982
        %v6121 = vpop.f32.mrf.mxu0
        %v6122 = vadd.f32 %v5946, %v6121
        %v6123 = vpop.f32.mrf.mxu0
        %v6124 = vpop.f32.mrf.mxu0
        %v6125 = vadd.f32 %v5946, %v6124
        %v6126 = vpop.f32.mrf.mxu0
        %6127 = vmatprep.mubr.bf16.mxu0 0
        %6128 = vmatmul.mubr.bf16.gmra.mxu0 %v5985
        %v6129 = vpop.f32.mrf.mxu0
        %v6130 = vadd.f32 %v5946, %v6129
        %v6131 = vpop.f32.mrf.mxu0
        %v6132 = vpop.f32.mrf.mxu0
        %v6133 = vadd.f32 %v5946, %v6132
        %v6134 = vpop.f32.mrf.mxu0
        %6135 = vmatprep.mubr.bf16.mxu0 0
        %6136 = vmatmul.mubr.bf16.gmra.mxu0 %v5988
        %v6137 = vpop.f32.mrf.mxu0
        %v6138 = vadd.f32 %v5946, %v6137
        %v6139 = vpop.f32.mrf.mxu0
        %v6140 = vpop.f32.mrf.mxu0
        %v6141 = vadd.f32 %v5946, %v6140
        %v6142 = vpop.f32.mrf.mxu0
        %6143 = vmatprep.mubr.bf16.mxu0 0
        %6144 = vmatmul.mubr.bf16.gmra.mxu0 %v5991
        %v6145 = vpop.f32.mrf.mxu0
        %v6146 = vadd.f32 %v5946, %v6145
        %v6147 = vpop.f32.mrf.mxu0
        %v6148 = vpop.f32.mrf.mxu0
        %v6149 = vadd.f32 %v5946, %v6148
        %v6150 = vpop.f32.mrf.mxu0
        %6151 = vmatprep.mubr.bf16.mxu0 0
        %6152 = vmatmul.mubr.bf16.gmra.mxu0 %v5994
        %v6153 = vpop.f32.mrf.mxu0
        %v6154 = vadd.f32 %v5946, %v6153
        %v6155 = vpop.f32.mrf.mxu0
        %v6156 = vpop.f32.mrf.mxu0
        %v6157 = vadd.f32 %v5946, %v6156
        %v6158 = vpop.f32.mrf.mxu0
        %6159 = vdwg.mxu0
        %v6160 = vsel %vm402, %v6034, 0.0
        %v6161 = vsel %vm402, %v6037, 0.0
        %v6162 = vadd.f32 %v6160, %v6161
        %v6163 = vsel %vm402, %v6042, 0.0
        %v6164 = vadd.f32 %v6162, %v6163
        %v6165 = vsel %vm402, %v6045, 0.0
        %v6166 = vadd.f32 %v6164, %v6165
        %v6167 = vsel %vm402, %v6050, 0.0
        %v6168 = vadd.f32 %v6166, %v6167
        %v6169 = vsel %vm402, %v6053, 0.0
        %v6170 = vadd.f32 %v6168, %v6169
        %v6171 = vsel %vm402, %v6058, 0.0
        %v6172 = vadd.f32 %v6170, %v6171
        %v6173 = vsel %vm402, %v6061, 0.0
        %v6174 = vadd.f32 %v6172, %v6173
        %v6175 = vsel %vm402, %v6066, 0.0
        %v6176 = vadd.f32 %v6174, %v6175
        %v6177 = vsel %vm402, %v6069, 0.0
        %v6178 = vadd.f32 %v6176, %v6177
        %v6179 = vsel %vm402, %v6074, 0.0
        %v6180 = vadd.f32 %v6178, %v6179
        %v6181 = vsel %vm402, %v6077, 0.0
        %v6182 = vadd.f32 %v6180, %v6181
        %v6183 = vsel %vm402, %v6082, 0.0
        %v6184 = vadd.f32 %v6182, %v6183
        %v6185 = vsel %vm402, %v6085, 0.0
        %v6186 = vadd.f32 %v6184, %v6185
        %v6187 = vsel %vm402, %v6090, 0.0
        %v6188 = vadd.f32 %v6186, %v6187
        %v6189 = vsel %vm402, %v6093, 0.0
        %v6190 = vadd.f32 %v6188, %v6189
        %v6191 = vsel %vm402, %v6098, 0.0
        %v6192 = vadd.f32 %v6190, %v6191
        %v6193 = vsel %vm402, %v6101, 0.0
        %v6194 = vadd.f32 %v6192, %v6193
        %v6195 = vsel %vm402, %v6106, 0.0
        %v6196 = vadd.f32 %v6194, %v6195
        %v6197 = vsel %vm402, %v6109, 0.0
        %v6198 = vadd.f32 %v6196, %v6197
        %v6199 = vsel %vm402, %v6114, 0.0
        %v6200 = vadd.f32 %v6198, %v6199
        %v6201 = vsel %vm402, %v6117, 0.0
        %v6202 = vadd.f32 %v6200, %v6201
        %v6203 = vsel %vm402, %v6122, 0.0
        %v6204 = vadd.f32 %v6202, %v6203
        %v6205 = vsel %vm402, %v6125, 0.0
        %v6206 = vadd.f32 %v6204, %v6205
        %v6207 = vsel %vm402, %v6130, 0.0
        %v6208 = vadd.f32 %v6206, %v6207
        %v6209 = vsel %vm402, %v6133, 0.0
        %v6210 = vadd.f32 %v6208, %v6209
        %v6211 = vsel %vm402, %v6138, 0.0
        %v6212 = vadd.f32 %v6210, %v6211
        %v6213 = vsel %vm402, %v6141, 0.0
        %v6214 = vadd.f32 %v6212, %v6213
        %v6215 = vsel %vm402, %v6146, 0.0
        %v6216 = vadd.f32 %v6214, %v6215
        %v6217 = vsel %vm402, %v6149, 0.0
        %v6218 = vadd.f32 %v6216, %v6217
        %v6219 = vsel %vm402, %v6154, 0.0
        %v6220 = vadd.f32 %v6218, %v6219
        %v6221 = vsel %vm402, %v6157, 0.0
        %v6222 = vadd.f32 %v6220, %v6221
        %v6223 = vrot.slane %v6222, 4
        %v6224 = vadd.f32 %v6222, %v6223
        %v6225 = vrot.slane %v6224, 2
        %v6226 = vadd.f32 %v6224, %v6225
        %v6227 = vrot.slane %v6226, 1
        %v6228 = vadd.f32 %v6226, %v6227
        %v6229 = vmul.f32 %v6228, 0.00390625
        %6231 = vrot.lane.b32.xlu0 %v6229, 1
        %v6232 = vpop.permute.xlu0 %6231
        %vm6234 = vcmask 7168
        %v6235 = vsel %vm6234, 0.0, %v6232
        %6236 = vrot.lane.b32.xlu0 %v6229, 127
        %v6237 = vpop.permute.xlu0 %6236
        %vm6239 = vcmask 121856
        %v6240 = vsel %vm6239, %v6237, 0.0
        %s6241 = sld [smem:[#allocation7]]
        %v6242 = vstv %s6241
        %v6243 = vmul.f32 %v6242, %v6235
        %s6244 = sld [smem:[#allocation7 + $0x1]]
        %v6245 = vstv %s6244
        %v6246 = vmul.f32 %v6245, %v6229
        %v6247 = vadd.f32 %v6243, %v6246
        %s6248 = sld [smem:[#allocation7 + $0x2]]
        %v6249 = vstv %s6248
        %v6250 = vmul.f32 %v6249, %v6240
        %v6251 = vadd.f32 %v6247, %v6250
        %v6252 = vsub.f32 0.0, %v6251
        %v6253 = vmul.f32 %v6252, 1.442695
        %v6254 = vpow.pop %v6253
        %v6255 = vadd.f32 %v6254, 1.0
        %v6256 = vrcp.pop %v6255
        %v6257 = vmul.f32 1.0, %v6256
        %v6258 = vlaneseq
        %v6259 = vshrl.u32 %v6258, 7
        %v6260 = vsub.s32 0, %v6259
        %v6261 = vrot.slane %v6257, %v6260
        %v6262 = vmul.f32 %v6034, %v6261
        %v6263 = vmul.f32 %v6037, %v6261
        %v6264 = vmul.f32 %v6042, %v6261
        %v6265 = vmul.f32 %v6045, %v6261
        %v6266 = vmul.f32 %v6050, %v6261
        %v6267 = vmul.f32 %v6053, %v6261
        %v6268 = vmul.f32 %v6058, %v6261
        %v6269 = vmul.f32 %v6061, %v6261
        %v6270 = vmul.f32 %v6066, %v6261
        %v6271 = vmul.f32 %v6069, %v6261
        %v6272 = vmul.f32 %v6074, %v6261
        %v6273 = vmul.f32 %v6077, %v6261
        %v6274 = vmul.f32 %v6082, %v6261
        %v6275 = vmul.f32 %v6085, %v6261
        %v6276 = vmul.f32 %v6090, %v6261
        %v6277 = vmul.f32 %v6093, %v6261
        %v6278 = vmul.f32 %v6098, %v6261
        %v6279 = vmul.f32 %v6101, %v6261
        %v6280 = vmul.f32 %v6106, %v6261
        %v6281 = vmul.f32 %v6109, %v6261
        %v6282 = vmul.f32 %v6114, %v6261
        %v6283 = vmul.f32 %v6117, %v6261
        %v6284 = vmul.f32 %v6122, %v6261
        %v6285 = vmul.f32 %v6125, %v6261
        %v6286 = vmul.f32 %v6130, %v6261
        %v6287 = vmul.f32 %v6133, %v6261
        %v6288 = vmul.f32 %v6138, %v6261
        %v6289 = vmul.f32 %v6141, %v6261
        %v6290 = vmul.f32 %v6146, %v6261
        %v6291 = vmul.f32 %v6149, %v6261
        %v6292 = vmul.f32 %v6154, %v6261
        %v6293 = vmul.f32 %v6157, %v6261
        %v6294 = vadd.f32 %v6262, %v339
        %v6295 = vadd.f32 %v6263, %v340
        %v6296 = vadd.f32 %v6264, %v341
        %v6297 = vadd.f32 %v6265, %v342
        %v6298 = vadd.f32 %v6266, %v343
        %v6299 = vadd.f32 %v6267, %v344
        %v6300 = vadd.f32 %v6268, %v345
        %v6301 = vadd.f32 %v6269, %v346
        %v6302 = vadd.f32 %v6270, %v347
        %v6303 = vadd.f32 %v6271, %v348
        %v6304 = vadd.f32 %v6272, %v349
        %v6305 = vadd.f32 %v6273, %v350
        %v6306 = vadd.f32 %v6274, %v351
        %v6307 = vadd.f32 %v6275, %v352
        %v6308 = vadd.f32 %v6276, %v353
        %v6309 = vadd.f32 %v6277, %v354
        %v6310 = vadd.f32 %v6278, %v355
        %v6311 = vadd.f32 %v6279, %v356
        %v6312 = vadd.f32 %v6280, %v357
        %v6313 = vadd.f32 %v6281, %v358
        %v6314 = vadd.f32 %v6282, %v359
        %v6315 = vadd.f32 %v6283, %v360
        %v6316 = vadd.f32 %v6284, %v361
        %v6317 = vadd.f32 %v6285, %v362
        %v6318 = vadd.f32 %v6286, %v363
        %v6319 = vadd.f32 %v6287, %v364
        %v6320 = vadd.f32 %v6288, %v365
        %v6321 = vadd.f32 %v6289, %v366
        %v6322 = vadd.f32 %v6290, %v367
        %v6323 = vadd.f32 %v6291, %v368
        %v6324 = vadd.f32 %v6292, %v369
        %v6325 = vadd.f32 %v6293, %v370
        %v6326 = vmax.f32 %v6294, 0.0
        %v6327 = vmax.f32 %v6295, 0.0
        %v6328 = vmax.f32 %v6296, 0.0
        %v6329 = vmax.f32 %v6297, 0.0
        %v6330 = vmax.f32 %v6298, 0.0
        %v6331 = vmax.f32 %v6299, 0.0
        %v6332 = vmax.f32 %v6300, 0.0
        %v6333 = vmax.f32 %v6301, 0.0
        %v6334 = vmax.f32 %v6302, 0.0
        %v6335 = vmax.f32 %v6303, 0.0
        %v6336 = vmax.f32 %v6304, 0.0
        %v6337 = vmax.f32 %v6305, 0.0
        %v6338 = vmax.f32 %v6306, 0.0
        %v6339 = vmax.f32 %v6307, 0.0
        %v6340 = vmax.f32 %v6308, 0.0
        %v6341 = vmax.f32 %v6309, 0.0
        %v6342 = vmax.f32 %v6310, 0.0
        %v6343 = vmax.f32 %v6311, 0.0
        %v6344 = vmax.f32 %v6312, 0.0
        %v6345 = vmax.f32 %v6313, 0.0
        %v6346 = vmax.f32 %v6314, 0.0
        %v6347 = vmax.f32 %v6315, 0.0
        %v6348 = vmax.f32 %v6316, 0.0
        %v6349 = vmax.f32 %v6317, 0.0
        %v6350 = vmax.f32 %v6318, 0.0
        %v6351 = vmax.f32 %v6319, 0.0
        %v6352 = vmax.f32 %v6320, 0.0
        %v6353 = vmax.f32 %v6321, 0.0
        %v6354 = vmax.f32 %v6322, 0.0
        %v6355 = vmax.f32 %v6323, 0.0
        %v6356 = vmax.f32 %v6324, 0.0
        %v6357 = vmax.f32 %v6325, 0.0
        %6358 = vst.msk [vmem:[%s337] sm:$0xff] %vm402, %v6326
        %6359 = vst.msk [vmem:[%s337 + $0x8] sm:$0xff] %vm402, %v6327
        %6360 = vst.msk [vmem:[%s337 + $0x10] sm:$0xff] %vm402, %v6328
        %6361 = vst.msk [vmem:[%s337 + $0x18] sm:$0xff] %vm402, %v6329
        %6362 = vst.msk [vmem:[%s337 + $0x20] sm:$0xff] %vm402, %v6330
        %6363 = vst.msk [vmem:[%s337 + $0x28] sm:$0xff] %vm402, %v6331
        %6364 = vst.msk [vmem:[%s337 + $0x30] sm:$0xff] %vm402, %v6332
        %6365 = vst.msk [vmem:[%s337 + $0x38] sm:$0xff] %vm402, %v6333
        %6366 = vst.msk [vmem:[%s337 + $0x40] sm:$0xff] %vm402, %v6334
        %6367 = vst.msk [vmem:[%s337 + $0x48] sm:$0xff] %vm402, %v6335
        %6368 = vst.msk [vmem:[%s337 + $0x50] sm:$0xff] %vm402, %v6336
        %6369 = vst.msk [vmem:[%s337 + $0x58] sm:$0xff] %vm402, %v6337
        %6370 = vst.msk [vmem:[%s337 + $0x60] sm:$0xff] %vm402, %v6338
        %6371 = vst.msk [vmem:[%s337 + $0x68] sm:$0xff] %vm402, %v6339
        %6372 = vst.msk [vmem:[%s337 + $0x70] sm:$0xff] %vm402, %v6340
        %6373 = vst.msk [vmem:[%s337 + $0x78] sm:$0xff] %vm402, %v6341
        %6374 = vst.msk [vmem:[%s337 + $0x80] sm:$0xff] %vm402, %v6342
        %6375 = vst.msk [vmem:[%s337 + $0x88] sm:$0xff] %vm402, %v6343
        %6376 = vst.msk [vmem:[%s337 + $0x90] sm:$0xff] %vm402, %v6344
        %6377 = vst.msk [vmem:[%s337 + $0x98] sm:$0xff] %vm402, %v6345
        %6378 = vst.msk [vmem:[%s337 + $0xa0] sm:$0xff] %vm402, %v6346
        %6379 = vst.msk [vmem:[%s337 + $0xa8] sm:$0xff] %vm402, %v6347
        %6380 = vst.msk [vmem:[%s337 + $0xb0] sm:$0xff] %vm402, %v6348
        %6381 = vst.msk [vmem:[%s337 + $0xb8] sm:$0xff] %vm402, %v6349
        %6382 = vst.msk [vmem:[%s337 + $0xc0] sm:$0xff] %vm402, %v6350
        %6383 = vst.msk [vmem:[%s337 + $0xc8] sm:$0xff] %vm402, %v6351
        %6384 = vst.msk [vmem:[%s337 + $0xd0] sm:$0xff] %vm402, %v6352
        %6385 = vst.msk [vmem:[%s337 + $0xd8] sm:$0xff] %vm402, %v6353
        %6386 = vst.msk [vmem:[%s337 + $0xe0] sm:$0xff] %vm402, %v6354
        %6387 = vst.msk [vmem:[%s337 + $0xe8] sm:$0xff] %vm402, %v6355
        %6388 = vst.msk [vmem:[%s337 + $0xf0] sm:$0xff] %vm402, %v6356
        %6389 = vst.msk [vmem:[%s337 + $0xf8] sm:$0xff] %vm402, %v6357
        %s6390 = sand.u32 %s207, 1
        %s6391 = scalar_lea.sflag [#allocation5], %s6390
        %s6392 = sand.u32 %s207, 1
        %s6393 = smul.addr %s6392, 256
        %s6394 = scalar_lea.vmem [#allocation8], %s6393
        // Predicated region
        $region61: #{eca_bottleneck_forward_nhwc.1} parent=51 // pred_check
          %p6395 = pneg %p217
        $region62: #{eca_bottleneck_forward_nhwc.1} parent=51 // pred_check_branch
          %6397 = sbr.rel (%p6395) target = $region64
        $region63: #{eca_bottleneck_forward_nhwc.1} parent=51 // pred_region
          %s6399 = ssub.s32 4096, 4096
          %6400 = vsyncadd %s6391, %s6399
          %s6401 = smul.addr %s26, 32
          %s6402 = smul.addr %s6401, 128
          %s6403 = scalar_lea.hbm %s8, %s6402
          %s6404 = sshll.u32 %s6394, 4
          %s6405 = int_to_ptr.vmem [resolvable:$true] %s6404
          %6410 = dma.vmem_to_hbm [thread:$0]  %s6405, 4096, %s6403, %s6391, 128, 128, 8
        $region64: #{eca_bottleneck_forward_nhwc.1} parent=51 // pred_fallthru
          _
      $region52: #{eca_bottleneck_forward_nhwc.1} parent=5 // pred_fallthru
        _
      %p6411 = scmp.le.s32.totalorder 2, %s21
      // Predicated region
      $region65: #{eca_bottleneck_forward_nhwc.1} parent=5 // pred_check
        %p6412 = pneg %p6411
      $region66: #{eca_bottleneck_forward_nhwc.1} parent=5 // pred_check_branch
        %6414 = sbr.rel (%p6412) target = $region68
      $region67: #{eca_bottleneck_forward_nhwc.1} parent=5 // pred_region
        %s6415 = ssub.s32 %s21, 2
        // Predicated region
        $region69: #{eca_bottleneck_forward_nhwc.1} parent=67 // pred_check
          %p6416 = pneg %p223
        $region70: #{eca_bottleneck_forward_nhwc.1} parent=67 // pred_check_branch
          %6418 = sbr.rel (%p6416) target = $region72
        $region71: #{eca_bottleneck_forward_nhwc.1} parent=67 // pred_region
          %s6419 = sand.u32 %s208, 1
          %s6420 = scalar_lea.sflag [#allocation5], %s6419
          %s6421 = sand.u32 %s208, 1
          %s6422 = smul.addr %s6421, 256
          %s6423 = scalar_lea.vmem [#allocation8], %s6422
          %6424 = dma.done %s6420, 4096
        $region72: #{eca_bottleneck_forward_nhwc.1} parent=67 // pred_fallthru
          _
      $region68: #{eca_bottleneck_forward_nhwc.1} parent=5 // pred_fallthru
        _
    $region6: #{eca_bottleneck_forward_nhwc.1} parent=1 // loop_footer
      %s25 = sadd.s32 1, %s21
    $region7: #{eca_bottleneck_forward_nhwc.1} parent=1 // loop_footer_branch
      %20 = sbr.rel target = $region3
    $region8: #{eca_bottleneck_forward_nhwc.1} parent=1 // loop_exit
      _
    %6425 = vsyncpa [#allocation4], 1
    %s6426 = scalar_lea.sflag [#allocation4], 1
    %6427 = vsyncpa %s6426, 1
    %6428 = vsyncpa [#allocation5], 1
    %s6429 = scalar_lea.sflag [#allocation5], 1
    %6430 = vsyncpa %s6429, 1
    %6431 = vsyncpa [#allocation6], 1
    %s6432 = scalar_lea.sflag [#allocation6], 1
    %6433 = vsyncpa %s6432, 1

</llo_original>
